<compile_context>
chip_gen: v5e
topology: v5e:2x2
jax: 0.10.0
libtpu: 0.0.40
codegen_flags: <defaults>
</compile_context>

<pallas_src>
import math

import jax
import jax.numpy as jnp
from jax import lax
from jax.experimental import pallas as pl
from jax.experimental.pallas import tpu as pltpu


def _enc_dec_attn_kernel(
    # inputs
    x_ref,                                   # (T, I)   f32
    ew_ih_ref, ew_hh_ref, eb_ih_ref, eb_hh_ref,   # encoder GRU, gate-fused (in,3H)/(1,3H)
    u_w_ref, u_b_ref,                        # attention U: Linear(H, H)
    w_w_ref, w_b_ref,                        # attention W: Linear(H, H)
    a_row_ref,                               # attn: Linear(H, 1) weight as (1, H) row
    o2h_w_ref,                               # out2hidden folded into dec GRU input: (O, 3H)
    wctx_ref,                                # dec GRU input weights (context half): (H, 3H)
    dw_hh_ref, dgi_b_ref, db_hh_ref,         # dec GRU hidden weights / fused biases
    h2o_w_ref, h2o_b_ref,                    # h2o: Linear(H, O)
    # outputs
    out_ref,                                 # (T_dec, O) log-softmax outputs
    attn_ref,                                # (T_dec, T) attention weights (row per step)
    # scratch
    gi_scratch,                              # (T, 3H) f32
    enc_scratch,                             # (T, H)  f32
):
    T = x_ref.shape[0]
    H = ew_hh_ref.shape[0]
    O = h2o_w_ref.shape[1]
    T_dec = out_ref.shape[0]
    f32 = jnp.float32
    bf16 = jnp.bfloat16

    # ------------------------------ encoder GRU ------------------------------
    # Input-side gate pre-activations for the WHOLE sequence in one MXU matmul,
    # hoisted out of the serial recurrence.
    gi_scratch[...] = (
        jnp.dot(x_ref[...].astype(bf16), ew_ih_ref[...], preferred_element_type=f32)
        + eb_ih_ref[...]
    )

    w_hh_e = ew_hh_ref[...]                  # (H, 3H) bf16, hoisted out of the loop
    b_hh_e = eb_hh_ref[...]                  # (1, 3H) f32

    def enc_step(t, h):                      # h: (1, H) f32
        gi = gi_scratch[pl.ds(t, 1), :]      # (1, 3H)
        gh = jnp.dot(h.astype(bf16), w_hh_e, preferred_element_type=f32) + b_hh_e
        r = jax.nn.sigmoid(gi[:, :H] + gh[:, :H])
        z = jax.nn.sigmoid(gi[:, H:2 * H] + gh[:, H:2 * H])
        n = jnp.tanh(gi[:, 2 * H:] + r * gh[:, 2 * H:])
        h_new = (1.0 - z) * n + z * h
        enc_scratch[pl.ds(t, 1), :] = h_new
        return h_new

    h_final = lax.fori_loop(0, T, enc_step, jnp.zeros((1, H), f32), unroll=True)

    enc = enc_scratch[...]                   # (T, H) f32  encoder outputs
    enc_b = enc.astype(bf16)
    U = jnp.dot(enc_b, u_w_ref[...], preferred_element_type=f32) + u_b_ref[...]   # (T, H)

    # hoisted decoder-side constants
    w_w = w_w_ref[...]
    w_b = w_b_ref[...]
    a_row = a_row_ref[...]                   # (1, H) bf16
    o2h_w = o2h_w_ref[...]                   # (O, 3H) bf16
    w_ctx = wctx_ref[...]                    # (H, 3H) bf16
    dw_hh = dw_hh_ref[...]                   # (H, 3H) bf16
    dgi_b = dgi_b_ref[...]                   # (1, 3H) f32
    db_hh = db_hh_ref[...]                   # (1, 3H) f32
    h2o_w = h2o_w_ref[...]                   # (H, O)  bf16
    h2o_b = h2o_b_ref[...]                   # (1, O)  f32
    iota_o = lax.broadcasted_iota(jnp.int32, (1, O), 1)

    # ------------------------- decoder loop with attention -------------------------
    def dec_step(i, carry):
        dec_state, dec_in = carry            # (1, H) f32, (1, O) f32 (one-hot / zeros)

        # attention scores on the MXU (contract H).  attn bias omitted: it is a constant
        # shift across the softmax axis and therefore a mathematical no-op.
        Wd = jnp.dot(dec_state.astype(bf16), w_w, preferred_element_type=f32) + w_b   # (1, H)
        A = jnp.tanh(U + Wd).astype(bf16)                                              # (T, H)
        scores = jnp.einsum('ih,th->it', a_row, A, preferred_element_type=f32)         # (1, T)

        m = jnp.max(scores, axis=1, keepdims=True)
        e = jnp.exp(scores - m)
        attn_row = e * pl.reciprocal(jnp.sum(e, axis=1, keepdims=True), approx=True)   # (1, T)
        attn_ref[pl.ds(i, 1), :] = attn_row

        # context = attn_weights @ encoder_outputs (MXU, contract T)
        ctx = jnp.dot(attn_row.astype(bf16), enc_b, preferred_element_type=f32)        # (1, H)

        # decoder GRU input-side gates; out2hidden is folded into o2h_w / dgi_b so that
        #   cat(out2hidden(dec_in), ctx) @ W_ih + b_ih == dec_in @ o2h_w + ctx @ w_ctx + dgi_b
        gi = (jnp.dot(dec_in.astype(bf16), o2h_w, preferred_element_type=f32)
              + jnp.dot(ctx.astype(bf16), w_ctx, preferred_element_type=f32)
              + dgi_b)                                                                  # (1, 3H)
        gh = jnp.dot(dec_state.astype(bf16), dw_hh, preferred_element_type=f32) + db_hh
        r = jax.nn.sigmoid(gi[:, :H] + gh[:, :H])
        z = jax.nn.sigmoid(gi[:, H:2 * H] + gh[:, H:2 * H])
        n = jnp.tanh(gi[:, 2 * H:] + r * gh[:, 2 * H:])
        new_state = (1.0 - z) * n + z * dec_state                                       # (1, H)

        # h2o + LogSoftmax
        logits = jnp.dot(new_state.astype(bf16), h2o_w, preferred_element_type=f32) + h2o_b
        lmax = jnp.max(logits, axis=1, keepdims=True)
        shifted = logits - lmax
        log_probs = shifted - jnp.log(jnp.sum(jnp.exp(shifted), axis=1, keepdims=True))  # (1, O)
        out_ref[pl.ds(i, 1), :] = log_probs

        # greedy argmax -> one-hot feedback (torch.argmax + scatter_, first-max tie-break)
        pmax = jnp.max(log_probs, axis=1, keepdims=True)
        idx = jnp.min(jnp.where(log_probs == pmax, iota_o, O), axis=1, keepdims=True)
        new_in = jnp.where(iota_o == idx, 1.0, 0.0).astype(f32)
        return new_state, new_in

    lax.fori_loop(0, T_dec, dec_step,
                  (h_final, jnp.zeros((1, O), f32)), unroll=True)
    # TODO(synk): optional ground_truth teacher-forcing branch of the PyTorch forward is not
    # implemented (greedy inference path only).


def encoder_decoder_with_attention(x, params, max_output_chars):
    """x: (T, 1, input_size) float32 (PyTorch GRU convention, batch=1)."""
    T, _, I = x.shape
    H = params["u_w"].shape[0]
    O = params["h2o_w"].shape[1]
    f32, bf16 = jnp.float32, jnp.bfloat16
    hp = lax.Precision.HIGHEST

    def fuse_gates(w):   # (3, in, H) -> (in, 3H), PyTorch gate order (r, z, n)
        return jnp.concatenate([w[0], w[1], w[2]], axis=-1)

    ew_ih_f = fuse_gates(params["enc_w_ih"])      # (I, 3H)
    ew_hh_f = fuse_gates(params["enc_w_hh"])      # (H, 3H)
    eb_ih_f = fuse_gates(params["enc_b_ih"])      # (1, 3H)
    eb_hh_f = fuse_gates(params["enc_b_hh"])      # (1, 3H)
    dw_ih_f = fuse_gates(params["dec_w_ih"])      # (2H, 3H)
    dw_hh_f = fuse_gates(params["dec_w_hh"])      # (H, 3H)
    db_ih_f = fuse_gates(params["dec_b_ih"])      # (1, 3H)
    db_hh_f = fuse_gates(params["dec_b_hh"])      # (1, 3H)

    w_emb = dw_ih_f[:H, :]                        # half multiplying out2hidden(decoder_input)
    w_ctx = dw_ih_f[H:, :]                        # half multiplying the attention context
    # Fold out2hidden into the decoder GRU input weights (exact linear algebra, done once in f32).
    o2h_fused = jnp.dot(params["o2h_w"], w_emb, precision=hp)            # (O, 3H)
    dgi_bias = jnp.dot(params["o2h_b"], w_emb, precision=hp) + db_ih_f   # (1, 3H)

    args = (
        x.reshape(T, I).astype(f32),
        ew_ih_f.astype(bf16), ew_hh_f.astype(bf16),
        eb_ih_f.astype(f32), eb_hh_f.astype(f32),
        params["u_w"].astype(bf16), params["u_b"].astype(f32),
        params["w_w"].astype(bf16), params["w_b"].astype(f32),
        params["attn_w"].astype(bf16),
        o2h_fused.astype(bf16), w_ctx.astype(bf16), dw_hh_f.astype(bf16),
        dgi_bias.astype(f32), db_hh_f.astype(f32),
        params["h2o_w"].astype(bf16), params["h2o_b"].astype(f32),
    )

    vmem = pl.BlockSpec(memory_space=pltpu.MemorySpace.VMEM)
    outputs, attn = pl.pallas_call(
        _enc_dec_attn_kernel,
        out_shape=(
            jax.ShapeDtypeStruct((max_output_chars, O), f32),
            jax.ShapeDtypeStruct((max_output_chars, T), f32),
        ),
        in_specs=[vmem] * len(args),
        out_specs=(vmem, vmem),
        scratch_shapes=[
            pltpu.VMEM((T, 3 * H), f32),   # encoder input-side gate pre-activations
            pltpu.VMEM((T, H), f32),       # encoder outputs
        ],
    )(*args)

    # attention matrices as produced by the torch module: (T_dec, 1, T)  (no transpose needed)
    attention_matrices = attn.reshape(max_output_chars, 1, T)
    return outputs, attention_matrices


# ---------------- pure-JAX reference (for a numerical sanity check) ----------------
def _reference(x, p, max_output_chars):
    hp = lax.Precision.HIGHEST
    T, _, I = x.shape
    H = p["u_w"].shape[0]
    O = p["h2o_w"].shape[1]

    def gru(xv, h, w_ih, w_hh, b_ih, b_hh):
        def lin(v, w, b, g):
            return jnp.dot(v, w[g], precision=hp) + b[g]
        r = jax.nn.sigmoid(lin(xv, w_ih, b_ih, 0) + lin(h, w_hh, b_hh, 0))
        z = jax.nn.sigmoid(lin(xv, w_ih, b_ih, 1) + lin(h, w_hh, b_hh, 1))
        n = jnp.tanh(lin(xv, w_ih, b_ih, 2) + r * lin(h, w_hh, b_hh, 2))
        return (1.0 - z) * n + z * h

    x2 = x.reshape(T, I)
    h = jnp.zeros((1, H), jnp.float32)
    enc = []
    for t in range(T):
        h = gru(x2[t:t + 1], h, p["enc_w_ih"], p["enc_w_hh"], p["enc_b_ih"], p["enc_b_hh"])
        enc.append(h)
    enc = jnp.concatenate(enc, axis=0)
    U = jnp.dot(enc, p["u_w"], precision=hp) + p["u_b"]

    dec_state, dec_in = h, jnp.zeros((1, O), jnp.float32)
    outs, attns = [], []
    for _ in range(max_output_chars):
        Wd = jnp.dot(dec_state, p["w_w"], precision=hp) + p["w_b"]
        scores = jnp.sum(jnp.tanh(U + Wd) * p["attn_w"], axis=1, keepdims=True) + p["attn_b"]
        attn = jax.nn.softmax(scores, axis=0)
        attns.append(attn.reshape(1, T))
        applied = jnp.sum(attn * enc, axis=0, keepdims=True)
        emb = jnp.dot(dec_in, p["o2h_w"], precision=hp) + p["o2h_b"]
        cat = jnp.concatenate([emb, applied], axis=1)
        dec_state = gru(cat, dec_state, p["dec_w_ih"], p["dec_w_hh"], p["dec_b_ih"], p["dec_b_hh"])
        logits = jnp.dot(dec_state, p["h2o_w"], precision=hp) + p["h2o_b"]
        log_probs = jax.nn.log_softmax(logits, axis=1)
        outs.append(log_probs)
        dec_in = jax.nn.one_hot(jnp.argmax(log_probs, axis=1), O, dtype=jnp.float32)
    return jnp.concatenate(outs, axis=0), jnp.stack(attns, axis=0)


if __name__ == "__main__":
    INPUT_SIZE, HIDDEN_SIZE, OUTPUT_SIZE = 16, 32, 20
    SEQ_LEN, MAX_OUTPUT_CHARS = 8, 6

    key = jax.random.PRNGKey(0)
    keys = jax.random.split(key, 21)

    def u(k, shape, fan_in):
        bound = 1.0 / math.sqrt(fan_in)
        return jax.random.uniform(k, shape, jnp.float32, -bound, bound)

    H, I, O = HIDDEN_SIZE, INPUT_SIZE, OUTPUT_SIZE
    params = {
        # encoder nn.GRU(I, H): weights stored transposed per gate (r, z, n)
        "enc_w_ih": u(keys[0], (3, I, H), H),
        "enc_w_hh": u(keys[1], (3, H, H), H),
        "enc_b_ih": u(keys[2], (3, 1, H), H),
        "enc_b_hh": u(keys[3], (3, 1, H), H),
        # decoder nn.GRU(2H, H)
        "dec_w_ih": u(keys[4], (3, 2 * H, H), H),
        "dec_w_hh": u(keys[5], (3, H, H), H),
        "dec_b_ih": u(keys[6], (3, 1, H), H),
        "dec_b_hh": u(keys[7], (3, 1, H), H),
        # h2o: Linear(H, O)
        "h2o_w": u(keys[8], (H, O), H),
        "h2o_b": u(keys[9], (1, O), H),
        # U, W: Linear(H, H)
        "u_w": u(keys[10], (H, H), H),
        "u_b": u(keys[11], (1, H), H),
        "w_w": u(keys[12], (H, H), H),
        "w_b": u(keys[13], (1, H), H),
        # attn: Linear(H, 1) -- weight kept as a (1, H) row
        "attn_w": u(keys[14], (1, H), H),
        "attn_b": u(keys[15], (1, 1), H),
        # out2hidden: Linear(O, H)
        "o2h_w": u(keys[16], (O, H), O),
        "o2h_b": u(keys[17], (1, H), O),
    }

    x = jax.random.normal(keys[18], (SEQ_LEN, 1, INPUT_SIZE), jnp.float32)

    outputs, attn_mats = encoder_decoder_with_attention(x, params, MAX_OUTPUT_CHARS)
    (outputs, attn_mats) = jax.block_until_ready((outputs, attn_mats))

    # self-consistency: log-softmax rows and attention rows must normalize to 1
    assert bool(jnp.all(jnp.isfinite(outputs)))
    assert bool(jnp.allclose(jnp.sum(jnp.exp(outputs), axis=1), 1.0, atol=1e-3))
    assert bool(jnp.allclose(jnp.sum(attn_mats, axis=2), 1.0, atol=5e-3))

    # numerical check of the first decoder step (before argmax feedback) vs pure-JAX ref
    # (kernel uses bf16 matmul operands with f32 accumulation -> slightly loosened tolerance)
    ref_out, ref_attn = _reference(x, params, MAX_OUTPUT_CHARS)
    assert bool(jnp.allclose(outputs[0], ref_out[0], atol=3e-2, rtol=3e-2))
    assert bool(jnp.allclose(attn_mats[0], ref_attn[0], atol=3e-2, rtol=3e-2))

    print("KERNEL_OK")
</pallas_src>

<mosaic_0001>
module attributes {stable_mosaic.version = 11 : i64} {
  func.func @_enc_dec_attn_kernel(%arg0: memref<8x16xf32, #tpu.memory_space<vmem>>, %arg1: memref<16x96xbf16, #tpu.memory_space<vmem>>, %arg2: memref<32x96xbf16, #tpu.memory_space<vmem>>, %arg3: memref<1x96xf32, #tpu.memory_space<vmem>>, %arg4: memref<1x96xf32, #tpu.memory_space<vmem>>, %arg5: memref<32x32xbf16, #tpu.memory_space<vmem>>, %arg6: memref<1x32xf32, #tpu.memory_space<vmem>>, %arg7: memref<32x32xbf16, #tpu.memory_space<vmem>>, %arg8: memref<1x32xf32, #tpu.memory_space<vmem>>, %arg9: memref<1x32xbf16, #tpu.memory_space<vmem>>, %arg10: memref<20x96xbf16, #tpu.memory_space<vmem>>, %arg11: memref<32x96xbf16, #tpu.memory_space<vmem>>, %arg12: memref<32x96xbf16, #tpu.memory_space<vmem>>, %arg13: memref<1x96xf32, #tpu.memory_space<vmem>>, %arg14: memref<1x96xf32, #tpu.memory_space<vmem>>, %arg15: memref<32x20xbf16, #tpu.memory_space<vmem>>, %arg16: memref<1x20xf32, #tpu.memory_space<vmem>>, %arg17: memref<6x20xf32, #tpu.memory_space<vmem>>, %arg18: memref<6x8xf32, #tpu.memory_space<vmem>>, %arg19: memref<8x96xf32, #tpu.memory_space<vmem>>, %arg20: memref<8x32xf32, #tpu.memory_space<vmem>>) attributes {dimension_semantics = [], scalar_prefetch = 0 : i64, scratch_operands = 2 : i64, tpu.core_type = #tpu.core_type<tc>} {
    %c0 = arith.constant 0 : index
    %c0_0 = arith.constant 0 : index
    %0 = vector.load %arg0[%c0, %c0_0] : memref<8x16xf32, #tpu.memory_space<vmem>>, vector<8x16xf32>
    %1 = arith.truncf %0 : vector<8x16xf32> to vector<8x16xbf16>
    %c0_1 = arith.constant 0 : index
    %c0_2 = arith.constant 0 : index
    %2 = vector.load %arg1[%c0_1, %c0_2] : memref<16x96xbf16, #tpu.memory_space<vmem>>, vector<16x96xbf16>
    %cst = arith.constant dense<0.000000e+00> : vector<8x96xf32>
    %3 = tpu.matmul %1, %2, %cst {dimension_numbers = #tpu.dot_dimension_numbers<[1], [0], [0], [1], [0, 0, 1, 1], [], []>} : vector<8x16xbf16>, vector<16x96xbf16>, vector<8x96xf32> -> vector<8x96xf32>
    %c0_3 = arith.constant 0 : index
    %c0_4 = arith.constant 0 : index
    %4 = vector.load %arg3[%c0_3, %c0_4] : memref<1x96xf32, #tpu.memory_space<vmem>>, vector<1x96xf32>
    %5 = vector.broadcast %4 : vector<1x96xf32> to vector<8x96xf32>
    %6 = arith.addf %3, %5 : vector<8x96xf32>
    %c0_5 = arith.constant 0 : index
    %c0_6 = arith.constant 0 : index
    %7 = vector.load %arg19[%c0_5, %c0_6] : memref<8x96xf32, #tpu.memory_space<vmem>>, vector<8x96xf32>
    tpu.vector_store %arg19[%c0_5, %c0_6], %6 {strides = array<i32>} : memref<8x96xf32, #tpu.memory_space<vmem>>, vector<8x96xf32>,
    %c0_7 = arith.constant 0 : index
    %c0_8 = arith.constant 0 : index
    %8 = vector.load %arg2[%c0_7, %c0_8] : memref<32x96xbf16, #tpu.memory_space<vmem>>, vector<32x96xbf16>
    %c0_9 = arith.constant 0 : index
    %c0_10 = arith.constant 0 : index
    %9 = vector.load %arg4[%c0_9, %c0_10] : memref<1x96xf32, #tpu.memory_space<vmem>>, vector<1x96xf32>
    %cst_11 = arith.constant 0.000000e+00 : f32
    %10 = vector.broadcast %cst_11 : f32 to vector<1x32xf32>
    %c0_i32 = arith.constant 0 : i32
    %11 = arith.index_cast %c0_i32 : i32 to index
    %c0_12 = arith.constant 0 : index
    %12 = vector.load %arg19[%11, %c0_12] : memref<8x96xf32, #tpu.memory_space<vmem>>, vector<1x96xf32>
    %13 = arith.truncf %10 : vector<1x32xf32> to vector<1x32xbf16>
    %cst_13 = arith.constant dense<0.000000e+00> : vector<1x96xf32>
    %14 = tpu.matmul %13, %8, %cst_13 {dimension_numbers = #tpu.dot_dimension_numbers<[1], [0], [0], [1], [0, 0, 1, 1], [], []>} : vector<1x32xbf16>, vector<32x96xbf16>, vector<1x96xf32> -> vector<1x96xf32>
    %15 = arith.addf %14, %9 : vector<1x96xf32>
    %16 = vector.extract_strided_slice %12 {offsets = [0, 0], sizes = [1, 32], strides = [1, 1]} : vector<1x96xf32> to vector<1x32xf32>
    %17 = vector.extract_strided_slice %15 {offsets = [0, 0], sizes = [1, 32], strides = [1, 1]} : vector<1x96xf32> to vector<1x32xf32>
    %18 = arith.addf %16, %17 : vector<1x32xf32>
    %19 = arith.negf %18 : vector<1x32xf32>
    %20 = math.exp %19 : vector<1x32xf32>
    %cst_14 = arith.constant 1.000000e+00 : f32
    %21 = vector.broadcast %cst_14 : f32 to vector<1x32xf32>
    %22 = arith.addf %21, %20 : vector<1x32xf32>
    %23 = arith.divf %21, %22 : vector<1x32xf32>
    %24 = vector.extract_strided_slice %12 {offsets = [0, 32], sizes = [1, 32], strides = [1, 1]} : vector<1x96xf32> to vector<1x32xf32>
    %25 = vector.extract_strided_slice %15 {offsets = [0, 32], sizes = [1, 32], strides = [1, 1]} : vector<1x96xf32> to vector<1x32xf32>
    %26 = arith.addf %24, %25 : vector<1x32xf32>
    %27 = arith.negf %26 : vector<1x32xf32>
    %28 = math.exp %27 : vector<1x32xf32>
    %cst_15 = arith.constant 1.000000e+00 : f32
    %29 = vector.broadcast %cst_15 : f32 to vector<1x32xf32>
    %30 = arith.addf %29, %28 : vector<1x32xf32>
    %31 = arith.divf %29, %30 : vector<1x32xf32>
    %32 = vector.extract_strided_slice %12 {offsets = [0, 64], sizes = [1, 32], strides = [1, 1]} : vector<1x96xf32> to vector<1x32xf32>
    %33 = vector.extract_strided_slice %15 {offsets = [0, 64], sizes = [1, 32], strides = [1, 1]} : vector<1x96xf32> to vector<1x32xf32>
    %34 = arith.mulf %23, %33 : vector<1x32xf32>
    %35 = arith.addf %32, %34 : vector<1x32xf32>
    %36 = math.tanh %35 : vector<1x32xf32>
    %cst_16 = arith.constant 1.000000e+00 : f32
    %37 = vector.broadcast %cst_16 : f32 to vector<1x32xf32>
    %38 = arith.subf %37, %31 : vector<1x32xf32>
    %39 = arith.mulf %38, %36 : vector<1x32xf32>
    %40 = arith.mulf %31, %10 : vector<1x32xf32>
    %41 = arith.addf %39, %40 : vector<1x32xf32>
    %42 = arith.index_cast %c0_i32 : i32 to index
    %c0_17 = arith.constant 0 : index
    %43 = vector.load %arg20[%42, %c0_17] : memref<8x32xf32, #tpu.memory_space<vmem>>, vector<1x32xf32>
    tpu.vector_store %arg20[%42, %c0_17], %41 {strides = array<i32>} : memref<8x32xf32, #tpu.memory_space<vmem>>, vector<1x32xf32>,
    %c1_i32 = arith.constant 1 : i32
    %44 = arith.index_cast %c1_i32 : i32 to index
    %c0_18 = arith.constant 0 : index
    %45 = vector.load %arg19[%44, %c0_18] : memref<8x96xf32, #tpu.memory_space<vmem>>, vector<1x96xf32>
    %46 = arith.truncf %41 : vector<1x32xf32> to vector<1x32xbf16>
    %cst_19 = arith.constant dense<0.000000e+00> : vector<1x96xf32>
    %47 = tpu.matmul %46, %8, %cst_19 {dimension_numbers = #tpu.dot_dimension_numbers<[1], [0], [0], [1], [0, 0, 1, 1], [], []>} : vector<1x32xbf16>, vector<32x96xbf16>, vector<1x96xf32> -> vector<1x96xf32>
    %48 = arith.addf %47, %9 : vector<1x96xf32>
    %49 = vector.extract_strided_slice %45 {offsets = [0, 0], sizes = [1, 32], strides = [1, 1]} : vector<1x96xf32> to vector<1x32xf32>
    %50 = vector.extract_strided_slice %48 {offsets = [0, 0], sizes = [1, 32], strides = [1, 1]} : vector<1x96xf32> to vector<1x32xf32>
    %51 = arith.addf %49, %50 : vector<1x32xf32>
    %52 = arith.negf %51 : vector<1x32xf32>
    %53 = math.exp %52 : vector<1x32xf32>
    %cst_20 = arith.constant 1.000000e+00 : f32
    %54 = vector.broadcast %cst_20 : f32 to vector<1x32xf32>
    %55 = arith.addf %54, %53 : vector<1x32xf32>
    %56 = arith.divf %54, %55 : vector<1x32xf32>
    %57 = vector.extract_strided_slice %45 {offsets = [0, 32], sizes = [1, 32], strides = [1, 1]} : vector<1x96xf32> to vector<1x32xf32>
    %58 = vector.extract_strided_slice %48 {offsets = [0, 32], sizes = [1, 32], strides = [1, 1]} : vector<1x96xf32> to vector<1x32xf32>
    %59 = arith.addf %57, %58 : vector<1x32xf32>
    %60 = arith.negf %59 : vector<1x32xf32>
    %61 = math.exp %60 : vector<1x32xf32>
    %cst_21 = arith.constant 1.000000e+00 : f32
    %62 = vector.broadcast %cst_21 : f32 to vector<1x32xf32>
    %63 = arith.addf %62, %61 : vector<1x32xf32>
    %64 = arith.divf %62, %63 : vector<1x32xf32>
    %65 = vector.extract_strided_slice %45 {offsets = [0, 64], sizes = [1, 32], strides = [1, 1]} : vector<1x96xf32> to vector<1x32xf32>
    %66 = vector.extract_strided_slice %48 {offsets = [0, 64], sizes = [1, 32], strides = [1, 1]} : vector<1x96xf32> to vector<1x32xf32>
    %67 = arith.mulf %56, %66 : vector<1x32xf32>
    %68 = arith.addf %65, %67 : vector<1x32xf32>
    %69 = math.tanh %68 : vector<1x32xf32>
    %cst_22 = arith.constant 1.000000e+00 : f32
    %70 = vector.broadcast %cst_22 : f32 to vector<1x32xf32>
    %71 = arith.subf %70, %64 : vector<1x32xf32>
    %72 = arith.mulf %71, %69 : vector<1x32xf32>
    %73 = arith.mulf %64, %41 : vector<1x32xf32>
    %74 = arith.addf %72, %73 : vector<1x32xf32>
    %75 = arith.index_cast %c1_i32 : i32 to index
    %c0_23 = arith.constant 0 : index
    %76 = vector.load %arg20[%75, %c0_23] : memref<8x32xf32, #tpu.memory_space<vmem>>, vector<1x32xf32>
    tpu.vector_store %arg20[%75, %c0_23], %74 {strides = array<i32>} : memref<8x32xf32, #tpu.memory_space<vmem>>, vector<1x32xf32>,
    %c2_i32 = arith.constant 2 : i32
    %77 = arith.index_cast %c2_i32 : i32 to index
    %c0_24 = arith.constant 0 : index
    %78 = vector.load %arg19[%77, %c0_24] : memref<8x96xf32, #tpu.memory_space<vmem>>, vector<1x96xf32>
    %79 = arith.truncf %74 : vector<1x32xf32> to vector<1x32xbf16>
    %cst_25 = arith.constant dense<0.000000e+00> : vector<1x96xf32>
    %80 = tpu.matmul %79, %8, %cst_25 {dimension_numbers = #tpu.dot_dimension_numbers<[1], [0], [0], [1], [0, 0, 1, 1], [], []>} : vector<1x32xbf16>, vector<32x96xbf16>, vector<1x96xf32> -> vector<1x96xf32>
    %81 = arith.addf %80, %9 : vector<1x96xf32>
    %82 = vector.extract_strided_slice %78 {offsets = [0, 0], sizes = [1, 32], strides = [1, 1]} : vector<1x96xf32> to vector<1x32xf32>
    %83 = vector.extract_strided_slice %81 {offsets = [0, 0], sizes = [1, 32], strides = [1, 1]} : vector<1x96xf32> to vector<1x32xf32>
    %84 = arith.addf %82, %83 : vector<1x32xf32>
    %85 = arith.negf %84 : vector<1x32xf32>
    %86 = math.exp %85 : vector<1x32xf32>
    %cst_26 = arith.constant 1.000000e+00 : f32
    %87 = vector.broadcast %cst_26 : f32 to vector<1x32xf32>
    %88 = arith.addf %87, %86 : vector<1x32xf32>
    %89 = arith.divf %87, %88 : vector<1x32xf32>
    %90 = vector.extract_strided_slice %78 {offsets = [0, 32], sizes = [1, 32], strides = [1, 1]} : vector<1x96xf32> to vector<1x32xf32>
    %91 = vector.extract_strided_slice %81 {offsets = [0, 32], sizes = [1, 32], strides = [1, 1]} : vector<1x96xf32> to vector<1x32xf32>
    %92 = arith.addf %90, %91 : vector<1x32xf32>
    %93 = arith.negf %92 : vector<1x32xf32>
    %94 = math.exp %93 : vector<1x32xf32>
    %cst_27 = arith.constant 1.000000e+00 : f32
    %95 = vector.broadcast %cst_27 : f32 to vector<1x32xf32>
    %96 = arith.addf %95, %94 : vector<1x32xf32>
    %97 = arith.divf %95, %96 : vector<1x32xf32>
    %98 = vector.extract_strided_slice %78 {offsets = [0, 64], sizes = [1, 32], strides = [1, 1]} : vector<1x96xf32> to vector<1x32xf32>
    %99 = vector.extract_strided_slice %81 {offsets = [0, 64], sizes = [1, 32], strides = [1, 1]} : vector<1x96xf32> to vector<1x32xf32>
    %100 = arith.mulf %89, %99 : vector<1x32xf32>
    %101 = arith.addf %98, %100 : vector<1x32xf32>
    %102 = math.tanh %101 : vector<1x32xf32>
    %cst_28 = arith.constant 1.000000e+00 : f32
    %103 = vector.broadcast %cst_28 : f32 to vector<1x32xf32>
    %104 = arith.subf %103, %97 : vector<1x32xf32>
    %105 = arith.mulf %104, %102 : vector<1x32xf32>
    %106 = arith.mulf %97, %74 : vector<1x32xf32>
    %107 = arith.addf %105, %106 : vector<1x32xf32>
    %108 = arith.index_cast %c2_i32 : i32 to index
    %c0_29 = arith.constant 0 : index
    %109 = vector.load %arg20[%108, %c0_29] : memref<8x32xf32, #tpu.memory_space<vmem>>, vector<1x32xf32>
    tpu.vector_store %arg20[%108, %c0_29], %107 {strides = array<i32>} : memref<8x32xf32, #tpu.memory_space<vmem>>, vector<1x32xf32>,
    %c3_i32 = arith.constant 3 : i32
    %110 = arith.index_cast %c3_i32 : i32 to index
    %c0_30 = arith.constant 0 : index
    %111 = vector.load %arg19[%110, %c0_30] : memref<8x96xf32, #tpu.memory_space<vmem>>, vector<1x96xf32>
    %112 = arith.truncf %107 : vector<1x32xf32> to vector<1x32xbf16>
    %cst_31 = arith.constant dense<0.000000e+00> : vector<1x96xf32>
    %113 = tpu.matmul %112, %8, %cst_31 {dimension_numbers = #tpu.dot_dimension_numbers<[1], [0], [0], [1], [0, 0, 1, 1], [], []>} : vector<1x32xbf16>, vector<32x96xbf16>, vector<1x96xf32> -> vector<1x96xf32>
    %114 = arith.addf %113, %9 : vector<1x96xf32>
    %115 = vector.extract_strided_slice %111 {offsets = [0, 0], sizes = [1, 32], strides = [1, 1]} : vector<1x96xf32> to vector<1x32xf32>
    %116 = vector.extract_strided_slice %114 {offsets = [0, 0], sizes = [1, 32], strides = [1, 1]} : vector<1x96xf32> to vector<1x32xf32>
    %117 = arith.addf %115, %116 : vector<1x32xf32>
    %118 = arith.negf %117 : vector<1x32xf32>
    %119 = math.exp %118 : vector<1x32xf32>
    %cst_32 = arith.constant 1.000000e+00 : f32
    %120 = vector.broadcast %cst_32 : f32 to vector<1x32xf32>
    %121 = arith.addf %120, %119 : vector<1x32xf32>
    %122 = arith.divf %120, %121 : vector<1x32xf32>
    %123 = vector.extract_strided_slice %111 {offsets = [0, 32], sizes = [1, 32], strides = [1, 1]} : vector<1x96xf32> to vector<1x32xf32>
    %124 = vector.extract_strided_slice %114 {offsets = [0, 32], sizes = [1, 32], strides = [1, 1]} : vector<1x96xf32> to vector<1x32xf32>
    %125 = arith.addf %123, %124 : vector<1x32xf32>
    %126 = arith.negf %125 : vector<1x32xf32>
    %127 = math.exp %126 : vector<1x32xf32>
    %cst_33 = arith.constant 1.000000e+00 : f32
    %128 = vector.broadcast %cst_33 : f32 to vector<1x32xf32>
    %129 = arith.addf %128, %127 : vector<1x32xf32>
    %130 = arith.divf %128, %129 : vector<1x32xf32>
    %131 = vector.extract_strided_slice %111 {offsets = [0, 64], sizes = [1, 32], strides = [1, 1]} : vector<1x96xf32> to vector<1x32xf32>
    %132 = vector.extract_strided_slice %114 {offsets = [0, 64], sizes = [1, 32], strides = [1, 1]} : vector<1x96xf32> to vector<1x32xf32>
    %133 = arith.mulf %122, %132 : vector<1x32xf32>
    %134 = arith.addf %131, %133 : vector<1x32xf32>
    %135 = math.tanh %134 : vector<1x32xf32>
    %cst_34 = arith.constant 1.000000e+00 : f32
    %136 = vector.broadcast %cst_34 : f32 to vector<1x32xf32>
    %137 = arith.subf %136, %130 : vector<1x32xf32>
    %138 = arith.mulf %137, %135 : vector<1x32xf32>
    %139 = arith.mulf %130, %107 : vector<1x32xf32>
    %140 = arith.addf %138, %139 : vector<1x32xf32>
    %141 = arith.index_cast %c3_i32 : i32 to index
    %c0_35 = arith.constant 0 : index
    %142 = vector.load %arg20[%141, %c0_35] : memref<8x32xf32, #tpu.memory_space<vmem>>, vector<1x32xf32>
    tpu.vector_store %arg20[%141, %c0_35], %140 {strides = array<i32>} : memref<8x32xf32, #tpu.memory_space<vmem>>, vector<1x32xf32>,
    %c4_i32 = arith.constant 4 : i32
    %143 = arith.index_cast %c4_i32 : i32 to index
    %c0_36 = arith.constant 0 : index
    %144 = vector.load %arg19[%143, %c0_36] : memref<8x96xf32, #tpu.memory_space<vmem>>, vector<1x96xf32>
    %145 = arith.truncf %140 : vector<1x32xf32> to vector<1x32xbf16>
    %cst_37 = arith.constant dense<0.000000e+00> : vector<1x96xf32>
    %146 = tpu.matmul %145, %8, %cst_37 {dimension_numbers = #tpu.dot_dimension_numbers<[1], [0], [0], [1], [0, 0, 1, 1], [], []>} : vector<1x32xbf16>, vector<32x96xbf16>, vector<1x96xf32> -> vector<1x96xf32>
    %147 = arith.addf %146, %9 : vector<1x96xf32>
    %148 = vector.extract_strided_slice %144 {offsets = [0, 0], sizes = [1, 32], strides = [1, 1]} : vector<1x96xf32> to vector<1x32xf32>
    %149 = vector.extract_strided_slice %147 {offsets = [0, 0], sizes = [1, 32], strides = [1, 1]} : vector<1x96xf32> to vector<1x32xf32>
    %150 = arith.addf %148, %149 : vector<1x32xf32>
    %151 = arith.negf %150 : vector<1x32xf32>
    %152 = math.exp %151 : vector<1x32xf32>
    %cst_38 = arith.constant 1.000000e+00 : f32
    %153 = vector.broadcast %cst_38 : f32 to vector<1x32xf32>
    %154 = arith.addf %153, %152 : vector<1x32xf32>
    %155 = arith.divf %153, %154 : vector<1x32xf32>
    %156 = vector.extract_strided_slice %144 {offsets = [0, 32], sizes = [1, 32], strides = [1, 1]} : vector<1x96xf32> to vector<1x32xf32>
    %157 = vector.extract_strided_slice %147 {offsets = [0, 32], sizes = [1, 32], strides = [1, 1]} : vector<1x96xf32> to vector<1x32xf32>
    %158 = arith.addf %156, %157 : vector<1x32xf32>
    %159 = arith.negf %158 : vector<1x32xf32>
    %160 = math.exp %159 : vector<1x32xf32>
    %cst_39 = arith.constant 1.000000e+00 : f32
    %161 = vector.broadcast %cst_39 : f32 to vector<1x32xf32>
    %162 = arith.addf %161, %160 : vector<1x32xf32>
    %163 = arith.divf %161, %162 : vector<1x32xf32>
    %164 = vector.extract_strided_slice %144 {offsets = [0, 64], sizes = [1, 32], strides = [1, 1]} : vector<1x96xf32> to vector<1x32xf32>
    %165 = vector.extract_strided_slice %147 {offsets = [0, 64], sizes = [1, 32], strides = [1, 1]} : vector<1x96xf32> to vector<1x32xf32>
    %166 = arith.mulf %155, %165 : vector<1x32xf32>
    %167 = arith.addf %164, %166 : vector<1x32xf32>
    %168 = math.tanh %167 : vector<1x32xf32>
    %cst_40 = arith.constant 1.000000e+00 : f32
    %169 = vector.broadcast %cst_40 : f32 to vector<1x32xf32>
    %170 = arith.subf %169, %163 : vector<1x32xf32>
    %171 = arith.mulf %170, %168 : vector<1x32xf32>
    %172 = arith.mulf %163, %140 : vector<1x32xf32>
    %173 = arith.addf %171, %172 : vector<1x32xf32>
    %174 = arith.index_cast %c4_i32 : i32 to index
    %c0_41 = arith.constant 0 : index
    %175 = vector.load %arg20[%174, %c0_41] : memref<8x32xf32, #tpu.memory_space<vmem>>, vector<1x32xf32>
    tpu.vector_store %arg20[%174, %c0_41], %173 {strides = array<i32>} : memref<8x32xf32, #tpu.memory_space<vmem>>, vector<1x32xf32>,
    %c5_i32 = arith.constant 5 : i32
    %176 = arith.index_cast %c5_i32 : i32 to index
    %c0_42 = arith.constant 0 : index
    %177 = vector.load %arg19[%176, %c0_42] : memref<8x96xf32, #tpu.memory_space<vmem>>, vector<1x96xf32>
    %178 = arith.truncf %173 : vector<1x32xf32> to vector<1x32xbf16>
    %cst_43 = arith.constant dense<0.000000e+00> : vector<1x96xf32>
    %179 = tpu.matmul %178, %8, %cst_43 {dimension_numbers = #tpu.dot_dimension_numbers<[1], [0], [0], [1], [0, 0, 1, 1], [], []>} : vector<1x32xbf16>, vector<32x96xbf16>, vector<1x96xf32> -> vector<1x96xf32>
    %180 = arith.addf %179, %9 : vector<1x96xf32>
    %181 = vector.extract_strided_slice %177 {offsets = [0, 0], sizes = [1, 32], strides = [1, 1]} : vector<1x96xf32> to vector<1x32xf32>
    %182 = vector.extract_strided_slice %180 {offsets = [0, 0], sizes = [1, 32], strides = [1, 1]} : vector<1x96xf32> to vector<1x32xf32>
    %183 = arith.addf %181, %182 : vector<1x32xf32>
    %184 = arith.negf %183 : vector<1x32xf32>
    %185 = math.exp %184 : vector<1x32xf32>
    %cst_44 = arith.constant 1.000000e+00 : f32
    %186 = vector.broadcast %cst_44 : f32 to vector<1x32xf32>
    %187 = arith.addf %186, %185 : vector<1x32xf32>
    %188 = arith.divf %186, %187 : vector<1x32xf32>
    %189 = vector.extract_strided_slice %177 {offsets = [0, 32], sizes = [1, 32], strides = [1, 1]} : vector<1x96xf32> to vector<1x32xf32>
    %190 = vector.extract_strided_slice %180 {offsets = [0, 32], sizes = [1, 32], strides = [1, 1]} : vector<1x96xf32> to vector<1x32xf32>
    %191 = arith.addf %189, %190 : vector<1x32xf32>
    %192 = arith.negf %191 : vector<1x32xf32>
    %193 = math.exp %192 : vector<1x32xf32>
    %cst_45 = arith.constant 1.000000e+00 : f32
    %194 = vector.broadcast %cst_45 : f32 to vector<1x32xf32>
    %195 = arith.addf %194, %193 : vector<1x32xf32>
    %196 = arith.divf %194, %195 : vector<1x32xf32>
    %197 = vector.extract_strided_slice %177 {offsets = [0, 64], sizes = [1, 32], strides = [1, 1]} : vector<1x96xf32> to vector<1x32xf32>
    %198 = vector.extract_strided_slice %180 {offsets = [0, 64], sizes = [1, 32], strides = [1, 1]} : vector<1x96xf32> to vector<1x32xf32>
    %199 = arith.mulf %188, %198 : vector<1x32xf32>
    %200 = arith.addf %197, %199 : vector<1x32xf32>
    %201 = math.tanh %200 : vector<1x32xf32>
    %cst_46 = arith.constant 1.000000e+00 : f32
    %202 = vector.broadcast %cst_46 : f32 to vector<1x32xf32>
    %203 = arith.subf %202, %196 : vector<1x32xf32>
    %204 = arith.mulf %203, %201 : vector<1x32xf32>
    %205 = arith.mulf %196, %173 : vector<1x32xf32>
    %206 = arith.addf %204, %205 : vector<1x32xf32>
    %207 = arith.index_cast %c5_i32 : i32 to index
    %c0_47 = arith.constant 0 : index
    %208 = vector.load %arg20[%207, %c0_47] : memref<8x32xf32, #tpu.memory_space<vmem>>, vector<1x32xf32>
    tpu.vector_store %arg20[%207, %c0_47], %206 {strides = array<i32>} : memref<8x32xf32, #tpu.memory_space<vmem>>, vector<1x32xf32>,
    %c6_i32 = arith.constant 6 : i32
    %209 = arith.index_cast %c6_i32 : i32 to index
    %c0_48 = arith.constant 0 : index
    %210 = vector.load %arg19[%209, %c0_48] : memref<8x96xf32, #tpu.memory_space<vmem>>, vector<1x96xf32>
    %211 = arith.truncf %206 : vector<1x32xf32> to vector<1x32xbf16>
    %cst_49 = arith.constant dense<0.000000e+00> : vector<1x96xf32>
    %212 = tpu.matmul %211, %8, %cst_49 {dimension_numbers = #tpu.dot_dimension_numbers<[1], [0], [0], [1], [0, 0, 1, 1], [], []>} : vector<1x32xbf16>, vector<32x96xbf16>, vector<1x96xf32> -> vector<1x96xf32>
    %213 = arith.addf %212, %9 : vector<1x96xf32>
    %214 = vector.extract_strided_slice %210 {offsets = [0, 0], sizes = [1, 32], strides = [1, 1]} : vector<1x96xf32> to vector<1x32xf32>
    %215 = vector.extract_strided_slice %213 {offsets = [0, 0], sizes = [1, 32], strides = [1, 1]} : vector<1x96xf32> to vector<1x32xf32>
    %216 = arith.addf %214, %215 : vector<1x32xf32>
    %217 = arith.negf %216 : vector<1x32xf32>
    %218 = math.exp %217 : vector<1x32xf32>
    %cst_50 = arith.constant 1.000000e+00 : f32
    %219 = vector.broadcast %cst_50 : f32 to vector<1x32xf32>
    %220 = arith.addf %219, %218 : vector<1x32xf32>
    %221 = arith.divf %219, %220 : vector<1x32xf32>
    %222 = vector.extract_strided_slice %210 {offsets = [0, 32], sizes = [1, 32], strides = [1, 1]} : vector<1x96xf32> to vector<1x32xf32>
    %223 = vector.extract_strided_slice %213 {offsets = [0, 32], sizes = [1, 32], strides = [1, 1]} : vector<1x96xf32> to vector<1x32xf32>
    %224 = arith.addf %222, %223 : vector<1x32xf32>
    %225 = arith.negf %224 : vector<1x32xf32>
    %226 = math.exp %225 : vector<1x32xf32>
    %cst_51 = arith.constant 1.000000e+00 : f32
    %227 = vector.broadcast %cst_51 : f32 to vector<1x32xf32>
    %228 = arith.addf %227, %226 : vector<1x32xf32>
    %229 = arith.divf %227, %228 : vector<1x32xf32>
    %230 = vector.extract_strided_slice %210 {offsets = [0, 64], sizes = [1, 32], strides = [1, 1]} : vector<1x96xf32> to vector<1x32xf32>
    %231 = vector.extract_strided_slice %213 {offsets = [0, 64], sizes = [1, 32], strides = [1, 1]} : vector<1x96xf32> to vector<1x32xf32>
    %232 = arith.mulf %221, %231 : vector<1x32xf32>
    %233 = arith.addf %230, %232 : vector<1x32xf32>
    %234 = math.tanh %233 : vector<1x32xf32>
    %cst_52 = arith.constant 1.000000e+00 : f32
    %235 = vector.broadcast %cst_52 : f32 to vector<1x32xf32>
    %236 = arith.subf %235, %229 : vector<1x32xf32>
    %237 = arith.mulf %236, %234 : vector<1x32xf32>
    %238 = arith.mulf %229, %206 : vector<1x32xf32>
    %239 = arith.addf %237, %238 : vector<1x32xf32>
    %240 = arith.index_cast %c6_i32 : i32 to index
    %c0_53 = arith.constant 0 : index
    %241 = vector.load %arg20[%240, %c0_53] : memref<8x32xf32, #tpu.memory_space<vmem>>, vector<1x32xf32>
    tpu.vector_store %arg20[%240, %c0_53], %239 {strides = array<i32>} : memref<8x32xf32, #tpu.memory_space<vmem>>, vector<1x32xf32>,
    %c7_i32 = arith.constant 7 : i32
    %242 = arith.index_cast %c7_i32 : i32 to index
    %c0_54 = arith.constant 0 : index
    %243 = vector.load %arg19[%242, %c0_54] : memref<8x96xf32, #tpu.memory_space<vmem>>, vector<1x96xf32>
    %244 = arith.truncf %239 : vector<1x32xf32> to vector<1x32xbf16>
    %cst_55 = arith.constant dense<0.000000e+00> : vector<1x96xf32>
    %245 = tpu.matmul %244, %8, %cst_55 {dimension_numbers = #tpu.dot_dimension_numbers<[1], [0], [0], [1], [0, 0, 1, 1], [], []>} : vector<1x32xbf16>, vector<32x96xbf16>, vector<1x96xf32> -> vector<1x96xf32>
    %246 = arith.addf %245, %9 : vector<1x96xf32>
    %247 = vector.extract_strided_slice %243 {offsets = [0, 0], sizes = [1, 32], strides = [1, 1]} : vector<1x96xf32> to vector<1x32xf32>
    %248 = vector.extract_strided_slice %246 {offsets = [0, 0], sizes = [1, 32], strides = [1, 1]} : vector<1x96xf32> to vector<1x32xf32>
    %249 = arith.addf %247, %248 : vector<1x32xf32>
    %250 = arith.negf %249 : vector<1x32xf32>
    %251 = math.exp %250 : vector<1x32xf32>
    %cst_56 = arith.constant 1.000000e+00 : f32
    %252 = vector.broadcast %cst_56 : f32 to vector<1x32xf32>
    %253 = arith.addf %252, %251 : vector<1x32xf32>
    %254 = arith.divf %252, %253 : vector<1x32xf32>
    %255 = vector.extract_strided_slice %243 {offsets = [0, 32], sizes = [1, 32], strides = [1, 1]} : vector<1x96xf32> to vector<1x32xf32>
    %256 = vector.extract_strided_slice %246 {offsets = [0, 32], sizes = [1, 32], strides = [1, 1]} : vector<1x96xf32> to vector<1x32xf32>
    %257 = arith.addf %255, %256 : vector<1x32xf32>
    %258 = arith.negf %257 : vector<1x32xf32>
    %259 = math.exp %258 : vector<1x32xf32>
    %cst_57 = arith.constant 1.000000e+00 : f32
    %260 = vector.broadcast %cst_57 : f32 to vector<1x32xf32>
    %261 = arith.addf %260, %259 : vector<1x32xf32>
    %262 = arith.divf %260, %261 : vector<1x32xf32>
    %263 = vector.extract_strided_slice %243 {offsets = [0, 64], sizes = [1, 32], strides = [1, 1]} : vector<1x96xf32> to vector<1x32xf32>
    %264 = vector.extract_strided_slice %246 {offsets = [0, 64], sizes = [1, 32], strides = [1, 1]} : vector<1x96xf32> to vector<1x32xf32>
    %265 = arith.mulf %254, %264 : vector<1x32xf32>
    %266 = arith.addf %263, %265 : vector<1x32xf32>
    %267 = math.tanh %266 : vector<1x32xf32>
    %cst_58 = arith.constant 1.000000e+00 : f32
    %268 = vector.broadcast %cst_58 : f32 to vector<1x32xf32>
    %269 = arith.subf %268, %262 : vector<1x32xf32>
    %270 = arith.mulf %269, %267 : vector<1x32xf32>
    %271 = arith.mulf %262, %239 : vector<1x32xf32>
    %272 = arith.addf %270, %271 : vector<1x32xf32>
    %273 = arith.index_cast %c7_i32 : i32 to index
    %c0_59 = arith.constant 0 : index
    %274 = vector.load %arg20[%273, %c0_59] : memref<8x32xf32, #tpu.memory_space<vmem>>, vector<1x32xf32>
    tpu.vector_store %arg20[%273, %c0_59], %272 {strides = array<i32>} : memref<8x32xf32, #tpu.memory_space<vmem>>, vector<1x32xf32>,
    %c8_i32 = arith.constant 8 : i32
    %c0_60 = arith.constant 0 : index
    %c0_61 = arith.constant 0 : index
    %275 = vector.load %arg20[%c0_60, %c0_61] : memref<8x32xf32, #tpu.memory_space<vmem>>, vector<8x32xf32>
    %276 = arith.truncf %275 : vector<8x32xf32> to vector<8x32xbf16>
    %c0_62 = arith.constant 0 : index
    %c0_63 = arith.constant 0 : index
    %277 = vector.load %arg5[%c0_62, %c0_63] : memref<32x32xbf16, #tpu.memory_space<vmem>>, vector<32x32xbf16>
    %cst_64 = arith.constant dense<0.000000e+00> : vector<8x32xf32>
    %278 = tpu.matmul %276, %277, %cst_64 {dimension_numbers = #tpu.dot_dimension_numbers<[1], [0], [0], [1], [0, 0, 1, 1], [], []>} : vector<8x32xbf16>, vector<32x32xbf16>, vector<8x32xf32> -> vector<8x32xf32>
    %c0_65 = arith.constant 0 : index
    %c0_66 = arith.constant 0 : index
    %279 = vector.load %arg6[%c0_65, %c0_66] : memref<1x32xf32, #tpu.memory_space<vmem>>, vector<1x32xf32>
    %280 = vector.broadcast %279 : vector<1x32xf32> to vector<8x32xf32>
    %281 = arith.addf %278, %280 : vector<8x32xf32>
    %c0_67 = arith.constant 0 : index
    %c0_68 = arith.constant 0 : index
    %282 = vector.load %arg7[%c0_67, %c0_68] : memref<32x32xbf16, #tpu.memory_space<vmem>>, vector<32x32xbf16>
    %c0_69 = arith.constant 0 : index
    %c0_70 = arith.constant 0 : index
    %283 = vector.load %arg8[%c0_69, %c0_70] : memref<1x32xf32, #tpu.memory_space<vmem>>, vector<1x32xf32>
    %c0_71 = arith.constant 0 : index
    %c0_72 = arith.constant 0 : index
    %284 = vector.load %arg9[%c0_71, %c0_72] : memref<1x32xbf16, #tpu.memory_space<vmem>>, vector<1x32xbf16>
    %c0_73 = arith.constant 0 : index
    %c0_74 = arith.constant 0 : index
    %285 = vector.load %arg10[%c0_73, %c0_74] : memref<20x96xbf16, #tpu.memory_space<vmem>>, vector<20x96xbf16>
    %c0_75 = arith.constant 0 : index
    %c0_76 = arith.constant 0 : index
    %286 = vector.load %arg11[%c0_75, %c0_76] : memref<32x96xbf16, #tpu.memory_space<vmem>>, vector<32x96xbf16>
    %c0_77 = arith.constant 0 : index
    %c0_78 = arith.constant 0 : index
    %287 = vector.load %arg12[%c0_77, %c0_78] : memref<32x96xbf16, #tpu.memory_space<vmem>>, vector<32x96xbf16>
    %c0_79 = arith.constant 0 : index
    %c0_80 = arith.constant 0 : index
    %288 = vector.load %arg13[%c0_79, %c0_80] : memref<1x96xf32, #tpu.memory_space<vmem>>, vector<1x96xf32>
    %c0_81 = arith.constant 0 : index
    %c0_82 = arith.constant 0 : index
    %289 = vector.load %arg14[%c0_81, %c0_82] : memref<1x96xf32, #tpu.memory_space<vmem>>, vector<1x96xf32>
    %c0_83 = arith.constant 0 : index
    %c0_84 = arith.constant 0 : index
    %290 = vector.load %arg15[%c0_83, %c0_84] : memref<32x20xbf16, #tpu.memory_space<vmem>>, vector<32x20xbf16>
    %c0_85 = arith.constant 0 : index
    %c0_86 = arith.constant 0 : index
    %291 = vector.load %arg16[%c0_85, %c0_86] : memref<1x20xf32, #tpu.memory_space<vmem>>, vector<1x20xf32>
    %292 = tpu.iota {dimensions = array<i32: 1>} : vector<1x20xi32>
    %cst_87 = arith.constant 0.000000e+00 : f32
    %293 = vector.broadcast %cst_87 : f32 to vector<1x20xf32>
    %c0_i32_88 = arith.constant 0 : i32
    %294 = arith.truncf %272 : vector<1x32xf32> to vector<1x32xbf16>
    %cst_89 = arith.constant dense<0.000000e+00> : vector<1x32xf32>
    %295 = tpu.matmul %294, %282, %cst_89 {dimension_numbers = #tpu.dot_dimension_numbers<[1], [0], [0], [1], [0, 0, 1, 1], [], []>} : vector<1x32xbf16>, vector<32x32xbf16>, vector<1x32xf32> -> vector<1x32xf32>
    %296 = arith.addf %295, %283 : vector<1x32xf32>
    %297 = vector.broadcast %296 : vector<1x32xf32> to vector<8x32xf32>
    %298 = arith.addf %281, %297 : vector<8x32xf32>
    %299 = math.tanh %298 : vector<8x32xf32>
    %300 = arith.truncf %299 : vector<8x32xf32> to vector<8x32xbf16>
    "tpu.trace_start"() <{level = 10 : i32, message = "ih,th->it"}> : () -> ()
    %cst_90 = arith.constant dense<0.000000e+00> : vector<1x8xf32>
    %301 = tpu.matmul %284, %300, %cst_90 {dimension_numbers = #tpu.dot_dimension_numbers<[1], [1], [0], [0], [0, 0, 1, 0], [], []>} : vector<1x32xbf16>, vector<8x32xbf16>, vector<1x8xf32> -> vector<1x8xf32>
    "tpu.trace_stop"() : () -> ()
    %cst_91 = arith.constant dense<0xFF800000> : vector<1xf32>
    %302 = vector.multi_reduction <maximumf>, %301, %cst_91 [1] : vector<1x8xf32> to vector<1xf32>
    %303 = vector.shape_cast %302 : vector<1xf32> to vector<1x1xf32>
    %304 = vector.broadcast %303 : vector<1x1xf32> to vector<1x8xf32>
    %305 = arith.subf %301, %304 : vector<1x8xf32>
    %306 = math.exp %305 : vector<1x8xf32>
    %cst_92 = arith.constant dense<0.000000e+00> : vector<1xf32>
    %307 = vector.multi_reduction <add>, %306, %cst_92 [1] : vector<1x8xf32> to vector<1xf32>
    %308 = vector.shape_cast %307 : vector<1xf32> to vector<1x1xf32>
    %309 = tpu.reciprocal %308 {approx = true} : vector<1x1xf32> -> vector<1x1xf32>
    %310 = vector.broadcast %309 : vector<1x1xf32> to vector<1x8xf32>
    %311 = arith.mulf %306, %310 : vector<1x8xf32>
    %312 = arith.index_cast %c0_i32_88 : i32 to index
    %c0_93 = arith.constant 0 : index
    %313 = vector.load %arg18[%312, %c0_93] : memref<6x8xf32, #tpu.memory_space<vmem>>, vector<1x8xf32>
    tpu.vector_store %arg18[%312, %c0_93], %311 {strides = array<i32>} : memref<6x8xf32, #tpu.memory_space<vmem>>, vector<1x8xf32>,
    %314 = arith.truncf %311 : vector<1x8xf32> to vector<1x8xbf16>
    %cst_94 = arith.constant dense<0.000000e+00> : vector<1x32xf32>
    %315 = tpu.matmul %314, %276, %cst_94 {dimension_numbers = #tpu.dot_dimension_numbers<[1], [0], [0], [1], [0, 0, 1, 1], [], []>} : vector<1x8xbf16>, vector<8x32xbf16>, vector<1x32xf32> -> vector<1x32xf32>
    %316 = arith.truncf %293 : vector<1x20xf32> to vector<1x20xbf16>
    %cst_95 = arith.constant dense<0.000000e+00> : vector<1x96xf32>
    %317 = tpu.matmul %316, %285, %cst_95 {dimension_numbers = #tpu.dot_dimension_numbers<[1], [0], [0], [1], [0, 0, 1, 1], [], []>} : vector<1x20xbf16>, vector<20x96xbf16>, vector<1x96xf32> -> vector<1x96xf32>
    %318 = arith.truncf %315 : vector<1x32xf32> to vector<1x32xbf16>
    %cst_96 = arith.constant dense<0.000000e+00> : vector<1x96xf32>
    %319 = tpu.matmul %318, %286, %cst_96 {dimension_numbers = #tpu.dot_dimension_numbers<[1], [0], [0], [1], [0, 0, 1, 1], [], []>} : vector<1x32xbf16>, vector<32x96xbf16>, vector<1x96xf32> -> vector<1x96xf32>
    %320 = arith.addf %317, %319 : vector<1x96xf32>
    %321 = arith.addf %320, %288 : vector<1x96xf32>
    %322 = arith.truncf %272 : vector<1x32xf32> to vector<1x32xbf16>
    %cst_97 = arith.constant dense<0.000000e+00> : vector<1x96xf32>
    %323 = tpu.matmul %322, %287, %cst_97 {dimension_numbers = #tpu.dot_dimension_numbers<[1], [0], [0], [1], [0, 0, 1, 1], [], []>} : vector<1x32xbf16>, vector<32x96xbf16>, vector<1x96xf32> -> vector<1x96xf32>
    %324 = arith.addf %323, %289 : vector<1x96xf32>
    %325 = vector.extract_strided_slice %321 {offsets = [0, 0], sizes = [1, 32], strides = [1, 1]} : vector<1x96xf32> to vector<1x32xf32>
    %326 = vector.extract_strided_slice %324 {offsets = [0, 0], sizes = [1, 32], strides = [1, 1]} : vector<1x96xf32> to vector<1x32xf32>
    %327 = arith.addf %325, %326 : vector<1x32xf32>
    %328 = arith.negf %327 : vector<1x32xf32>
    %329 = math.exp %328 : vector<1x32xf32>
    %cst_98 = arith.constant 1.000000e+00 : f32
    %330 = vector.broadcast %cst_98 : f32 to vector<1x32xf32>
    %331 = arith.addf %330, %329 : vector<1x32xf32>
    %332 = arith.divf %330, %331 : vector<1x32xf32>
    %333 = vector.extract_strided_slice %321 {offsets = [0, 32], sizes = [1, 32], strides = [1, 1]} : vector<1x96xf32> to vector<1x32xf32>
    %334 = vector.extract_strided_slice %324 {offsets = [0, 32], sizes = [1, 32], strides = [1, 1]} : vector<1x96xf32> to vector<1x32xf32>
    %335 = arith.addf %333, %334 : vector<1x32xf32>
    %336 = arith.negf %335 : vector<1x32xf32>
    %337 = math.exp %336 : vector<1x32xf32>
    %cst_99 = arith.constant 1.000000e+00 : f32
    %338 = vector.broadcast %cst_99 : f32 to vector<1x32xf32>
    %339 = arith.addf %338, %337 : vector<1x32xf32>
    %340 = arith.divf %338, %339 : vector<1x32xf32>
    %341 = vector.extract_strided_slice %321 {offsets = [0, 64], sizes = [1, 32], strides = [1, 1]} : vector<1x96xf32> to vector<1x32xf32>
    %342 = vector.extract_strided_slice %324 {offsets = [0, 64], sizes = [1, 32], strides = [1, 1]} : vector<1x96xf32> to vector<1x32xf32>
    %343 = arith.mulf %332, %342 : vector<1x32xf32>
    %344 = arith.addf %341, %343 : vector<1x32xf32>
    %345 = math.tanh %344 : vector<1x32xf32>
    %cst_100 = arith.constant 1.000000e+00 : f32
    %346 = vector.broadcast %cst_100 : f32 to vector<1x32xf32>
    %347 = arith.subf %346, %340 : vector<1x32xf32>
    %348 = arith.mulf %347, %345 : vector<1x32xf32>
    %349 = arith.mulf %340, %272 : vector<1x32xf32>
    %350 = arith.addf %348, %349 : vector<1x32xf32>
    %351 = arith.truncf %350 : vector<1x32xf32> to vector<1x32xbf16>
    %cst_101 = arith.constant dense<0.000000e+00> : vector<1x20xf32>
    %352 = tpu.matmul %351, %290, %cst_101 {dimension_numbers = #tpu.dot_dimension_numbers<[1], [0], [0], [1], [0, 0, 1, 1], [], []>} : vector<1x32xbf16>, vector<32x20xbf16>, vector<1x20xf32> -> vector<1x20xf32>
    %353 = arith.addf %352, %291 : vector<1x20xf32>
    %cst_102 = arith.constant dense<0xFF800000> : vector<1xf32>
    %354 = vector.multi_reduction <maximumf>, %353, %cst_102 [1] : vector<1x20xf32> to vector<1xf32>
    %355 = vector.shape_cast %354 : vector<1xf32> to vector<1x1xf32>
    %356 = vector.broadcast %355 : vector<1x1xf32> to vector<1x20xf32>
    %357 = arith.subf %353, %356 : vector<1x20xf32>
    %358 = math.exp %357 : vector<1x20xf32>
    %cst_103 = arith.constant dense<0.000000e+00> : vector<1xf32>
    %359 = vector.multi_reduction <add>, %358, %cst_103 [1] : vector<1x20xf32> to vector<1xf32>
    %360 = vector.shape_cast %359 : vector<1xf32> to vector<1x1xf32>
    %361 = math.log %360 : vector<1x1xf32>
    %362 = vector.broadcast %361 : vector<1x1xf32> to vector<1x20xf32>
    %363 = arith.subf %357, %362 : vector<1x20xf32>
    %364 = arith.index_cast %c0_i32_88 : i32 to index
    %c0_104 = arith.constant 0 : index
    %365 = vector.load %arg17[%364, %c0_104] : memref<6x20xf32, #tpu.memory_space<vmem>>, vector<1x20xf32>
    tpu.vector_store %arg17[%364, %c0_104], %363 {strides = array<i32>} : memref<6x20xf32, #tpu.memory_space<vmem>>, vector<1x20xf32>,
    %cst_105 = arith.constant dense<0xFF800000> : vector<1xf32>
    %366 = vector.multi_reduction <maximumf>, %363, %cst_105 [1] : vector<1x20xf32> to vector<1xf32>
    %367 = vector.shape_cast %366 : vector<1xf32> to vector<1x1xf32>
    %368 = vector.broadcast %367 : vector<1x1xf32> to vector<1x20xf32>
    %369 = arith.cmpf oeq, %363, %368 : vector<1x20xf32>
    %c20_i32 = arith.constant 20 : i32
    %370 = vector.broadcast %c20_i32 : i32 to vector<1x20xi32>
    %371 = arith.select %369, %292, %370 : vector<1x20xi1>, vector<1x20xi32>
    %cst_106 = arith.constant dense<2147483647> : vector<1xi32>
    %372 = vector.multi_reduction <minsi>, %371, %cst_106 [1] : vector<1x20xi32> to vector<1xi32>
    %373 = vector.shape_cast %372 : vector<1xi32> to vector<1x1xi32>
    %374 = vector.broadcast %373 : vector<1x1xi32> to vector<1x20xi32>
    %375 = arith.cmpi eq, %292, %374 : vector<1x20xi32>
    %cst_107 = arith.constant 1.000000e+00 : f32
    %cst_108 = arith.constant 0.000000e+00 : f32
    %376 = vector.broadcast %cst_107 : f32 to vector<1x20xf32>
    %377 = vector.broadcast %cst_108 : f32 to vector<1x20xf32>
    %378 = arith.select %375, %376, %377 : vector<1x20xi1>, vector<1x20xf32>
    %c1_i32_109 = arith.constant 1 : i32
    %379 = arith.truncf %350 : vector<1x32xf32> to vector<1x32xbf16>
    %cst_110 = arith.constant dense<0.000000e+00> : vector<1x32xf32>
    %380 = tpu.matmul %379, %282, %cst_110 {dimension_numbers = #tpu.dot_dimension_numbers<[1], [0], [0], [1], [0, 0, 1, 1], [], []>} : vector<1x32xbf16>, vector<32x32xbf16>, vector<1x32xf32> -> vector<1x32xf32>
    %381 = arith.addf %380, %283 : vector<1x32xf32>
    %382 = vector.broadcast %381 : vector<1x32xf32> to vector<8x32xf32>
    %383 = arith.addf %281, %382 : vector<8x32xf32>
    %384 = math.tanh %383 : vector<8x32xf32>
    %385 = arith.truncf %384 : vector<8x32xf32> to vector<8x32xbf16>
    "tpu.trace_start"() <{level = 10 : i32, message = "ih,th->it"}> : () -> ()
    %cst_111 = arith.constant dense<0.000000e+00> : vector<1x8xf32>
    %386 = tpu.matmul %284, %385, %cst_111 {dimension_numbers = #tpu.dot_dimension_numbers<[1], [1], [0], [0], [0, 0, 1, 0], [], []>} : vector<1x32xbf16>, vector<8x32xbf16>, vector<1x8xf32> -> vector<1x8xf32>
    "tpu.trace_stop"() : () -> ()
    %cst_112 = arith.constant dense<0xFF800000> : vector<1xf32>
    %387 = vector.multi_reduction <maximumf>, %386, %cst_112 [1] : vector<1x8xf32> to vector<1xf32>
    %388 = vector.shape_cast %387 : vector<1xf32> to vector<1x1xf32>
    %389 = vector.broadcast %388 : vector<1x1xf32> to vector<1x8xf32>
    %390 = arith.subf %386, %389 : vector<1x8xf32>
    %391 = math.exp %390 : vector<1x8xf32>
    %cst_113 = arith.constant dense<0.000000e+00> : vector<1xf32>
    %392 = vector.multi_reduction <add>, %391, %cst_113 [1] : vector<1x8xf32> to vector<1xf32>
    %393 = vector.shape_cast %392 : vector<1xf32> to vector<1x1xf32>
    %394 = tpu.reciprocal %393 {approx = true} : vector<1x1xf32> -> vector<1x1xf32>
    %395 = vector.broadcast %394 : vector<1x1xf32> to vector<1x8xf32>
    %396 = arith.mulf %391, %395 : vector<1x8xf32>
    %397 = arith.index_cast %c1_i32_109 : i32 to index
    %c0_114 = arith.constant 0 : index
    %398 = vector.load %arg18[%397, %c0_114] : memref<6x8xf32, #tpu.memory_space<vmem>>, vector<1x8xf32>
    tpu.vector_store %arg18[%397, %c0_114], %396 {strides = array<i32>} : memref<6x8xf32, #tpu.memory_space<vmem>>, vector<1x8xf32>,
    %399 = arith.truncf %396 : vector<1x8xf32> to vector<1x8xbf16>
    %cst_115 = arith.constant dense<0.000000e+00> : vector<1x32xf32>
    %400 = tpu.matmul %399, %276, %cst_115 {dimension_numbers = #tpu.dot_dimension_numbers<[1], [0], [0], [1], [0, 0, 1, 1], [], []>} : vector<1x8xbf16>, vector<8x32xbf16>, vector<1x32xf32> -> vector<1x32xf32>
    %401 = arith.truncf %378 : vector<1x20xf32> to vector<1x20xbf16>
    %cst_116 = arith.constant dense<0.000000e+00> : vector<1x96xf32>
    %402 = tpu.matmul %401, %285, %cst_116 {dimension_numbers = #tpu.dot_dimension_numbers<[1], [0], [0], [1], [0, 0, 1, 1], [], []>} : vector<1x20xbf16>, vector<20x96xbf16>, vector<1x96xf32> -> vector<1x96xf32>
    %403 = arith.truncf %400 : vector<1x32xf32> to vector<1x32xbf16>
    %cst_117 = arith.constant dense<0.000000e+00> : vector<1x96xf32>
    %404 = tpu.matmul %403, %286, %cst_117 {dimension_numbers = #tpu.dot_dimension_numbers<[1], [0], [0], [1], [0, 0, 1, 1], [], []>} : vector<1x32xbf16>, vector<32x96xbf16>, vector<1x96xf32> -> vector<1x96xf32>
    %405 = arith.addf %402, %404 : vector<1x96xf32>
    %406 = arith.addf %405, %288 : vector<1x96xf32>
    %407 = arith.truncf %350 : vector<1x32xf32> to vector<1x32xbf16>
    %cst_118 = arith.constant dense<0.000000e+00> : vector<1x96xf32>
    %408 = tpu.matmul %407, %287, %cst_118 {dimension_numbers = #tpu.dot_dimension_numbers<[1], [0], [0], [1], [0, 0, 1, 1], [], []>} : vector<1x32xbf16>, vector<32x96xbf16>, vector<1x96xf32> -> vector<1x96xf32>
    %409 = arith.addf %408, %289 : vector<1x96xf32>
    %410 = vector.extract_strided_slice %406 {offsets = [0, 0], sizes = [1, 32], strides = [1, 1]} : vector<1x96xf32> to vector<1x32xf32>
    %411 = vector.extract_strided_slice %409 {offsets = [0, 0], sizes = [1, 32], strides = [1, 1]} : vector<1x96xf32> to vector<1x32xf32>
    %412 = arith.addf %410, %411 : vector<1x32xf32>
    %413 = arith.negf %412 : vector<1x32xf32>
    %414 = math.exp %413 : vector<1x32xf32>
    %cst_119 = arith.constant 1.000000e+00 : f32
    %415 = vector.broadcast %cst_119 : f32 to vector<1x32xf32>
    %416 = arith.addf %415, %414 : vector<1x32xf32>
    %417 = arith.divf %415, %416 : vector<1x32xf32>
    %418 = vector.extract_strided_slice %406 {offsets = [0, 32], sizes = [1, 32], strides = [1, 1]} : vector<1x96xf32> to vector<1x32xf32>
    %419 = vector.extract_strided_slice %409 {offsets = [0, 32], sizes = [1, 32], strides = [1, 1]} : vector<1x96xf32> to vector<1x32xf32>
    %420 = arith.addf %418, %419 : vector<1x32xf32>
    %421 = arith.negf %420 : vector<1x32xf32>
    %422 = math.exp %421 : vector<1x32xf32>
    %cst_120 = arith.constant 1.000000e+00 : f32
    %423 = vector.broadcast %cst_120 : f32 to vector<1x32xf32>
    %424 = arith.addf %423, %422 : vector<1x32xf32>
    %425 = arith.divf %423, %424 : vector<1x32xf32>
    %426 = vector.extract_strided_slice %406 {offsets = [0, 64], sizes = [1, 32], strides = [1, 1]} : vector<1x96xf32> to vector<1x32xf32>
    %427 = vector.extract_strided_slice %409 {offsets = [0, 64], sizes = [1, 32], strides = [1, 1]} : vector<1x96xf32> to vector<1x32xf32>
    %428 = arith.mulf %417, %427 : vector<1x32xf32>
    %429 = arith.addf %426, %428 : vector<1x32xf32>
    %430 = math.tanh %429 : vector<1x32xf32>
    %cst_121 = arith.constant 1.000000e+00 : f32
    %431 = vector.broadcast %cst_121 : f32 to vector<1x32xf32>
    %432 = arith.subf %431, %425 : vector<1x32xf32>
    %433 = arith.mulf %432, %430 : vector<1x32xf32>
    %434 = arith.mulf %425, %350 : vector<1x32xf32>
    %435 = arith.addf %433, %434 : vector<1x32xf32>
    %436 = arith.truncf %435 : vector<1x32xf32> to vector<1x32xbf16>
    %cst_122 = arith.constant dense<0.000000e+00> : vector<1x20xf32>
    %437 = tpu.matmul %436, %290, %cst_122 {dimension_numbers = #tpu.dot_dimension_numbers<[1], [0], [0], [1], [0, 0, 1, 1], [], []>} : vector<1x32xbf16>, vector<32x20xbf16>, vector<1x20xf32> -> vector<1x20xf32>
    %438 = arith.addf %437, %291 : vector<1x20xf32>
    %cst_123 = arith.constant dense<0xFF800000> : vector<1xf32>
    %439 = vector.multi_reduction <maximumf>, %438, %cst_123 [1] : vector<1x20xf32> to vector<1xf32>
    %440 = vector.shape_cast %439 : vector<1xf32> to vector<1x1xf32>
    %441 = vector.broadcast %440 : vector<1x1xf32> to vector<1x20xf32>
    %442 = arith.subf %438, %441 : vector<1x20xf32>
    %443 = math.exp %442 : vector<1x20xf32>
    %cst_124 = arith.constant dense<0.000000e+00> : vector<1xf32>
    %444 = vector.multi_reduction <add>, %443, %cst_124 [1] : vector<1x20xf32> to vector<1xf32>
    %445 = vector.shape_cast %444 : vector<1xf32> to vector<1x1xf32>
    %446 = math.log %445 : vector<1x1xf32>
    %447 = vector.broadcast %446 : vector<1x1xf32> to vector<1x20xf32>
    %448 = arith.subf %442, %447 : vector<1x20xf32>
    %449 = arith.index_cast %c1_i32_109 : i32 to index
    %c0_125 = arith.constant 0 : index
    %450 = vector.load %arg17[%449, %c0_125] : memref<6x20xf32, #tpu.memory_space<vmem>>, vector<1x20xf32>
    tpu.vector_store %arg17[%449, %c0_125], %448 {strides = array<i32>} : memref<6x20xf32, #tpu.memory_space<vmem>>, vector<1x20xf32>,
    %cst_126 = arith.constant dense<0xFF800000> : vector<1xf32>
    %451 = vector.multi_reduction <maximumf>, %448, %cst_126 [1] : vector<1x20xf32> to vector<1xf32>
    %452 = vector.shape_cast %451 : vector<1xf32> to vector<1x1xf32>
    %453 = vector.broadcast %452 : vector<1x1xf32> to vector<1x20xf32>
    %454 = arith.cmpf oeq, %448, %453 : vector<1x20xf32>
    %c20_i32_127 = arith.constant 20 : i32
    %455 = vector.broadcast %c20_i32_127 : i32 to vector<1x20xi32>
    %456 = arith.select %454, %292, %455 : vector<1x20xi1>, vector<1x20xi32>
    %cst_128 = arith.constant dense<2147483647> : vector<1xi32>
    %457 = vector.multi_reduction <minsi>, %456, %cst_128 [1] : vector<1x20xi32> to vector<1xi32>
    %458 = vector.shape_cast %457 : vector<1xi32> to vector<1x1xi32>
    %459 = vector.broadcast %458 : vector<1x1xi32> to vector<1x20xi32>
    %460 = arith.cmpi eq, %292, %459 : vector<1x20xi32>
    %cst_129 = arith.constant 1.000000e+00 : f32
    %cst_130 = arith.constant 0.000000e+00 : f32
    %461 = vector.broadcast %cst_129 : f32 to vector<1x20xf32>
    %462 = vector.broadcast %cst_130 : f32 to vector<1x20xf32>
    %463 = arith.select %460, %461, %462 : vector<1x20xi1>, vector<1x20xf32>
    %c2_i32_131 = arith.constant 2 : i32
    %464 = arith.truncf %435 : vector<1x32xf32> to vector<1x32xbf16>
    %cst_132 = arith.constant dense<0.000000e+00> : vector<1x32xf32>
    %465 = tpu.matmul %464, %282, %cst_132 {dimension_numbers = #tpu.dot_dimension_numbers<[1], [0], [0], [1], [0, 0, 1, 1], [], []>} : vector<1x32xbf16>, vector<32x32xbf16>, vector<1x32xf32> -> vector<1x32xf32>
    %466 = arith.addf %465, %283 : vector<1x32xf32>
    %467 = vector.broadcast %466 : vector<1x32xf32> to vector<8x32xf32>
    %468 = arith.addf %281, %467 : vector<8x32xf32>
    %469 = math.tanh %468 : vector<8x32xf32>
    %470 = arith.truncf %469 : vector<8x32xf32> to vector<8x32xbf16>
    "tpu.trace_start"() <{level = 10 : i32, message = "ih,th->it"}> : () -> ()
    %cst_133 = arith.constant dense<0.000000e+00> : vector<1x8xf32>
    %471 = tpu.matmul %284, %470, %cst_133 {dimension_numbers = #tpu.dot_dimension_numbers<[1], [1], [0], [0], [0, 0, 1, 0], [], []>} : vector<1x32xbf16>, vector<8x32xbf16>, vector<1x8xf32> -> vector<1x8xf32>
    "tpu.trace_stop"() : () -> ()
    %cst_134 = arith.constant dense<0xFF800000> : vector<1xf32>
    %472 = vector.multi_reduction <maximumf>, %471, %cst_134 [1] : vector<1x8xf32> to vector<1xf32>
    %473 = vector.shape_cast %472 : vector<1xf32> to vector<1x1xf32>
    %474 = vector.broadcast %473 : vector<1x1xf32> to vector<1x8xf32>
    %475 = arith.subf %471, %474 : vector<1x8xf32>
    %476 = math.exp %475 : vector<1x8xf32>
    %cst_135 = arith.constant dense<0.000000e+00> : vector<1xf32>
    %477 = vector.multi_reduction <add>, %476, %cst_135 [1] : vector<1x8xf32> to vector<1xf32>
    %478 = vector.shape_cast %477 : vector<1xf32> to vector<1x1xf32>
    %479 = tpu.reciprocal %478 {approx = true} : vector<1x1xf32> -> vector<1x1xf32>
    %480 = vector.broadcast %479 : vector<1x1xf32> to vector<1x8xf32>
    %481 = arith.mulf %476, %480 : vector<1x8xf32>
    %482 = arith.index_cast %c2_i32_131 : i32 to index
    %c0_136 = arith.constant 0 : index
    %483 = vector.load %arg18[%482, %c0_136] : memref<6x8xf32, #tpu.memory_space<vmem>>, vector<1x8xf32>
    tpu.vector_store %arg18[%482, %c0_136], %481 {strides = array<i32>} : memref<6x8xf32, #tpu.memory_space<vmem>>, vector<1x8xf32>,
    %484 = arith.truncf %481 : vector<1x8xf32> to vector<1x8xbf16>
    %cst_137 = arith.constant dense<0.000000e+00> : vector<1x32xf32>
    %485 = tpu.matmul %484, %276, %cst_137 {dimension_numbers = #tpu.dot_dimension_numbers<[1], [0], [0], [1], [0, 0, 1, 1], [], []>} : vector<1x8xbf16>, vector<8x32xbf16>, vector<1x32xf32> -> vector<1x32xf32>
    %486 = arith.truncf %463 : vector<1x20xf32> to vector<1x20xbf16>
    %cst_138 = arith.constant dense<0.000000e+00> : vector<1x96xf32>
    %487 = tpu.matmul %486, %285, %cst_138 {dimension_numbers = #tpu.dot_dimension_numbers<[1], [0], [0], [1], [0, 0, 1, 1], [], []>} : vector<1x20xbf16>, vector<20x96xbf16>, vector<1x96xf32> -> vector<1x96xf32>
    %488 = arith.truncf %485 : vector<1x32xf32> to vector<1x32xbf16>
    %cst_139 = arith.constant dense<0.000000e+00> : vector<1x96xf32>
    %489 = tpu.matmul %488, %286, %cst_139 {dimension_numbers = #tpu.dot_dimension_numbers<[1], [0], [0], [1], [0, 0, 1, 1], [], []>} : vector<1x32xbf16>, vector<32x96xbf16>, vector<1x96xf32> -> vector<1x96xf32>
    %490 = arith.addf %487, %489 : vector<1x96xf32>
    %491 = arith.addf %490, %288 : vector<1x96xf32>
    %492 = arith.truncf %435 : vector<1x32xf32> to vector<1x32xbf16>
    %cst_140 = arith.constant dense<0.000000e+00> : vector<1x96xf32>
    %493 = tpu.matmul %492, %287, %cst_140 {dimension_numbers = #tpu.dot_dimension_numbers<[1], [0], [0], [1], [0, 0, 1, 1], [], []>} : vector<1x32xbf16>, vector<32x96xbf16>, vector<1x96xf32> -> vector<1x96xf32>
    %494 = arith.addf %493, %289 : vector<1x96xf32>
    %495 = vector.extract_strided_slice %491 {offsets = [0, 0], sizes = [1, 32], strides = [1, 1]} : vector<1x96xf32> to vector<1x32xf32>
    %496 = vector.extract_strided_slice %494 {offsets = [0, 0], sizes = [1, 32], strides = [1, 1]} : vector<1x96xf32> to vector<1x32xf32>
    %497 = arith.addf %495, %496 : vector<1x32xf32>
    %498 = arith.negf %497 : vector<1x32xf32>
    %499 = math.exp %498 : vector<1x32xf32>
    %cst_141 = arith.constant 1.000000e+00 : f32
    %500 = vector.broadcast %cst_141 : f32 to vector<1x32xf32>
    %501 = arith.addf %500, %499 : vector<1x32xf32>
    %502 = arith.divf %500, %501 : vector<1x32xf32>
    %503 = vector.extract_strided_slice %491 {offsets = [0, 32], sizes = [1, 32], strides = [1, 1]} : vector<1x96xf32> to vector<1x32xf32>
    %504 = vector.extract_strided_slice %494 {offsets = [0, 32], sizes = [1, 32], strides = [1, 1]} : vector<1x96xf32> to vector<1x32xf32>
    %505 = arith.addf %503, %504 : vector<1x32xf32>
    %506 = arith.negf %505 : vector<1x32xf32>
    %507 = math.exp %506 : vector<1x32xf32>
    %cst_142 = arith.constant 1.000000e+00 : f32
    %508 = vector.broadcast %cst_142 : f32 to vector<1x32xf32>
    %509 = arith.addf %508, %507 : vector<1x32xf32>
    %510 = arith.divf %508, %509 : vector<1x32xf32>
    %511 = vector.extract_strided_slice %491 {offsets = [0, 64], sizes = [1, 32], strides = [1, 1]} : vector<1x96xf32> to vector<1x32xf32>
    %512 = vector.extract_strided_slice %494 {offsets = [0, 64], sizes = [1, 32], strides = [1, 1]} : vector<1x96xf32> to vector<1x32xf32>
    %513 = arith.mulf %502, %512 : vector<1x32xf32>
    %514 = arith.addf %511, %513 : vector<1x32xf32>
    %515 = math.tanh %514 : vector<1x32xf32>
    %cst_143 = arith.constant 1.000000e+00 : f32
    %516 = vector.broadcast %cst_143 : f32 to vector<1x32xf32>
    %517 = arith.subf %516, %510 : vector<1x32xf32>
    %518 = arith.mulf %517, %515 : vector<1x32xf32>
    %519 = arith.mulf %510, %435 : vector<1x32xf32>
    %520 = arith.addf %518, %519 : vector<1x32xf32>
    %521 = arith.truncf %520 : vector<1x32xf32> to vector<1x32xbf16>
    %cst_144 = arith.constant dense<0.000000e+00> : vector<1x20xf32>
    %522 = tpu.matmul %521, %290, %cst_144 {dimension_numbers = #tpu.dot_dimension_numbers<[1], [0], [0], [1], [0, 0, 1, 1], [], []>} : vector<1x32xbf16>, vector<32x20xbf16>, vector<1x20xf32> -> vector<1x20xf32>
    %523 = arith.addf %522, %291 : vector<1x20xf32>
    %cst_145 = arith.constant dense<0xFF800000> : vector<1xf32>
    %524 = vector.multi_reduction <maximumf>, %523, %cst_145 [1] : vector<1x20xf32> to vector<1xf32>
    %525 = vector.shape_cast %524 : vector<1xf32> to vector<1x1xf32>
    %526 = vector.broadcast %525 : vector<1x1xf32> to vector<1x20xf32>
    %527 = arith.subf %523, %526 : vector<1x20xf32>
    %528 = math.exp %527 : vector<1x20xf32>
    %cst_146 = arith.constant dense<0.000000e+00> : vector<1xf32>
    %529 = vector.multi_reduction <add>, %528, %cst_146 [1] : vector<1x20xf32> to vector<1xf32>
    %530 = vector.shape_cast %529 : vector<1xf32> to vector<1x1xf32>
    %531 = math.log %530 : vector<1x1xf32>
    %532 = vector.broadcast %531 : vector<1x1xf32> to vector<1x20xf32>
    %533 = arith.subf %527, %532 : vector<1x20xf32>
    %534 = arith.index_cast %c2_i32_131 : i32 to index
    %c0_147 = arith.constant 0 : index
    %535 = vector.load %arg17[%534, %c0_147] : memref<6x20xf32, #tpu.memory_space<vmem>>, vector<1x20xf32>
    tpu.vector_store %arg17[%534, %c0_147], %533 {strides = array<i32>} : memref<6x20xf32, #tpu.memory_space<vmem>>, vector<1x20xf32>,
    %cst_148 = arith.constant dense<0xFF800000> : vector<1xf32>
    %536 = vector.multi_reduction <maximumf>, %533, %cst_148 [1] : vector<1x20xf32> to vector<1xf32>
    %537 = vector.shape_cast %536 : vector<1xf32> to vector<1x1xf32>
    %538 = vector.broadcast %537 : vector<1x1xf32> to vector<1x20xf32>
    %539 = arith.cmpf oeq, %533, %538 : vector<1x20xf32>
    %c20_i32_149 = arith.constant 20 : i32
    %540 = vector.broadcast %c20_i32_149 : i32 to vector<1x20xi32>
    %541 = arith.select %539, %292, %540 : vector<1x20xi1>, vector<1x20xi32>
    %cst_150 = arith.constant dense<2147483647> : vector<1xi32>
    %542 = vector.multi_reduction <minsi>, %541, %cst_150 [1] : vector<1x20xi32> to vector<1xi32>
    %543 = vector.shape_cast %542 : vector<1xi32> to vector<1x1xi32>
    %544 = vector.broadcast %543 : vector<1x1xi32> to vector<1x20xi32>
    %545 = arith.cmpi eq, %292, %544 : vector<1x20xi32>
    %cst_151 = arith.constant 1.000000e+00 : f32
    %cst_152 = arith.constant 0.000000e+00 : f32
    %546 = vector.broadcast %cst_151 : f32 to vector<1x20xf32>
    %547 = vector.broadcast %cst_152 : f32 to vector<1x20xf32>
    %548 = arith.select %545, %546, %547 : vector<1x20xi1>, vector<1x20xf32>
    %c3_i32_153 = arith.constant 3 : i32
    %549 = arith.truncf %520 : vector<1x32xf32> to vector<1x32xbf16>
    %cst_154 = arith.constant dense<0.000000e+00> : vector<1x32xf32>
    %550 = tpu.matmul %549, %282, %cst_154 {dimension_numbers = #tpu.dot_dimension_numbers<[1], [0], [0], [1], [0, 0, 1, 1], [], []>} : vector<1x32xbf16>, vector<32x32xbf16>, vector<1x32xf32> -> vector<1x32xf32>
    %551 = arith.addf %550, %283 : vector<1x32xf32>
    %552 = vector.broadcast %551 : vector<1x32xf32> to vector<8x32xf32>
    %553 = arith.addf %281, %552 : vector<8x32xf32>
    %554 = math.tanh %553 : vector<8x32xf32>
    %555 = arith.truncf %554 : vector<8x32xf32> to vector<8x32xbf16>
    "tpu.trace_start"() <{level = 10 : i32, message = "ih,th->it"}> : () -> ()
    %cst_155 = arith.constant dense<0.000000e+00> : vector<1x8xf32>
    %556 = tpu.matmul %284, %555, %cst_155 {dimension_numbers = #tpu.dot_dimension_numbers<[1], [1], [0], [0], [0, 0, 1, 0], [], []>} : vector<1x32xbf16>, vector<8x32xbf16>, vector<1x8xf32> -> vector<1x8xf32>
    "tpu.trace_stop"() : () -> ()
    %cst_156 = arith.constant dense<0xFF800000> : vector<1xf32>
    %557 = vector.multi_reduction <maximumf>, %556, %cst_156 [1] : vector<1x8xf32> to vector<1xf32>
    %558 = vector.shape_cast %557 : vector<1xf32> to vector<1x1xf32>
    %559 = vector.broadcast %558 : vector<1x1xf32> to vector<1x8xf32>
    %560 = arith.subf %556, %559 : vector<1x8xf32>
    %561 = math.exp %560 : vector<1x8xf32>
    %cst_157 = arith.constant dense<0.000000e+00> : vector<1xf32>
    %562 = vector.multi_reduction <add>, %561, %cst_157 [1] : vector<1x8xf32> to vector<1xf32>
    %563 = vector.shape_cast %562 : vector<1xf32> to vector<1x1xf32>
    %564 = tpu.reciprocal %563 {approx = true} : vector<1x1xf32> -> vector<1x1xf32>
    %565 = vector.broadcast %564 : vector<1x1xf32> to vector<1x8xf32>
    %566 = arith.mulf %561, %565 : vector<1x8xf32>
    %567 = arith.index_cast %c3_i32_153 : i32 to index
    %c0_158 = arith.constant 0 : index
    %568 = vector.load %arg18[%567, %c0_158] : memref<6x8xf32, #tpu.memory_space<vmem>>, vector<1x8xf32>
    tpu.vector_store %arg18[%567, %c0_158], %566 {strides = array<i32>} : memref<6x8xf32, #tpu.memory_space<vmem>>, vector<1x8xf32>,
    %569 = arith.truncf %566 : vector<1x8xf32> to vector<1x8xbf16>
    %cst_159 = arith.constant dense<0.000000e+00> : vector<1x32xf32>
    %570 = tpu.matmul %569, %276, %cst_159 {dimension_numbers = #tpu.dot_dimension_numbers<[1], [0], [0], [1], [0, 0, 1, 1], [], []>} : vector<1x8xbf16>, vector<8x32xbf16>, vector<1x32xf32> -> vector<1x32xf32>
    %571 = arith.truncf %548 : vector<1x20xf32> to vector<1x20xbf16>
    %cst_160 = arith.constant dense<0.000000e+00> : vector<1x96xf32>
    %572 = tpu.matmul %571, %285, %cst_160 {dimension_numbers = #tpu.dot_dimension_numbers<[1], [0], [0], [1], [0, 0, 1, 1], [], []>} : vector<1x20xbf16>, vector<20x96xbf16>, vector<1x96xf32> -> vector<1x96xf32>
    %573 = arith.truncf %570 : vector<1x32xf32> to vector<1x32xbf16>
    %cst_161 = arith.constant dense<0.000000e+00> : vector<1x96xf32>
    %574 = tpu.matmul %573, %286, %cst_161 {dimension_numbers = #tpu.dot_dimension_numbers<[1], [0], [0], [1], [0, 0, 1, 1], [], []>} : vector<1x32xbf16>, vector<32x96xbf16>, vector<1x96xf32> -> vector<1x96xf32>
    %575 = arith.addf %572, %574 : vector<1x96xf32>
    %576 = arith.addf %575, %288 : vector<1x96xf32>
    %577 = arith.truncf %520 : vector<1x32xf32> to vector<1x32xbf16>
    %cst_162 = arith.constant dense<0.000000e+00> : vector<1x96xf32>
    %578 = tpu.matmul %577, %287, %cst_162 {dimension_numbers = #tpu.dot_dimension_numbers<[1], [0], [0], [1], [0, 0, 1, 1], [], []>} : vector<1x32xbf16>, vector<32x96xbf16>, vector<1x96xf32> -> vector<1x96xf32>
    %579 = arith.addf %578, %289 : vector<1x96xf32>
    %580 = vector.extract_strided_slice %576 {offsets = [0, 0], sizes = [1, 32], strides = [1, 1]} : vector<1x96xf32> to vector<1x32xf32>
    %581 = vector.extract_strided_slice %579 {offsets = [0, 0], sizes = [1, 32], strides = [1, 1]} : vector<1x96xf32> to vector<1x32xf32>
    %582 = arith.addf %580, %581 : vector<1x32xf32>
    %583 = arith.negf %582 : vector<1x32xf32>
    %584 = math.exp %583 : vector<1x32xf32>
    %cst_163 = arith.constant 1.000000e+00 : f32
    %585 = vector.broadcast %cst_163 : f32 to vector<1x32xf32>
    %586 = arith.addf %585, %584 : vector<1x32xf32>
    %587 = arith.divf %585, %586 : vector<1x32xf32>
    %588 = vector.extract_strided_slice %576 {offsets = [0, 32], sizes = [1, 32], strides = [1, 1]} : vector<1x96xf32> to vector<1x32xf32>
    %589 = vector.extract_strided_slice %579 {offsets = [0, 32], sizes = [1, 32], strides = [1, 1]} : vector<1x96xf32> to vector<1x32xf32>
    %590 = arith.addf %588, %589 : vector<1x32xf32>
    %591 = arith.negf %590 : vector<1x32xf32>
    %592 = math.exp %591 : vector<1x32xf32>
    %cst_164 = arith.constant 1.000000e+00 : f32
    %593 = vector.broadcast %cst_164 : f32 to vector<1x32xf32>
    %594 = arith.addf %593, %592 : vector<1x32xf32>
    %595 = arith.divf %593, %594 : vector<1x32xf32>
    %596 = vector.extract_strided_slice %576 {offsets = [0, 64], sizes = [1, 32], strides = [1, 1]} : vector<1x96xf32> to vector<1x32xf32>
    %597 = vector.extract_strided_slice %579 {offsets = [0, 64], sizes = [1, 32], strides = [1, 1]} : vector<1x96xf32> to vector<1x32xf32>
    %598 = arith.mulf %587, %597 : vector<1x32xf32>
    %599 = arith.addf %596, %598 : vector<1x32xf32>
    %600 = math.tanh %599 : vector<1x32xf32>
    %cst_165 = arith.constant 1.000000e+00 : f32
    %601 = vector.broadcast %cst_165 : f32 to vector<1x32xf32>
    %602 = arith.subf %601, %595 : vector<1x32xf32>
    %603 = arith.mulf %602, %600 : vector<1x32xf32>
    %604 = arith.mulf %595, %520 : vector<1x32xf32>
    %605 = arith.addf %603, %604 : vector<1x32xf32>
    %606 = arith.truncf %605 : vector<1x32xf32> to vector<1x32xbf16>
    %cst_166 = arith.constant dense<0.000000e+00> : vector<1x20xf32>
    %607 = tpu.matmul %606, %290, %cst_166 {dimension_numbers = #tpu.dot_dimension_numbers<[1], [0], [0], [1], [0, 0, 1, 1], [], []>} : vector<1x32xbf16>, vector<32x20xbf16>, vector<1x20xf32> -> vector<1x20xf32>
    %608 = arith.addf %607, %291 : vector<1x20xf32>
    %cst_167 = arith.constant dense<0xFF800000> : vector<1xf32>
    %609 = vector.multi_reduction <maximumf>, %608, %cst_167 [1] : vector<1x20xf32> to vector<1xf32>
    %610 = vector.shape_cast %609 : vector<1xf32> to vector<1x1xf32>
    %611 = vector.broadcast %610 : vector<1x1xf32> to vector<1x20xf32>
    %612 = arith.subf %608, %611 : vector<1x20xf32>
    %613 = math.exp %612 : vector<1x20xf32>
    %cst_168 = arith.constant dense<0.000000e+00> : vector<1xf32>
    %614 = vector.multi_reduction <add>, %613, %cst_168 [1] : vector<1x20xf32> to vector<1xf32>
    %615 = vector.shape_cast %614 : vector<1xf32> to vector<1x1xf32>
    %616 = math.log %615 : vector<1x1xf32>
    %617 = vector.broadcast %616 : vector<1x1xf32> to vector<1x20xf32>
    %618 = arith.subf %612, %617 : vector<1x20xf32>
    %619 = arith.index_cast %c3_i32_153 : i32 to index
    %c0_169 = arith.constant 0 : index
    %620 = vector.load %arg17[%619, %c0_169] : memref<6x20xf32, #tpu.memory_space<vmem>>, vector<1x20xf32>
    tpu.vector_store %arg17[%619, %c0_169], %618 {strides = array<i32>} : memref<6x20xf32, #tpu.memory_space<vmem>>, vector<1x20xf32>,
    %cst_170 = arith.constant dense<0xFF800000> : vector<1xf32>
    %621 = vector.multi_reduction <maximumf>, %618, %cst_170 [1] : vector<1x20xf32> to vector<1xf32>
    %622 = vector.shape_cast %621 : vector<1xf32> to vector<1x1xf32>
    %623 = vector.broadcast %622 : vector<1x1xf32> to vector<1x20xf32>
    %624 = arith.cmpf oeq, %618, %623 : vector<1x20xf32>
    %c20_i32_171 = arith.constant 20 : i32
    %625 = vector.broadcast %c20_i32_171 : i32 to vector<1x20xi32>
    %626 = arith.select %624, %292, %625 : vector<1x20xi1>, vector<1x20xi32>
    %cst_172 = arith.constant dense<2147483647> : vector<1xi32>
    %627 = vector.multi_reduction <minsi>, %626, %cst_172 [1] : vector<1x20xi32> to vector<1xi32>
    %628 = vector.shape_cast %627 : vector<1xi32> to vector<1x1xi32>
    %629 = vector.broadcast %628 : vector<1x1xi32> to vector<1x20xi32>
    %630 = arith.cmpi eq, %292, %629 : vector<1x20xi32>
    %cst_173 = arith.constant 1.000000e+00 : f32
    %cst_174 = arith.constant 0.000000e+00 : f32
    %631 = vector.broadcast %cst_173 : f32 to vector<1x20xf32>
    %632 = vector.broadcast %cst_174 : f32 to vector<1x20xf32>
    %633 = arith.select %630, %631, %632 : vector<1x20xi1>, vector<1x20xf32>
    %c4_i32_175 = arith.constant 4 : i32
    %634 = arith.truncf %605 : vector<1x32xf32> to vector<1x32xbf16>
    %cst_176 = arith.constant dense<0.000000e+00> : vector<1x32xf32>
    %635 = tpu.matmul %634, %282, %cst_176 {dimension_numbers = #tpu.dot_dimension_numbers<[1], [0], [0], [1], [0, 0, 1, 1], [], []>} : vector<1x32xbf16>, vector<32x32xbf16>, vector<1x32xf32> -> vector<1x32xf32>
    %636 = arith.addf %635, %283 : vector<1x32xf32>
    %637 = vector.broadcast %636 : vector<1x32xf32> to vector<8x32xf32>
    %638 = arith.addf %281, %637 : vector<8x32xf32>
    %639 = math.tanh %638 : vector<8x32xf32>
    %640 = arith.truncf %639 : vector<8x32xf32> to vector<8x32xbf16>
    "tpu.trace_start"() <{level = 10 : i32, message = "ih,th->it"}> : () -> ()
    %cst_177 = arith.constant dense<0.000000e+00> : vector<1x8xf32>
    %641 = tpu.matmul %284, %640, %cst_177 {dimension_numbers = #tpu.dot_dimension_numbers<[1], [1], [0], [0], [0, 0, 1, 0], [], []>} : vector<1x32xbf16>, vector<8x32xbf16>, vector<1x8xf32> -> vector<1x8xf32>
    "tpu.trace_stop"() : () -> ()
    %cst_178 = arith.constant dense<0xFF800000> : vector<1xf32>
    %642 = vector.multi_reduction <maximumf>, %641, %cst_178 [1] : vector<1x8xf32> to vector<1xf32>
    %643 = vector.shape_cast %642 : vector<1xf32> to vector<1x1xf32>
    %644 = vector.broadcast %643 : vector<1x1xf32> to vector<1x8xf32>
    %645 = arith.subf %641, %644 : vector<1x8xf32>
    %646 = math.exp %645 : vector<1x8xf32>
    %cst_179 = arith.constant dense<0.000000e+00> : vector<1xf32>
    %647 = vector.multi_reduction <add>, %646, %cst_179 [1] : vector<1x8xf32> to vector<1xf32>
    %648 = vector.shape_cast %647 : vector<1xf32> to vector<1x1xf32>
    %649 = tpu.reciprocal %648 {approx = true} : vector<1x1xf32> -> vector<1x1xf32>
    %650 = vector.broadcast %649 : vector<1x1xf32> to vector<1x8xf32>
    %651 = arith.mulf %646, %650 : vector<1x8xf32>
    %652 = arith.index_cast %c4_i32_175 : i32 to index
    %c0_180 = arith.constant 0 : index
    %653 = vector.load %arg18[%652, %c0_180] : memref<6x8xf32, #tpu.memory_space<vmem>>, vector<1x8xf32>
    tpu.vector_store %arg18[%652, %c0_180], %651 {strides = array<i32>} : memref<6x8xf32, #tpu.memory_space<vmem>>, vector<1x8xf32>,
    %654 = arith.truncf %651 : vector<1x8xf32> to vector<1x8xbf16>
    %cst_181 = arith.constant dense<0.000000e+00> : vector<1x32xf32>
    %655 = tpu.matmul %654, %276, %cst_181 {dimension_numbers = #tpu.dot_dimension_numbers<[1], [0], [0], [1], [0, 0, 1, 1], [], []>} : vector<1x8xbf16>, vector<8x32xbf16>, vector<1x32xf32> -> vector<1x32xf32>
    %656 = arith.truncf %633 : vector<1x20xf32> to vector<1x20xbf16>
    %cst_182 = arith.constant dense<0.000000e+00> : vector<1x96xf32>
    %657 = tpu.matmul %656, %285, %cst_182 {dimension_numbers = #tpu.dot_dimension_numbers<[1], [0], [0], [1], [0, 0, 1, 1], [], []>} : vector<1x20xbf16>, vector<20x96xbf16>, vector<1x96xf32> -> vector<1x96xf32>
    %658 = arith.truncf %655 : vector<1x32xf32> to vector<1x32xbf16>
    %cst_183 = arith.constant dense<0.000000e+00> : vector<1x96xf32>
    %659 = tpu.matmul %658, %286, %cst_183 {dimension_numbers = #tpu.dot_dimension_numbers<[1], [0], [0], [1], [0, 0, 1, 1], [], []>} : vector<1x32xbf16>, vector<32x96xbf16>, vector<1x96xf32> -> vector<1x96xf32>
    %660 = arith.addf %657, %659 : vector<1x96xf32>
    %661 = arith.addf %660, %288 : vector<1x96xf32>
    %662 = arith.truncf %605 : vector<1x32xf32> to vector<1x32xbf16>
    %cst_184 = arith.constant dense<0.000000e+00> : vector<1x96xf32>
    %663 = tpu.matmul %662, %287, %cst_184 {dimension_numbers = #tpu.dot_dimension_numbers<[1], [0], [0], [1], [0, 0, 1, 1], [], []>} : vector<1x32xbf16>, vector<32x96xbf16>, vector<1x96xf32> -> vector<1x96xf32>
    %664 = arith.addf %663, %289 : vector<1x96xf32>
    %665 = vector.extract_strided_slice %661 {offsets = [0, 0], sizes = [1, 32], strides = [1, 1]} : vector<1x96xf32> to vector<1x32xf32>
    %666 = vector.extract_strided_slice %664 {offsets = [0, 0], sizes = [1, 32], strides = [1, 1]} : vector<1x96xf32> to vector<1x32xf32>
    %667 = arith.addf %665, %666 : vector<1x32xf32>
    %668 = arith.negf %667 : vector<1x32xf32>
    %669 = math.exp %668 : vector<1x32xf32>
    %cst_185 = arith.constant 1.000000e+00 : f32
    %670 = vector.broadcast %cst_185 : f32 to vector<1x32xf32>
    %671 = arith.addf %670, %669 : vector<1x32xf32>
    %672 = arith.divf %670, %671 : vector<1x32xf32>
    %673 = vector.extract_strided_slice %661 {offsets = [0, 32], sizes = [1, 32], strides = [1, 1]} : vector<1x96xf32> to vector<1x32xf32>
    %674 = vector.extract_strided_slice %664 {offsets = [0, 32], sizes = [1, 32], strides = [1, 1]} : vector<1x96xf32> to vector<1x32xf32>
    %675 = arith.addf %673, %674 : vector<1x32xf32>
    %676 = arith.negf %675 : vector<1x32xf32>
    %677 = math.exp %676 : vector<1x32xf32>
    %cst_186 = arith.constant 1.000000e+00 : f32
    %678 = vector.broadcast %cst_186 : f32 to vector<1x32xf32>
    %679 = arith.addf %678, %677 : vector<1x32xf32>
    %680 = arith.divf %678, %679 : vector<1x32xf32>
    %681 = vector.extract_strided_slice %661 {offsets = [0, 64], sizes = [1, 32], strides = [1, 1]} : vector<1x96xf32> to vector<1x32xf32>
    %682 = vector.extract_strided_slice %664 {offsets = [0, 64], sizes = [1, 32], strides = [1, 1]} : vector<1x96xf32> to vector<1x32xf32>
    %683 = arith.mulf %672, %682 : vector<1x32xf32>
    %684 = arith.addf %681, %683 : vector<1x32xf32>
    %685 = math.tanh %684 : vector<1x32xf32>
    %cst_187 = arith.constant 1.000000e+00 : f32
    %686 = vector.broadcast %cst_187 : f32 to vector<1x32xf32>
    %687 = arith.subf %686, %680 : vector<1x32xf32>
    %688 = arith.mulf %687, %685 : vector<1x32xf32>
    %689 = arith.mulf %680, %605 : vector<1x32xf32>
    %690 = arith.addf %688, %689 : vector<1x32xf32>
    %691 = arith.truncf %690 : vector<1x32xf32> to vector<1x32xbf16>
    %cst_188 = arith.constant dense<0.000000e+00> : vector<1x20xf32>
    %692 = tpu.matmul %691, %290, %cst_188 {dimension_numbers = #tpu.dot_dimension_numbers<[1], [0], [0], [1], [0, 0, 1, 1], [], []>} : vector<1x32xbf16>, vector<32x20xbf16>, vector<1x20xf32> -> vector<1x20xf32>
    %693 = arith.addf %692, %291 : vector<1x20xf32>
    %cst_189 = arith.constant dense<0xFF800000> : vector<1xf32>
    %694 = vector.multi_reduction <maximumf>, %693, %cst_189 [1] : vector<1x20xf32> to vector<1xf32>
    %695 = vector.shape_cast %694 : vector<1xf32> to vector<1x1xf32>
    %696 = vector.broadcast %695 : vector<1x1xf32> to vector<1x20xf32>
    %697 = arith.subf %693, %696 : vector<1x20xf32>
    %698 = math.exp %697 : vector<1x20xf32>
    %cst_190 = arith.constant dense<0.000000e+00> : vector<1xf32>
    %699 = vector.multi_reduction <add>, %698, %cst_190 [1] : vector<1x20xf32> to vector<1xf32>
    %700 = vector.shape_cast %699 : vector<1xf32> to vector<1x1xf32>
    %701 = math.log %700 : vector<1x1xf32>
    %702 = vector.broadcast %701 : vector<1x1xf32> to vector<1x20xf32>
    %703 = arith.subf %697, %702 : vector<1x20xf32>
    %704 = arith.index_cast %c4_i32_175 : i32 to index
    %c0_191 = arith.constant 0 : index
    %705 = vector.load %arg17[%704, %c0_191] : memref<6x20xf32, #tpu.memory_space<vmem>>, vector<1x20xf32>
    tpu.vector_store %arg17[%704, %c0_191], %703 {strides = array<i32>} : memref<6x20xf32, #tpu.memory_space<vmem>>, vector<1x20xf32>,
    %cst_192 = arith.constant dense<0xFF800000> : vector<1xf32>
    %706 = vector.multi_reduction <maximumf>, %703, %cst_192 [1] : vector<1x20xf32> to vector<1xf32>
    %707 = vector.shape_cast %706 : vector<1xf32> to vector<1x1xf32>
    %708 = vector.broadcast %707 : vector<1x1xf32> to vector<1x20xf32>
    %709 = arith.cmpf oeq, %703, %708 : vector<1x20xf32>
    %c20_i32_193 = arith.constant 20 : i32
    %710 = vector.broadcast %c20_i32_193 : i32 to vector<1x20xi32>
    %711 = arith.select %709, %292, %710 : vector<1x20xi1>, vector<1x20xi32>
    %cst_194 = arith.constant dense<2147483647> : vector<1xi32>
    %712 = vector.multi_reduction <minsi>, %711, %cst_194 [1] : vector<1x20xi32> to vector<1xi32>
    %713 = vector.shape_cast %712 : vector<1xi32> to vector<1x1xi32>
    %714 = vector.broadcast %713 : vector<1x1xi32> to vector<1x20xi32>
    %715 = arith.cmpi eq, %292, %714 : vector<1x20xi32>
    %cst_195 = arith.constant 1.000000e+00 : f32
    %cst_196 = arith.constant 0.000000e+00 : f32
    %716 = vector.broadcast %cst_195 : f32 to vector<1x20xf32>
    %717 = vector.broadcast %cst_196 : f32 to vector<1x20xf32>
    %718 = arith.select %715, %716, %717 : vector<1x20xi1>, vector<1x20xf32>
    %c5_i32_197 = arith.constant 5 : i32
    %719 = arith.truncf %690 : vector<1x32xf32> to vector<1x32xbf16>
    %cst_198 = arith.constant dense<0.000000e+00> : vector<1x32xf32>
    %720 = tpu.matmul %719, %282, %cst_198 {dimension_numbers = #tpu.dot_dimension_numbers<[1], [0], [0], [1], [0, 0, 1, 1], [], []>} : vector<1x32xbf16>, vector<32x32xbf16>, vector<1x32xf32> -> vector<1x32xf32>
    %721 = arith.addf %720, %283 : vector<1x32xf32>
    %722 = vector.broadcast %721 : vector<1x32xf32> to vector<8x32xf32>
    %723 = arith.addf %281, %722 : vector<8x32xf32>
    %724 = math.tanh %723 : vector<8x32xf32>
    %725 = arith.truncf %724 : vector<8x32xf32> to vector<8x32xbf16>
    "tpu.trace_start"() <{level = 10 : i32, message = "ih,th->it"}> : () -> ()
    %cst_199 = arith.constant dense<0.000000e+00> : vector<1x8xf32>
    %726 = tpu.matmul %284, %725, %cst_199 {dimension_numbers = #tpu.dot_dimension_numbers<[1], [1], [0], [0], [0, 0, 1, 0], [], []>} : vector<1x32xbf16>, vector<8x32xbf16>, vector<1x8xf32> -> vector<1x8xf32>
    "tpu.trace_stop"() : () -> ()
    %cst_200 = arith.constant dense<0xFF800000> : vector<1xf32>
    %727 = vector.multi_reduction <maximumf>, %726, %cst_200 [1] : vector<1x8xf32> to vector<1xf32>
    %728 = vector.shape_cast %727 : vector<1xf32> to vector<1x1xf32>
    %729 = vector.broadcast %728 : vector<1x1xf32> to vector<1x8xf32>
    %730 = arith.subf %726, %729 : vector<1x8xf32>
    %731 = math.exp %730 : vector<1x8xf32>
    %cst_201 = arith.constant dense<0.000000e+00> : vector<1xf32>
    %732 = vector.multi_reduction <add>, %731, %cst_201 [1] : vector<1x8xf32> to vector<1xf32>
    %733 = vector.shape_cast %732 : vector<1xf32> to vector<1x1xf32>
    %734 = tpu.reciprocal %733 {approx = true} : vector<1x1xf32> -> vector<1x1xf32>
    %735 = vector.broadcast %734 : vector<1x1xf32> to vector<1x8xf32>
    %736 = arith.mulf %731, %735 : vector<1x8xf32>
    %737 = arith.index_cast %c5_i32_197 : i32 to index
    %c0_202 = arith.constant 0 : index
    %738 = vector.load %arg18[%737, %c0_202] : memref<6x8xf32, #tpu.memory_space<vmem>>, vector<1x8xf32>
    tpu.vector_store %arg18[%737, %c0_202], %736 {strides = array<i32>} : memref<6x8xf32, #tpu.memory_space<vmem>>, vector<1x8xf32>,
    %739 = arith.truncf %736 : vector<1x8xf32> to vector<1x8xbf16>
    %cst_203 = arith.constant dense<0.000000e+00> : vector<1x32xf32>
    %740 = tpu.matmul %739, %276, %cst_203 {dimension_numbers = #tpu.dot_dimension_numbers<[1], [0], [0], [1], [0, 0, 1, 1], [], []>} : vector<1x8xbf16>, vector<8x32xbf16>, vector<1x32xf32> -> vector<1x32xf32>
    %741 = arith.truncf %718 : vector<1x20xf32> to vector<1x20xbf16>
    %cst_204 = arith.constant dense<0.000000e+00> : vector<1x96xf32>
    %742 = tpu.matmul %741, %285, %cst_204 {dimension_numbers = #tpu.dot_dimension_numbers<[1], [0], [0], [1], [0, 0, 1, 1], [], []>} : vector<1x20xbf16>, vector<20x96xbf16>, vector<1x96xf32> -> vector<1x96xf32>
    %743 = arith.truncf %740 : vector<1x32xf32> to vector<1x32xbf16>
    %cst_205 = arith.constant dense<0.000000e+00> : vector<1x96xf32>
    %744 = tpu.matmul %743, %286, %cst_205 {dimension_numbers = #tpu.dot_dimension_numbers<[1], [0], [0], [1], [0, 0, 1, 1], [], []>} : vector<1x32xbf16>, vector<32x96xbf16>, vector<1x96xf32> -> vector<1x96xf32>
    %745 = arith.addf %742, %744 : vector<1x96xf32>
    %746 = arith.addf %745, %288 : vector<1x96xf32>
    %747 = arith.truncf %690 : vector<1x32xf32> to vector<1x32xbf16>
    %cst_206 = arith.constant dense<0.000000e+00> : vector<1x96xf32>
    %748 = tpu.matmul %747, %287, %cst_206 {dimension_numbers = #tpu.dot_dimension_numbers<[1], [0], [0], [1], [0, 0, 1, 1], [], []>} : vector<1x32xbf16>, vector<32x96xbf16>, vector<1x96xf32> -> vector<1x96xf32>
    %749 = arith.addf %748, %289 : vector<1x96xf32>
    %750 = vector.extract_strided_slice %746 {offsets = [0, 0], sizes = [1, 32], strides = [1, 1]} : vector<1x96xf32> to vector<1x32xf32>
    %751 = vector.extract_strided_slice %749 {offsets = [0, 0], sizes = [1, 32], strides = [1, 1]} : vector<1x96xf32> to vector<1x32xf32>
    %752 = arith.addf %750, %751 : vector<1x32xf32>
    %753 = arith.negf %752 : vector<1x32xf32>
    %754 = math.exp %753 : vector<1x32xf32>
    %cst_207 = arith.constant 1.000000e+00 : f32
    %755 = vector.broadcast %cst_207 : f32 to vector<1x32xf32>
    %756 = arith.addf %755, %754 : vector<1x32xf32>
    %757 = arith.divf %755, %756 : vector<1x32xf32>
    %758 = vector.extract_strided_slice %746 {offsets = [0, 32], sizes = [1, 32], strides = [1, 1]} : vector<1x96xf32> to vector<1x32xf32>
    %759 = vector.extract_strided_slice %749 {offsets = [0, 32], sizes = [1, 32], strides = [1, 1]} : vector<1x96xf32> to vector<1x32xf32>
    %760 = arith.addf %758, %759 : vector<1x32xf32>
    %761 = arith.negf %760 : vector<1x32xf32>
    %762 = math.exp %761 : vector<1x32xf32>
    %cst_208 = arith.constant 1.000000e+00 : f32
    %763 = vector.broadcast %cst_208 : f32 to vector<1x32xf32>
    %764 = arith.addf %763, %762 : vector<1x32xf32>
    %765 = arith.divf %763, %764 : vector<1x32xf32>
    %766 = vector.extract_strided_slice %746 {offsets = [0, 64], sizes = [1, 32], strides = [1, 1]} : vector<1x96xf32> to vector<1x32xf32>
    %767 = vector.extract_strided_slice %749 {offsets = [0, 64], sizes = [1, 32], strides = [1, 1]} : vector<1x96xf32> to vector<1x32xf32>
    %768 = arith.mulf %757, %767 : vector<1x32xf32>
    %769 = arith.addf %766, %768 : vector<1x32xf32>
    %770 = math.tanh %769 : vector<1x32xf32>
    %cst_209 = arith.constant 1.000000e+00 : f32
    %771 = vector.broadcast %cst_209 : f32 to vector<1x32xf32>
    %772 = arith.subf %771, %765 : vector<1x32xf32>
    %773 = arith.mulf %772, %770 : vector<1x32xf32>
    %774 = arith.mulf %765, %690 : vector<1x32xf32>
    %775 = arith.addf %773, %774 : vector<1x32xf32>
    %776 = arith.truncf %775 : vector<1x32xf32> to vector<1x32xbf16>
    %cst_210 = arith.constant dense<0.000000e+00> : vector<1x20xf32>
    %777 = tpu.matmul %776, %290, %cst_210 {dimension_numbers = #tpu.dot_dimension_numbers<[1], [0], [0], [1], [0, 0, 1, 1], [], []>} : vector<1x32xbf16>, vector<32x20xbf16>, vector<1x20xf32> -> vector<1x20xf32>
    %778 = arith.addf %777, %291 : vector<1x20xf32>
    %cst_211 = arith.constant dense<0xFF800000> : vector<1xf32>
    %779 = vector.multi_reduction <maximumf>, %778, %cst_211 [1] : vector<1x20xf32> to vector<1xf32>
    %780 = vector.shape_cast %779 : vector<1xf32> to vector<1x1xf32>
    %781 = vector.broadcast %780 : vector<1x1xf32> to vector<1x20xf32>
    %782 = arith.subf %778, %781 : vector<1x20xf32>
    %783 = math.exp %782 : vector<1x20xf32>
    %cst_212 = arith.constant dense<0.000000e+00> : vector<1xf32>
    %784 = vector.multi_reduction <add>, %783, %cst_212 [1] : vector<1x20xf32> to vector<1xf32>
    %785 = vector.shape_cast %784 : vector<1xf32> to vector<1x1xf32>
    %786 = math.log %785 : vector<1x1xf32>
    %787 = vector.broadcast %786 : vector<1x1xf32> to vector<1x20xf32>
    %788 = arith.subf %782, %787 : vector<1x20xf32>
    %789 = arith.index_cast %c5_i32_197 : i32 to index
    %c0_213 = arith.constant 0 : index
    %790 = vector.load %arg17[%789, %c0_213] : memref<6x20xf32, #tpu.memory_space<vmem>>, vector<1x20xf32>
    tpu.vector_store %arg17[%789, %c0_213], %788 {strides = array<i32>} : memref<6x20xf32, #tpu.memory_space<vmem>>, vector<1x20xf32>,
    %cst_214 = arith.constant dense<0xFF800000> : vector<1xf32>
    %791 = vector.multi_reduction <maximumf>, %788, %cst_214 [1] : vector<1x20xf32> to vector<1xf32>
    %792 = vector.shape_cast %791 : vector<1xf32> to vector<1x1xf32>
    %793 = vector.broadcast %792 : vector<1x1xf32> to vector<1x20xf32>
    %794 = arith.cmpf oeq, %788, %793 : vector<1x20xf32>
    %c20_i32_215 = arith.constant 20 : i32
    %795 = vector.broadcast %c20_i32_215 : i32 to vector<1x20xi32>
    %796 = arith.select %794, %292, %795 : vector<1x20xi1>, vector<1x20xi32>
    %cst_216 = arith.constant dense<2147483647> : vector<1xi32>
    %797 = vector.multi_reduction <minsi>, %796, %cst_216 [1] : vector<1x20xi32> to vector<1xi32>
    %798 = vector.shape_cast %797 : vector<1xi32> to vector<1x1xi32>
    %799 = vector.broadcast %798 : vector<1x1xi32> to vector<1x20xi32>
    %800 = arith.cmpi eq, %292, %799 : vector<1x20xi32>
    %cst_217 = arith.constant 1.000000e+00 : f32
    %cst_218 = arith.constant 0.000000e+00 : f32
    %801 = vector.broadcast %cst_217 : f32 to vector<1x20xf32>
    %802 = vector.broadcast %cst_218 : f32 to vector<1x20xf32>
    %803 = arith.select %800, %801, %802 : vector<1x20xi1>, vector<1x20xf32>
    %c6_i32_219 = arith.constant 6 : i32
    return
  }
}

</mosaic_0001>

<llo_original>
// kernel: tpu_custom_call.1
$region0: #{tpu_custom_call.1}
  #allocation0 [shape = 'u32[]', space=smem, size = 0x4, offset = 0x4, fixed_abs, tag = 'smem constant byte address 0x4 - core index']
  #allocation1 [shape = 'u32[72,128]{1,0:T(1,128)}', space=vmem, size = 0x9000, scoped, tag = 'internal scratch']
  #allocation2 [shape = 'f32[8,96]{1,0:T(8,128)}', space=vmem, size = 0x1000, scoped, tag = 'scratch operand']
  #allocation3 [shape = 'f32[8,32]{1,0:T(8,128)}', space=vmem, size = 0x1000, scoped, tag = 'scratch operand']
  %s0 = inlined_call_operand.hbm [shape: f32[8,16], index: 0, kind: input, shape index: {}]
  %s1 = inlined_call_operand.hbm [shape: bf16[16,96], index: 1, kind: input, shape index: {}]
  %s2 = inlined_call_operand.vmem [shape: bf16[32,96], index: 2, kind: input, shape index: {}]
  %s3 = inlined_call_operand.vmem [shape: f32[1,96], index: 3, kind: input, shape index: {}]
  %s4 = inlined_call_operand.vmem [shape: f32[1,96], index: 4, kind: input, shape index: {}]
  %s5 = inlined_call_operand.hbm [shape: bf16[32,32], index: 5, kind: input, shape index: {}]
  %s6 = inlined_call_operand.hbm [shape: f32[1,32], index: 6, kind: input, shape index: {}]
  %s7 = inlined_call_operand.hbm [shape: bf16[32,32], index: 7, kind: input, shape index: {}]
  %s8 = inlined_call_operand.hbm [shape: f32[1,32], index: 8, kind: input, shape index: {}]
  %s9 = inlined_call_operand.hbm [shape: bf16[1,32], index: 9, kind: input, shape index: {}]
  %s10 = inlined_call_operand.vmem [shape: bf16[20,96], index: 10, kind: input, shape index: {}]
  %s11 = inlined_call_operand.hbm [shape: bf16[32,96], index: 11, kind: input, shape index: {}]
  %s12 = inlined_call_operand.hbm [shape: bf16[32,96], index: 12, kind: input, shape index: {}]
  %s13 = inlined_call_operand.hbm [shape: f32[1,96], index: 13, kind: input, shape index: {}]
  %s14 = inlined_call_operand.hbm [shape: f32[1,96], index: 14, kind: input, shape index: {}]
  %s15 = inlined_call_operand.vmem [shape: bf16[32,20], index: 15, kind: input, shape index: {}]
  %s16 = inlined_call_operand.vmem [shape: f32[1,20], index: 16, kind: input, shape index: {}]
  %s17 = inlined_call_operand.hbm [shape: f32[6,20], index: 17, kind: output, shape index: {0}]
  %s18 = inlined_call_operand.hbm [shape: f32[6,8], index: 18, kind: output, shape index: {1}]
  %19 = xla_tuple %s17, %s18
  %s20 = sld [smem:[#allocation0]]
  $region130: #{tpu_custom_call.1} parent=0
    _
  %s22 = ssub.s32 1, %s20
  %s23 = scalar_select 0, %s22, %s20
  $region1: #{tpu_custom_call.1} parent=0
    #allocation4 [shape = 'u8[4096]{0}', space=vmem, size = 0x1000, scoped, tag = 'input window, operand 0, single buffered']
    #allocation5 [shape = 's32[1]{0}', space=sflag, size = 0x4, scoped, tag = 'scoped memory for tpu_custom_call.1']
    #allocation6 [shape = 's32[1]{0}', space=sflag, size = 0x4, scoped, tag = 'scoped memory for tpu_custom_call.1']
    #allocation7 [shape = 'u8[4096]{0}', space=vmem, size = 0x1000, scoped, tag = 'input window, operand 1, single buffered']
    #allocation8 [shape = 's32[1]{0}', space=sflag, size = 0x4, scoped, tag = 'scoped memory for tpu_custom_call.1']
    #allocation9 [shape = 'u8[8192]{0}', space=vmem, size = 0x2000, scoped, tag = 'input window, operand 5, single buffered']
    #allocation10 [shape = 'u8[512]{0}', space=vmem, size = 0x400, scoped, tag = 'input window, operand 6, single buffered']
    #allocation11 [shape = 's32[1]{0}', space=sflag, size = 0x4, scoped, tag = 'scoped memory for tpu_custom_call.1']
    #allocation12 [shape = 'u8[8192]{0}', space=vmem, size = 0x2000, scoped, tag = 'input window, operand 7, single buffered']
    #allocation13 [shape = 'u8[512]{0}', space=vmem, size = 0x400, scoped, tag = 'input window, operand 8, single buffered']
    #allocation14 [shape = 's32[1]{0}', space=sflag, size = 0x4, scoped, tag = 'scoped memory for tpu_custom_call.1']
    #allocation15 [shape = 'u8[512]{0}', space=vmem, size = 0x400, scoped, tag = 'input window, operand 9, single buffered']
    #allocation16 [shape = 'u8[8192]{0}', space=vmem, size = 0x2000, scoped, tag = 'input window, operand 11, single buffered']
    #allocation17 [shape = 's32[1]{0}', space=sflag, size = 0x4, scoped, tag = 'scoped memory for tpu_custom_call.1']
    #allocation18 [shape = 'u8[8192]{0}', space=vmem, size = 0x2000, scoped, tag = 'input window, operand 12, single buffered']
    #allocation19 [shape = 'u8[512]{0}', space=vmem, size = 0x400, scoped, tag = 'input window, operand 13, single buffered']
    #allocation20 [shape = 's32[1]{0}', space=sflag, size = 0x4, scoped, tag = 'scoped memory for tpu_custom_call.1']
    #allocation21 [shape = 'u8[512]{0}', space=vmem, size = 0x400, scoped, tag = 'input window, operand 14, single buffered']
    #allocation22 [shape = 'u8[4096]{0}', space=vmem, size = 0x1000, scoped, tag = 'output window, operand 0, single buffered']
    #allocation23 [shape = 'u8[4096]{0}', space=vmem, size = 0x1000, scoped, tag = 'output window, operand 1, single buffered']
    #allocation24 [shape = 's32[1]{0}', space=sflag, size = 0x4, scoped, tag = 'scoped memory for tpu_custom_call.1']
    %24 = vsyncpa [#allocation5], 0
    %25 = vsyncpa [#allocation8], 0
    %26 = vsyncpa [#allocation11], 0
    %27 = vsyncpa [#allocation14], 0
    %28 = vsyncpa [#allocation17], 0
    %29 = vsyncpa [#allocation20], 0
    %30 = vsyncpa [#allocation6], 0
    %31 = vsyncpa [#allocation24], 0
    // Predicated region
    $region2: #{tpu_custom_call.1} parent=1 // pred_check
      _
    $region3: #{tpu_custom_call.1} parent=1 // pred_check_branch
      %33 = sbr.rel (0) target = $region5
    $region4: #{tpu_custom_call.1} parent=1 // pred_region
      %35 = vsyncadd [#allocation5], 0
      %s37 = sshll.u32 %s0, 4
      %s38 = int_to_ptr.hbm [resolvable:$true] %s37
      %s39 = sshll.u32 [#allocation4], 4
      %s40 = int_to_ptr.vmem [resolvable:$true] %s39
      %42 = dma.hbm_to_vmem [thread:$0]  %s38, 128, %s40, [#allocation5]
    $region5: #{tpu_custom_call.1} parent=1 // pred_fallthru
      _
    // Predicated region
    $region6: #{tpu_custom_call.1} parent=1 // pred_check
      _
    $region7: #{tpu_custom_call.1} parent=1 // pred_check_branch
      %44 = sbr.rel (0) target = $region9
    $region8: #{tpu_custom_call.1} parent=1 // pred_region
      %46 = vsyncadd [#allocation8], 0
      %s47 = sshll.u32 %s1, 4
      %s48 = int_to_ptr.hbm [resolvable:$true] %s47
      %s49 = sshll.u32 [#allocation7], 4
      %s50 = int_to_ptr.vmem [resolvable:$true] %s49
      %55 = dma.hbm_to_vmem [thread:$0]  %s48, 128, %s50, [#allocation8], 64, 64, 4
    $region9: #{tpu_custom_call.1} parent=1 // pred_fallthru
      _
    // Predicated region
    $region10: #{tpu_custom_call.1} parent=1 // pred_check
      _
    $region11: #{tpu_custom_call.1} parent=1 // pred_check_branch
      %57 = sbr.rel (0) target = $region13
    $region12: #{tpu_custom_call.1} parent=1 // pred_region
      _
    $region13: #{tpu_custom_call.1} parent=1 // pred_fallthru
      _
    // Predicated region
    $region14: #{tpu_custom_call.1} parent=1 // pred_check
      _
    $region15: #{tpu_custom_call.1} parent=1 // pred_check_branch
      %59 = sbr.rel (0) target = $region17
    $region16: #{tpu_custom_call.1} parent=1 // pred_region
      _
    $region17: #{tpu_custom_call.1} parent=1 // pred_fallthru
      _
    // Predicated region
    $region18: #{tpu_custom_call.1} parent=1 // pred_check
      _
    $region19: #{tpu_custom_call.1} parent=1 // pred_check_branch
      %61 = sbr.rel (0) target = $region21
    $region20: #{tpu_custom_call.1} parent=1 // pred_region
      _
    $region21: #{tpu_custom_call.1} parent=1 // pred_fallthru
      _
    // Predicated region
    $region22: #{tpu_custom_call.1} parent=1 // pred_check
      _
    $region23: #{tpu_custom_call.1} parent=1 // pred_check_branch
      %63 = sbr.rel (0) target = $region25
    $region24: #{tpu_custom_call.1} parent=1 // pred_region
      %65 = vsyncadd [#allocation8], 0
      %s66 = sshll.u32 %s5, 4
      %s67 = int_to_ptr.hbm [resolvable:$true] %s66
      %s68 = sshll.u32 [#allocation9], 4
      %s69 = int_to_ptr.vmem [resolvable:$true] %s68
      %74 = dma.hbm_to_vmem [thread:$0]  %s67, 256, %s69, [#allocation8], 64, 64, 4
    $region25: #{tpu_custom_call.1} parent=1 // pred_fallthru
      _
    // Predicated region
    $region26: #{tpu_custom_call.1} parent=1 // pred_check
      _
    $region27: #{tpu_custom_call.1} parent=1 // pred_check_branch
      %76 = sbr.rel (0) target = $region29
    $region28: #{tpu_custom_call.1} parent=1 // pred_region
      %78 = vsyncadd [#allocation11], 0
      %s80 = sshll.u32 %s6, 4
      %s81 = int_to_ptr.hbm [resolvable:$true] %s80
      %s82 = sshll.u32 [#allocation10], 4
      %s83 = int_to_ptr.vmem [resolvable:$true] %s82
      %85 = dma.hbm_to_vmem [thread:$0]  %s81, 16, %s83, [#allocation11]
    $region29: #{tpu_custom_call.1} parent=1 // pred_fallthru
      _
    // Predicated region
    $region30: #{tpu_custom_call.1} parent=1 // pred_check
      _
    $region31: #{tpu_custom_call.1} parent=1 // pred_check_branch
      %87 = sbr.rel (0) target = $region33
    $region32: #{tpu_custom_call.1} parent=1 // pred_region
      %89 = vsyncadd [#allocation11], 0
      %s90 = sshll.u32 %s7, 4
      %s91 = int_to_ptr.hbm [resolvable:$true] %s90
      %s92 = sshll.u32 [#allocation12], 4
      %s93 = int_to_ptr.vmem [resolvable:$true] %s92
      %98 = dma.hbm_to_vmem [thread:$0]  %s91, 256, %s93, [#allocation11], 64, 64, 4
    $region33: #{tpu_custom_call.1} parent=1 // pred_fallthru
      _
    // Predicated region
    $region34: #{tpu_custom_call.1} parent=1 // pred_check
      _
    $region35: #{tpu_custom_call.1} parent=1 // pred_check_branch
      %100 = sbr.rel (0) target = $region37
    $region36: #{tpu_custom_call.1} parent=1 // pred_region
      %102 = vsyncadd [#allocation14], 0
      %s104 = sshll.u32 %s8, 4
      %s105 = int_to_ptr.hbm [resolvable:$true] %s104
      %s106 = sshll.u32 [#allocation13], 4
      %s107 = int_to_ptr.vmem [resolvable:$true] %s106
      %109 = dma.hbm_to_vmem [thread:$0]  %s105, 16, %s107, [#allocation14]
    $region37: #{tpu_custom_call.1} parent=1 // pred_fallthru
      _
    // Predicated region
    $region38: #{tpu_custom_call.1} parent=1 // pred_check
      _
    $region39: #{tpu_custom_call.1} parent=1 // pred_check_branch
      %111 = sbr.rel (0) target = $region41
    $region40: #{tpu_custom_call.1} parent=1 // pred_region
      %113 = vsyncadd [#allocation14], 0
      %s115 = sshll.u32 %s9, 4
      %s116 = int_to_ptr.hbm [resolvable:$true] %s115
      %s117 = sshll.u32 [#allocation15], 4
      %s118 = int_to_ptr.vmem [resolvable:$true] %s117
      %120 = dma.hbm_to_vmem [thread:$0]  %s116, 16, %s118, [#allocation14]
    $region41: #{tpu_custom_call.1} parent=1 // pred_fallthru
      _
    // Predicated region
    $region42: #{tpu_custom_call.1} parent=1 // pred_check
      _
    $region43: #{tpu_custom_call.1} parent=1 // pred_check_branch
      %122 = sbr.rel (0) target = $region45
    $region44: #{tpu_custom_call.1} parent=1 // pred_region
      _
    $region45: #{tpu_custom_call.1} parent=1 // pred_fallthru
      _
    // Predicated region
    $region46: #{tpu_custom_call.1} parent=1 // pred_check
      _
    $region47: #{tpu_custom_call.1} parent=1 // pred_check_branch
      %124 = sbr.rel (0) target = $region49
    $region48: #{tpu_custom_call.1} parent=1 // pred_region
      %126 = vsyncadd [#allocation17], 0
      %s127 = sshll.u32 %s11, 4
      %s128 = int_to_ptr.hbm [resolvable:$true] %s127
      %s129 = sshll.u32 [#allocation16], 4
      %s130 = int_to_ptr.vmem [resolvable:$true] %s129
      %135 = dma.hbm_to_vmem [thread:$0]  %s128, 256, %s130, [#allocation17], 64, 64, 4
    $region49: #{tpu_custom_call.1} parent=1 // pred_fallthru
      _
    // Predicated region
    $region50: #{tpu_custom_call.1} parent=1 // pred_check
      _
    $region51: #{tpu_custom_call.1} parent=1 // pred_check_branch
      %137 = sbr.rel (0) target = $region53
    $region52: #{tpu_custom_call.1} parent=1 // pred_region
      %139 = vsyncadd [#allocation17], 0
      %s140 = sshll.u32 %s12, 4
      %s141 = int_to_ptr.hbm [resolvable:$true] %s140
      %s142 = sshll.u32 [#allocation18], 4
      %s143 = int_to_ptr.vmem [resolvable:$true] %s142
      %148 = dma.hbm_to_vmem [thread:$0]  %s141, 256, %s143, [#allocation17], 64, 64, 4
    $region53: #{tpu_custom_call.1} parent=1 // pred_fallthru
      _
    // Predicated region
    $region54: #{tpu_custom_call.1} parent=1 // pred_check
      _
    $region55: #{tpu_custom_call.1} parent=1 // pred_check_branch
      %150 = sbr.rel (0) target = $region57
    $region56: #{tpu_custom_call.1} parent=1 // pred_region
      %152 = vsyncadd [#allocation20], 0
      %s154 = sshll.u32 %s13, 4
      %s155 = int_to_ptr.hbm [resolvable:$true] %s154
      %s156 = sshll.u32 [#allocation19], 4
      %s157 = int_to_ptr.vmem [resolvable:$true] %s156
      %159 = dma.hbm_to_vmem [thread:$0]  %s155, 16, %s157, [#allocation20]
    $region57: #{tpu_custom_call.1} parent=1 // pred_fallthru
      _
    // Predicated region
    $region58: #{tpu_custom_call.1} parent=1 // pred_check
      _
    $region59: #{tpu_custom_call.1} parent=1 // pred_check_branch
      %161 = sbr.rel (0) target = $region61
    $region60: #{tpu_custom_call.1} parent=1 // pred_region
      %163 = vsyncadd [#allocation20], 0
      %s165 = sshll.u32 %s14, 4
      %s166 = int_to_ptr.hbm [resolvable:$true] %s165
      %s167 = sshll.u32 [#allocation21], 4
      %s168 = int_to_ptr.vmem [resolvable:$true] %s167
      %170 = dma.hbm_to_vmem [thread:$0]  %s166, 16, %s168, [#allocation20]
    $region61: #{tpu_custom_call.1} parent=1 // pred_fallthru
      _
    // Predicated region
    $region62: #{tpu_custom_call.1} parent=1 // pred_check
      _
    $region63: #{tpu_custom_call.1} parent=1 // pred_check_branch
      %172 = sbr.rel (0) target = $region65
    $region64: #{tpu_custom_call.1} parent=1 // pred_region
      _
    $region65: #{tpu_custom_call.1} parent=1 // pred_fallthru
      _
    // Predicated region
    $region66: #{tpu_custom_call.1} parent=1 // pred_check
      _
    $region67: #{tpu_custom_call.1} parent=1 // pred_check_branch
      %174 = sbr.rel (0) target = $region69
    $region68: #{tpu_custom_call.1} parent=1 // pred_region
      _
    $region69: #{tpu_custom_call.1} parent=1 // pred_fallthru
      _
    // Predicated region
    $region70: #{tpu_custom_call.1} parent=1 // pred_check
      _
    $region71: #{tpu_custom_call.1} parent=1 // pred_check_branch
      %176 = sbr.rel (0) target = $region73
    $region72: #{tpu_custom_call.1} parent=1 // pred_region
      %178 = dma.done [#allocation5], 128
    $region73: #{tpu_custom_call.1} parent=1 // pred_fallthru
      _
    // Predicated region
    $region74: #{tpu_custom_call.1} parent=1 // pred_check
      _
    $region75: #{tpu_custom_call.1} parent=1 // pred_check_branch
      %180 = sbr.rel (0) target = $region77
    $region76: #{tpu_custom_call.1} parent=1 // pred_region
      %182 = dma.done [#allocation8], 128
    $region77: #{tpu_custom_call.1} parent=1 // pred_fallthru
      _
    // Predicated region
    $region78: #{tpu_custom_call.1} parent=1 // pred_check
      _
    $region79: #{tpu_custom_call.1} parent=1 // pred_check_branch
      %184 = sbr.rel (0) target = $region81
    $region80: #{tpu_custom_call.1} parent=1 // pred_region
      %186 = dma.done [#allocation8], 256
    $region81: #{tpu_custom_call.1} parent=1 // pred_fallthru
      _
    // Predicated region
    $region82: #{tpu_custom_call.1} parent=1 // pred_check
      _
    $region83: #{tpu_custom_call.1} parent=1 // pred_check_branch
      %188 = sbr.rel (0) target = $region85
    $region84: #{tpu_custom_call.1} parent=1 // pred_region
      %190 = dma.done [#allocation11], 16
    $region85: #{tpu_custom_call.1} parent=1 // pred_fallthru
      _
    // Predicated region
    $region86: #{tpu_custom_call.1} parent=1 // pred_check
      _
    $region87: #{tpu_custom_call.1} parent=1 // pred_check_branch
      %192 = sbr.rel (0) target = $region89
    $region88: #{tpu_custom_call.1} parent=1 // pred_region
      %194 = dma.done [#allocation11], 256
    $region89: #{tpu_custom_call.1} parent=1 // pred_fallthru
      _
    // Predicated region
    $region90: #{tpu_custom_call.1} parent=1 // pred_check
      _
    $region91: #{tpu_custom_call.1} parent=1 // pred_check_branch
      %196 = sbr.rel (0) target = $region93
    $region92: #{tpu_custom_call.1} parent=1 // pred_region
      %198 = dma.done [#allocation14], 16
    $region93: #{tpu_custom_call.1} parent=1 // pred_fallthru
      _
    // Predicated region
    $region94: #{tpu_custom_call.1} parent=1 // pred_check
      _
    $region95: #{tpu_custom_call.1} parent=1 // pred_check_branch
      %200 = sbr.rel (0) target = $region97
    $region96: #{tpu_custom_call.1} parent=1 // pred_region
      %202 = dma.done [#allocation14], 16
    $region97: #{tpu_custom_call.1} parent=1 // pred_fallthru
      _
    // Predicated region
    $region98: #{tpu_custom_call.1} parent=1 // pred_check
      _
    $region99: #{tpu_custom_call.1} parent=1 // pred_check_branch
      %204 = sbr.rel (0) target = $region101
    $region100: #{tpu_custom_call.1} parent=1 // pred_region
      %206 = dma.done [#allocation17], 256
    $region101: #{tpu_custom_call.1} parent=1 // pred_fallthru
      _
    // Predicated region
    $region102: #{tpu_custom_call.1} parent=1 // pred_check
      _
    $region103: #{tpu_custom_call.1} parent=1 // pred_check_branch
      %208 = sbr.rel (0) target = $region105
    $region104: #{tpu_custom_call.1} parent=1 // pred_region
      %210 = dma.done [#allocation17], 256
    $region105: #{tpu_custom_call.1} parent=1 // pred_fallthru
      _
    // Predicated region
    $region106: #{tpu_custom_call.1} parent=1 // pred_check
      _
    $region107: #{tpu_custom_call.1} parent=1 // pred_check_branch
      %212 = sbr.rel (0) target = $region109
    $region108: #{tpu_custom_call.1} parent=1 // pred_region
      %214 = dma.done [#allocation20], 16
    $region109: #{tpu_custom_call.1} parent=1 // pred_fallthru
      _
    // Predicated region
    $region110: #{tpu_custom_call.1} parent=1 // pred_check
      _
    $region111: #{tpu_custom_call.1} parent=1 // pred_check_branch
      %216 = sbr.rel (0) target = $region113
    $region112: #{tpu_custom_call.1} parent=1 // pred_region
      %218 = dma.done [#allocation20], 16
    $region113: #{tpu_custom_call.1} parent=1 // pred_fallthru
      _
    %v220 = vld [vmem:[#allocation4] sm:$0xff]
    %v221 = vpack.c.bf16 %v220, %v220
    %v222 = vld [vmem:[#allocation7] sm:$0xf]
    %v223 = vld [vmem:[#allocation7 + $0x4] sm:$0xf]
    %v224 = vld [vmem:[%s3] sm:$0x1]
    %v226 = vperm.slane %v224, 0
    %v230 = vunpack.c.l.b16 %v222
    %v231 = vunpack.c.l.b16 %v223
    %v232 = vpack.c.b16 %v231, %v230
    %vm234 = vcmask 130048
    %v236 = vsel %vm234, %v221, 0
    %238 = vmatpush.bf16.msra.mxu0 0
    %239 = vmatpush.bf16.msra.mxu0 0
    %240 = vmatpush.bf16.msra.mxu0 0
    %241 = vmatpush.bf16.msra.mxu0 0
    %242 = vmatpush.bf16.msra.mxu0 0
    %243 = vmatpush.bf16.msra.mxu0 0
    %244 = vmatpush.bf16.msra.mxu0 0
    %245 = vmatpush.bf16.msra.mxu0 %v232
    %246 = vmatmul.bf16.gmra.mxu0 %v236
    %v247 = vpop.f32.mrf.mxu0
    %v248 = vadd.f32 %v226, %v247
    %v249 = vpop.f32.mrf.mxu0
    %250 = vdwg.mxu0
    %vm251 = vcmask 785408
    %252 = vst.msk [vmem:[#allocation2] sm:$0xff] %vm251, %v248
    %v253 = vld [vmem:[%s2] sm:$0xf]
    %v254 = vld [vmem:[%s2 + $0x4] sm:$0xf]
    %v255 = vld [vmem:[%s2 + $0x8] sm:$0xf]
    %v256 = vld [vmem:[%s2 + $0xc] sm:$0xf]
    %v257 = vld [vmem:[%s4] sm:$0x1]
    %v258 = vld [vmem:[#allocation2] sm:$0x1]
    %v263 = vunpack.c.l.b16 %v253
    %v264 = vunpack.c.l.b16 %v254
    %v265 = vunpack.c.l.b16 %v255
    %v266 = vunpack.c.l.b16 %v256
    %v267 = vpack.c.b16 %v264, %v263
    %v268 = vpack.c.b16 %v266, %v265
    %vm271 = vcmask 261120
    %v273 = vsel %vm271, 0, 0
    %275 = vmatpush.bf16.msra.mxu0 0
    %276 = vmatpush.bf16.msra.mxu0 0
    %277 = vmatpush.bf16.msra.mxu0 0
    %278 = vmatpush.bf16.msra.mxu0 0
    %279 = vmatpush.bf16.msra.mxu0 0
    %280 = vmatpush.bf16.msra.mxu0 0
    %281 = vmatpush.bf16.msra.mxu0 %v268
    %282 = vmatpush.bf16.msra.mxu0 %v267
    %283 = vmatmul.bf16.gmra.mxu0 %v273
    %v284 = vpop.f32.mrf.mxu0
    %v285 = vadd.f32 %v257, %v284
    %v286 = vpop.f32.mrf.mxu0
    %287 = vdwg.mxu0
    %v288 = vadd.f32 %v258, %v285
    %v289 = vxor.u32 %v288, 2147483648
    %v290 = vmul.f32 %v289, 1.442695
    %v291 = vpow.pop %v290
    %v292 = vadd.f32 %v291, 1.0
    %v293 = vrcp.pop %v292
    %v294 = vmul.f32 %v292, %v293
    %v295 = vsub.f32 1.0, %v294
    %v296 = vmul.f32 %v293, %v295
    %v297 = vadd.f32 %v293, %v296
    %vm298 = vweird.f32 %v292
    %vm299 = vweird.f32 %v293
    %vm300 = vmor %vm298, %vm299
    %v301 = vsel %vm300, %v293, %v297
    %v302 = vand.u32 2147483647, %v292
    %vm303 = vcmp.eq.f32.partialorder %v302, 8.507059e+37
    %v304 = vand.u32 %v292, 2147483648
    %v305 = vor.u32 1.1754944e-38, %v304
    %v306 = vsel %vm303, %v305, %v301
    %v307 = vmul.f32 1.0, %v306
    %309 = vrot.lane.b32.xlu0 %v285, 64
    %v310 = vpop.permute.xlu0 %309
    %v312 = vmul.f32 %v307, %v310
    %314 = vrot.lane.b32.xlu0 %v312, 64
    %v315 = vpop.permute.xlu0 %314
    %v317 = vadd.f32 %v258, %v315
    %v318 = vtanh.pop %v317
    %v319 = vsub.f32 1.0, %v307
    %321 = vrot.lane.b32.xlu0 %v318, 96
    %v322 = vpop.permute.xlu0 %321
    %v324 = vmul.f32 %v319, %v322
    %v325 = vmul.f32 %v307, 0.0
    %v326 = vadd.f32 %v324, %v325
    %328 = vrot.lane.b32.xlu0 %v326, 96
    %v329 = vpop.permute.xlu0 %328
    %vm331 = vcmask 253952
    %332 = vst.msk [vmem:[#allocation3] sm:$0x1] %vm331, %v329
    %v333 = vld [vmem:[#allocation2 + $0x1] sm:$0x1]
    %v334 = vpack.c.bf16 %v326, %v326
    %336 = vrot.lane.b32.xlu0 %v334, 96
    %v337 = vpop.permute.xlu0 %336
    %v339 = vsel %vm271, %v337, 0
    %341 = vmatpush.bf16.msra.mxu0 0
    %342 = vmatpush.bf16.msra.mxu0 0
    %343 = vmatpush.bf16.msra.mxu0 0
    %344 = vmatpush.bf16.msra.mxu0 0
    %345 = vmatpush.bf16.msra.mxu0 0
    %346 = vmatpush.bf16.msra.mxu0 0
    %347 = vmatpush.bf16.msra.mxu0 %v268
    %348 = vmatpush.bf16.msra.mxu0 %v267
    %349 = vmatmul.bf16.gmra.mxu0 %v339
    %v350 = vpop.f32.mrf.mxu0
    %v351 = vadd.f32 %v257, %v350
    %v352 = vpop.f32.mrf.mxu0
    %353 = vdwg.mxu0
    %v354 = vadd.f32 %v333, %v351
    %v355 = vxor.u32 %v354, 2147483648
    %v356 = vmul.f32 %v355, 1.442695
    %v357 = vpow.pop %v356
    %v358 = vadd.f32 %v357, 1.0
    %v359 = vrcp.pop %v358
    %v360 = vmul.f32 %v358, %v359
    %v361 = vsub.f32 1.0, %v360
    %v362 = vmul.f32 %v359, %v361
    %v363 = vadd.f32 %v359, %v362
    %vm364 = vweird.f32 %v358
    %vm365 = vweird.f32 %v359
    %vm366 = vmor %vm364, %vm365
    %v367 = vsel %vm366, %v359, %v363
    %v368 = vand.u32 2147483647, %v358
    %vm369 = vcmp.eq.f32.partialorder %v368, 8.507059e+37
    %v370 = vand.u32 %v358, 2147483648
    %v371 = vor.u32 1.1754944e-38, %v370
    %v372 = vsel %vm369, %v371, %v367
    %v373 = vmul.f32 1.0, %v372
    %375 = vrot.lane.b32.xlu0 %v351, 64
    %v376 = vpop.permute.xlu0 %375
    %v378 = vmul.f32 %v373, %v376
    %380 = vrot.lane.b32.xlu0 %v378, 64
    %v381 = vpop.permute.xlu0 %380
    %v383 = vadd.f32 %v333, %v381
    %v384 = vtanh.pop %v383
    %v385 = vsub.f32 1.0, %v373
    %387 = vrot.lane.b32.xlu0 %v384, 96
    %v388 = vpop.permute.xlu0 %387
    %v390 = vmul.f32 %v385, %v388
    %v391 = vmul.f32 %v373, %v326
    %v392 = vadd.f32 %v390, %v391
    %394 = vrot.lane.b32.xlu0 %v392, 96
    %v395 = vpop.permute.xlu0 %394
    %397 = vst.msk [vmem:[#allocation3 + $0x1] sm:$0x1] %vm331, %v395
    %v398 = vld [vmem:[#allocation2 + $0x2] sm:$0x1]
    %v399 = vpack.c.bf16 %v392, %v392
    %401 = vrot.lane.b32.xlu0 %v399, 96
    %v402 = vpop.permute.xlu0 %401
    %v404 = vsel %vm271, %v402, 0
    %406 = vmatpush.bf16.msra.mxu0 0
    %407 = vmatpush.bf16.msra.mxu0 0
    %408 = vmatpush.bf16.msra.mxu0 0
    %409 = vmatpush.bf16.msra.mxu0 0
    %410 = vmatpush.bf16.msra.mxu0 0
    %411 = vmatpush.bf16.msra.mxu0 0
    %412 = vmatpush.bf16.msra.mxu0 %v268
    %413 = vmatpush.bf16.msra.mxu0 %v267
    %414 = vmatmul.bf16.gmra.mxu0 %v404
    %v415 = vpop.f32.mrf.mxu0
    %v416 = vadd.f32 %v257, %v415
    %v417 = vpop.f32.mrf.mxu0
    %418 = vdwg.mxu0
    %v419 = vadd.f32 %v398, %v416
    %v420 = vxor.u32 %v419, 2147483648
    %v421 = vmul.f32 %v420, 1.442695
    %v422 = vpow.pop %v421
    %v423 = vadd.f32 %v422, 1.0
    %v424 = vrcp.pop %v423
    %v425 = vmul.f32 %v423, %v424
    %v426 = vsub.f32 1.0, %v425
    %v427 = vmul.f32 %v424, %v426
    %v428 = vadd.f32 %v424, %v427
    %vm429 = vweird.f32 %v423
    %vm430 = vweird.f32 %v424
    %vm431 = vmor %vm429, %vm430
    %v432 = vsel %vm431, %v424, %v428
    %v433 = vand.u32 2147483647, %v423
    %vm434 = vcmp.eq.f32.partialorder %v433, 8.507059e+37
    %v435 = vand.u32 %v423, 2147483648
    %v436 = vor.u32 1.1754944e-38, %v435
    %v437 = vsel %vm434, %v436, %v432
    %v438 = vmul.f32 1.0, %v437
    %440 = vrot.lane.b32.xlu0 %v416, 64
    %v441 = vpop.permute.xlu0 %440
    %v443 = vmul.f32 %v438, %v441
    %445 = vrot.lane.b32.xlu0 %v443, 64
    %v446 = vpop.permute.xlu0 %445
    %v448 = vadd.f32 %v398, %v446
    %v449 = vtanh.pop %v448
    %v450 = vsub.f32 1.0, %v438
    %452 = vrot.lane.b32.xlu0 %v449, 96
    %v453 = vpop.permute.xlu0 %452
    %v455 = vmul.f32 %v450, %v453
    %v456 = vmul.f32 %v438, %v392
    %v457 = vadd.f32 %v455, %v456
    %459 = vrot.lane.b32.xlu0 %v457, 96
    %v460 = vpop.permute.xlu0 %459
    %462 = vst.msk [vmem:[#allocation3 + $0x2] sm:$0x1] %vm331, %v460
    %v463 = vld [vmem:[#allocation2 + $0x3] sm:$0x1]
    %v464 = vpack.c.bf16 %v457, %v457
    %466 = vrot.lane.b32.xlu0 %v464, 96
    %v467 = vpop.permute.xlu0 %466
    %v469 = vsel %vm271, %v467, 0
    %471 = vmatpush.bf16.msra.mxu0 0
    %472 = vmatpush.bf16.msra.mxu0 0
    %473 = vmatpush.bf16.msra.mxu0 0
    %474 = vmatpush.bf16.msra.mxu0 0
    %475 = vmatpush.bf16.msra.mxu0 0
    %476 = vmatpush.bf16.msra.mxu0 0
    %477 = vmatpush.bf16.msra.mxu0 %v268
    %478 = vmatpush.bf16.msra.mxu0 %v267
    %479 = vmatmul.bf16.gmra.mxu0 %v469
    %v480 = vpop.f32.mrf.mxu0
    %v481 = vadd.f32 %v257, %v480
    %v482 = vpop.f32.mrf.mxu0
    %483 = vdwg.mxu0
    %v484 = vadd.f32 %v463, %v481
    %v485 = vxor.u32 %v484, 2147483648
    %v486 = vmul.f32 %v485, 1.442695
    %v487 = vpow.pop %v486
    %v488 = vadd.f32 %v487, 1.0
    %v489 = vrcp.pop %v488
    %v490 = vmul.f32 %v488, %v489
    %v491 = vsub.f32 1.0, %v490
    %v492 = vmul.f32 %v489, %v491
    %v493 = vadd.f32 %v489, %v492
    %vm494 = vweird.f32 %v488
    %vm495 = vweird.f32 %v489
    %vm496 = vmor %vm494, %vm495
    %v497 = vsel %vm496, %v489, %v493
    %v498 = vand.u32 2147483647, %v488
    %vm499 = vcmp.eq.f32.partialorder %v498, 8.507059e+37
    %v500 = vand.u32 %v488, 2147483648
    %v501 = vor.u32 1.1754944e-38, %v500
    %v502 = vsel %vm499, %v501, %v497
    %v503 = vmul.f32 1.0, %v502
    %505 = vrot.lane.b32.xlu0 %v481, 64
    %v506 = vpop.permute.xlu0 %505
    %v508 = vmul.f32 %v503, %v506
    %510 = vrot.lane.b32.xlu0 %v508, 64
    %v511 = vpop.permute.xlu0 %510
    %v513 = vadd.f32 %v463, %v511
    %v514 = vtanh.pop %v513
    %v515 = vsub.f32 1.0, %v503
    %517 = vrot.lane.b32.xlu0 %v514, 96
    %v518 = vpop.permute.xlu0 %517
    %v520 = vmul.f32 %v515, %v518
    %v521 = vmul.f32 %v503, %v457
    %v522 = vadd.f32 %v520, %v521
    %524 = vrot.lane.b32.xlu0 %v522, 96
    %v525 = vpop.permute.xlu0 %524
    %527 = vst.msk [vmem:[#allocation3 + $0x3] sm:$0x1] %vm331, %v525
    %v528 = vld [vmem:[#allocation2 + $0x4] sm:$0x1]
    %v529 = vpack.c.bf16 %v522, %v522
    %531 = vrot.lane.b32.xlu0 %v529, 96
    %v532 = vpop.permute.xlu0 %531
    %v534 = vsel %vm271, %v532, 0
    %536 = vmatpush.bf16.msra.mxu0 0
    %537 = vmatpush.bf16.msra.mxu0 0
    %538 = vmatpush.bf16.msra.mxu0 0
    %539 = vmatpush.bf16.msra.mxu0 0
    %540 = vmatpush.bf16.msra.mxu0 0
    %541 = vmatpush.bf16.msra.mxu0 0
    %542 = vmatpush.bf16.msra.mxu0 %v268
    %543 = vmatpush.bf16.msra.mxu0 %v267
    %544 = vmatmul.bf16.gmra.mxu0 %v534
    %v545 = vpop.f32.mrf.mxu0
    %v546 = vadd.f32 %v257, %v545
    %v547 = vpop.f32.mrf.mxu0
    %548 = vdwg.mxu0
    %v549 = vadd.f32 %v528, %v546
    %v550 = vxor.u32 %v549, 2147483648
    %v551 = vmul.f32 %v550, 1.442695
    %v552 = vpow.pop %v551
    %v553 = vadd.f32 %v552, 1.0
    %v554 = vrcp.pop %v553
    %v555 = vmul.f32 %v553, %v554
    %v556 = vsub.f32 1.0, %v555
    %v557 = vmul.f32 %v554, %v556
    %v558 = vadd.f32 %v554, %v557
    %vm559 = vweird.f32 %v553
    %vm560 = vweird.f32 %v554
    %vm561 = vmor %vm559, %vm560
    %v562 = vsel %vm561, %v554, %v558
    %v563 = vand.u32 2147483647, %v553
    %vm564 = vcmp.eq.f32.partialorder %v563, 8.507059e+37
    %v565 = vand.u32 %v553, 2147483648
    %v566 = vor.u32 1.1754944e-38, %v565
    %v567 = vsel %vm564, %v566, %v562
    %v568 = vmul.f32 1.0, %v567
    %570 = vrot.lane.b32.xlu0 %v546, 64
    %v571 = vpop.permute.xlu0 %570
    %v573 = vmul.f32 %v568, %v571
    %575 = vrot.lane.b32.xlu0 %v573, 64
    %v576 = vpop.permute.xlu0 %575
    %v578 = vadd.f32 %v528, %v576
    %v579 = vtanh.pop %v578
    %v580 = vsub.f32 1.0, %v568
    %582 = vrot.lane.b32.xlu0 %v579, 96
    %v583 = vpop.permute.xlu0 %582
    %v585 = vmul.f32 %v580, %v583
    %v586 = vmul.f32 %v568, %v522
    %v587 = vadd.f32 %v585, %v586
    %589 = vrot.lane.b32.xlu0 %v587, 96
    %v590 = vpop.permute.xlu0 %589
    %592 = vst.msk [vmem:[#allocation3 + $0x4] sm:$0x1] %vm331, %v590
    %v593 = vld [vmem:[#allocation2 + $0x5] sm:$0x1]
    %v594 = vpack.c.bf16 %v587, %v587
    %596 = vrot.lane.b32.xlu0 %v594, 96
    %v597 = vpop.permute.xlu0 %596
    %v599 = vsel %vm271, %v597, 0
    %601 = vmatpush.bf16.msra.mxu0 0
    %602 = vmatpush.bf16.msra.mxu0 0
    %603 = vmatpush.bf16.msra.mxu0 0
    %604 = vmatpush.bf16.msra.mxu0 0
    %605 = vmatpush.bf16.msra.mxu0 0
    %606 = vmatpush.bf16.msra.mxu0 0
    %607 = vmatpush.bf16.msra.mxu0 %v268
    %608 = vmatpush.bf16.msra.mxu0 %v267
    %609 = vmatmul.bf16.gmra.mxu0 %v599
    %v610 = vpop.f32.mrf.mxu0
    %v611 = vadd.f32 %v257, %v610
    %v612 = vpop.f32.mrf.mxu0
    %613 = vdwg.mxu0
    %v614 = vadd.f32 %v593, %v611
    %v615 = vxor.u32 %v614, 2147483648
    %v616 = vmul.f32 %v615, 1.442695
    %v617 = vpow.pop %v616
    %v618 = vadd.f32 %v617, 1.0
    %v619 = vrcp.pop %v618
    %v620 = vmul.f32 %v618, %v619
    %v621 = vsub.f32 1.0, %v620
    %v622 = vmul.f32 %v619, %v621
    %v623 = vadd.f32 %v619, %v622
    %vm624 = vweird.f32 %v618
    %vm625 = vweird.f32 %v619
    %vm626 = vmor %vm624, %vm625
    %v627 = vsel %vm626, %v619, %v623
    %v628 = vand.u32 2147483647, %v618
    %vm629 = vcmp.eq.f32.partialorder %v628, 8.507059e+37
    %v630 = vand.u32 %v618, 2147483648
    %v631 = vor.u32 1.1754944e-38, %v630
    %v632 = vsel %vm629, %v631, %v627
    %v633 = vmul.f32 1.0, %v632
    %635 = vrot.lane.b32.xlu0 %v611, 64
    %v636 = vpop.permute.xlu0 %635
    %v638 = vmul.f32 %v633, %v636
    %640 = vrot.lane.b32.xlu0 %v638, 64
    %v641 = vpop.permute.xlu0 %640
    %v643 = vadd.f32 %v593, %v641
    %v644 = vtanh.pop %v643
    %v645 = vsub.f32 1.0, %v633
    %647 = vrot.lane.b32.xlu0 %v644, 96
    %v648 = vpop.permute.xlu0 %647
    %v650 = vmul.f32 %v645, %v648
    %v651 = vmul.f32 %v633, %v587
    %v652 = vadd.f32 %v650, %v651
    %654 = vrot.lane.b32.xlu0 %v652, 96
    %v655 = vpop.permute.xlu0 %654
    %657 = vst.msk [vmem:[#allocation3 + $0x5] sm:$0x1] %vm331, %v655
    %v658 = vld [vmem:[#allocation2 + $0x6] sm:$0x1]
    %v659 = vpack.c.bf16 %v652, %v652
    %661 = vrot.lane.b32.xlu0 %v659, 96
    %v662 = vpop.permute.xlu0 %661
    %v664 = vsel %vm271, %v662, 0
    %666 = vmatpush.bf16.msra.mxu0 0
    %667 = vmatpush.bf16.msra.mxu0 0
    %668 = vmatpush.bf16.msra.mxu0 0
    %669 = vmatpush.bf16.msra.mxu0 0
    %670 = vmatpush.bf16.msra.mxu0 0
    %671 = vmatpush.bf16.msra.mxu0 0
    %672 = vmatpush.bf16.msra.mxu0 %v268
    %673 = vmatpush.bf16.msra.mxu0 %v267
    %674 = vmatmul.bf16.gmra.mxu0 %v664
    %v675 = vpop.f32.mrf.mxu0
    %v676 = vadd.f32 %v257, %v675
    %v677 = vpop.f32.mrf.mxu0
    %678 = vdwg.mxu0
    %v679 = vadd.f32 %v658, %v676
    %v680 = vxor.u32 %v679, 2147483648
    %v681 = vmul.f32 %v680, 1.442695
    %v682 = vpow.pop %v681
    %v683 = vadd.f32 %v682, 1.0
    %v684 = vrcp.pop %v683
    %v685 = vmul.f32 %v683, %v684
    %v686 = vsub.f32 1.0, %v685
    %v687 = vmul.f32 %v684, %v686
    %v688 = vadd.f32 %v684, %v687
    %vm689 = vweird.f32 %v683
    %vm690 = vweird.f32 %v684
    %vm691 = vmor %vm689, %vm690
    %v692 = vsel %vm691, %v684, %v688
    %v693 = vand.u32 2147483647, %v683
    %vm694 = vcmp.eq.f32.partialorder %v693, 8.507059e+37
    %v695 = vand.u32 %v683, 2147483648
    %v696 = vor.u32 1.1754944e-38, %v695
    %v697 = vsel %vm694, %v696, %v692
    %v698 = vmul.f32 1.0, %v697
    %700 = vrot.lane.b32.xlu0 %v676, 64
    %v701 = vpop.permute.xlu0 %700
    %v703 = vmul.f32 %v698, %v701
    %705 = vrot.lane.b32.xlu0 %v703, 64
    %v706 = vpop.permute.xlu0 %705
    %v708 = vadd.f32 %v658, %v706
    %v709 = vtanh.pop %v708
    %v710 = vsub.f32 1.0, %v698
    %712 = vrot.lane.b32.xlu0 %v709, 96
    %v713 = vpop.permute.xlu0 %712
    %v715 = vmul.f32 %v710, %v713
    %v716 = vmul.f32 %v698, %v652
    %v717 = vadd.f32 %v715, %v716
    %719 = vrot.lane.b32.xlu0 %v717, 96
    %v720 = vpop.permute.xlu0 %719
    %722 = vst.msk [vmem:[#allocation3 + $0x6] sm:$0x1] %vm331, %v720
    %v723 = vld [vmem:[#allocation2 + $0x7] sm:$0x1]
    %v724 = vpack.c.bf16 %v717, %v717
    %726 = vrot.lane.b32.xlu0 %v724, 96
    %v727 = vpop.permute.xlu0 %726
    %v729 = vsel %vm271, %v727, 0
    %731 = vmatpush.bf16.msra.mxu0 0
    %732 = vmatpush.bf16.msra.mxu0 0
    %733 = vmatpush.bf16.msra.mxu0 0
    %734 = vmatpush.bf16.msra.mxu0 0
    %735 = vmatpush.bf16.msra.mxu0 0
    %736 = vmatpush.bf16.msra.mxu0 0
    %737 = vmatpush.bf16.msra.mxu0 %v268
    %738 = vmatpush.bf16.msra.mxu0 %v267
    %739 = vmatmul.bf16.gmra.mxu0 %v729
    %v740 = vpop.f32.mrf.mxu0
    %v741 = vadd.f32 %v257, %v740
    %v742 = vpop.f32.mrf.mxu0
    %743 = vdwg.mxu0
    %v744 = vadd.f32 %v723, %v741
    %v745 = vxor.u32 %v744, 2147483648
    %v746 = vmul.f32 %v745, 1.442695
    %v747 = vpow.pop %v746
    %v748 = vadd.f32 %v747, 1.0
    %v749 = vrcp.pop %v748
    %v750 = vmul.f32 %v748, %v749
    %v751 = vsub.f32 1.0, %v750
    %v752 = vmul.f32 %v749, %v751
    %v753 = vadd.f32 %v749, %v752
    %vm754 = vweird.f32 %v748
    %vm755 = vweird.f32 %v749
    %vm756 = vmor %vm754, %vm755
    %v757 = vsel %vm756, %v749, %v753
    %v758 = vand.u32 2147483647, %v748
    %vm759 = vcmp.eq.f32.partialorder %v758, 8.507059e+37
    %v760 = vand.u32 %v748, 2147483648
    %v761 = vor.u32 1.1754944e-38, %v760
    %v762 = vsel %vm759, %v761, %v757
    %v763 = vmul.f32 1.0, %v762
    %765 = vrot.lane.b32.xlu0 %v741, 64
    %v766 = vpop.permute.xlu0 %765
    %v768 = vmul.f32 %v763, %v766
    %770 = vrot.lane.b32.xlu0 %v768, 64
    %v771 = vpop.permute.xlu0 %770
    %v773 = vadd.f32 %v723, %v771
    %v774 = vtanh.pop %v773
    %v775 = vsub.f32 1.0, %v763
    %777 = vrot.lane.b32.xlu0 %v774, 96
    %v778 = vpop.permute.xlu0 %777
    %v780 = vmul.f32 %v775, %v778
    %v781 = vmul.f32 %v763, %v717
    %v782 = vadd.f32 %v780, %v781
    %784 = vrot.lane.b32.xlu0 %v782, 96
    %v785 = vpop.permute.xlu0 %784
    %787 = vst.msk [vmem:[#allocation3 + $0x7] sm:$0x1] %vm331, %v785
    %v788 = vld [vmem:[#allocation3] sm:$0xff]
    %v789 = vpack.c.bf16 %v788, %v788
    %v790 = vld [vmem:[#allocation9] sm:$0xf]
    %v791 = vld [vmem:[#allocation9 + $0x4] sm:$0xf]
    %v792 = vld [vmem:[#allocation9 + $0x8] sm:$0xf]
    %v793 = vld [vmem:[#allocation9 + $0xc] sm:$0xf]
    %v794 = vld [vmem:[#allocation10] sm:$0x1]
    %v796 = vperm.slane %v794, 0
    %v802 = vunpack.c.l.b16 %v790
    %v803 = vunpack.c.l.b16 %v791
    %v804 = vunpack.c.l.b16 %v792
    %v805 = vunpack.c.l.b16 %v793
    %v806 = vpack.c.b16 %v803, %v802
    %v807 = vpack.c.b16 %v805, %v804
    %v811 = vsel %vm271, %v789, 0
    %813 = vmatpush.bf16.msra.mxu0 0
    %814 = vmatpush.bf16.msra.mxu0 0
    %815 = vmatpush.bf16.msra.mxu0 0
    %816 = vmatpush.bf16.msra.mxu0 0
    %817 = vmatpush.bf16.msra.mxu0 0
    %818 = vmatpush.bf16.msra.mxu0 0
    %819 = vmatpush.bf16.msra.mxu0 %v807
    %820 = vmatpush.bf16.msra.mxu0 %v806
    %821 = vmatmul.bf16.gmra.mxu0 %v811
    %v822 = vpop.f32.mrf.mxu0
    %v823 = vadd.f32 %v796, %v822
    %v824 = vpop.f32.mrf.mxu0
    %825 = vdwg.mxu0
    %v826 = vld [vmem:[#allocation12] sm:$0xf]
    %v827 = vld [vmem:[#allocation12 + $0x4] sm:$0xf]
    %v828 = vld [vmem:[#allocation12 + $0x8] sm:$0xf]
    %v829 = vld [vmem:[#allocation12 + $0xc] sm:$0xf]
    %v830 = vld [vmem:[#allocation13] sm:$0x1]
    %v831 = vld [vmem:[#allocation15] sm:$0x1]
    %v832 = vld [vmem:[%s10] sm:$0xf]
    %v833 = vld [vmem:[%s10 + $0x4] sm:$0xf]
    %v834 = vld [vmem:[%s10 + $0x8] sm:$0x3]
    %v835 = vld [vmem:[#allocation16] sm:$0xf]
    %v836 = vld [vmem:[#allocation16 + $0x4] sm:$0xf]
    %v837 = vld [vmem:[#allocation16 + $0x8] sm:$0xf]
    %v838 = vld [vmem:[#allocation16 + $0xc] sm:$0xf]
    %v839 = vld [vmem:[#allocation18] sm:$0xf]
    %v840 = vld [vmem:[#allocation18 + $0x4] sm:$0xf]
    %v841 = vld [vmem:[#allocation18 + $0x8] sm:$0xf]
    %v842 = vld [vmem:[#allocation18 + $0xc] sm:$0xf]
    %v843 = vld [vmem:[#allocation19] sm:$0x1]
    %v844 = vld [vmem:[#allocation21] sm:$0x1]
    %v845 = vld [vmem:[%s15] sm:$0xf]
    %v846 = vld [vmem:[%s15 + $0x4] sm:$0xf]
    %v847 = vld [vmem:[%s15 + $0x8] sm:$0xf]
    %v848 = vld [vmem:[%s15 + $0xc] sm:$0xf]
    %v849 = vld [vmem:[%s16] sm:$0x1]
    %v850 = vlaneseq
    %v851 = vand.u32 %v850, 127
    %v852 = vpack.c.bf16 %v782, %v782
    %854 = vrot.lane.b32.xlu0 %v852, 96
    %v855 = vpop.permute.xlu0 %854
    %v860 = vunpack.c.l.b16 %v826
    %v861 = vunpack.c.l.b16 %v827
    %v862 = vunpack.c.l.b16 %v828
    %v863 = vunpack.c.l.b16 %v829
    %v864 = vpack.c.b16 %v861, %v860
    %v865 = vpack.c.b16 %v863, %v862
    %v869 = vsel %vm271, %v855, 0
    %871 = vmatpush.bf16.msra.mxu0 0
    %872 = vmatpush.bf16.msra.mxu0 0
    %873 = vmatpush.bf16.msra.mxu0 0
    %874 = vmatpush.bf16.msra.mxu0 0
    %875 = vmatpush.bf16.msra.mxu0 0
    %876 = vmatpush.bf16.msra.mxu0 0
    %877 = vmatpush.bf16.msra.mxu0 %v865
    %878 = vmatpush.bf16.msra.mxu0 %v864
    %879 = vmatmul.bf16.gmra.mxu0 %v869
    %v880 = vpop.f32.mrf.mxu0
    %v881 = vadd.f32 %v830, %v880
    %v882 = vpop.f32.mrf.mxu0
    %883 = vdwg.mxu0
    %v884 = vperm.slane %v881, 0
    %v885 = vadd.f32 %v823, %v884
    %v886 = vtanh.pop %v885
    %v887 = vpack.c.bf16 %v886, %v886
    %v889 = vsel %vm271, %v831, 0
    %v892 = vsel %vm271, %v887, 0
    %894 = vmatpush.bf16.xpose.msra.mxu0 0
    %895 = vmatpush.bf16.xpose.msra.mxu0 0
    %896 = vmatpush.bf16.xpose.msra.mxu0 0
    %897 = vmatpush.bf16.xpose.msra.mxu0 0
    %898 = vmatpush.bf16.xpose.msra.mxu0 0
    %899 = vmatpush.bf16.xpose.msra.mxu0 0
    %900 = vmatpush.bf16.xpose.msra.mxu0 0
    %901 = vmatpush.bf16.xpose.msra.mxu0 %v892
    %902 = vmatmul.bf16.gmra.mxu0 %v889
    %v903 = vpop.f32.mrf.mxu0
    %v904 = vadd.f32 0.0, %v903
    %v905 = vpop.f32.mrf.mxu0
    %906 = vdwg.mxu0
    %vm907 = vcmask 57344
    %v908 = vsel %vm907, %v904, -inf
    %909 = vmax.xlane.f32.xlu0 %v908
    %v910 = vpop.xlane.xlu0 %909
    %v911 = vsub.f32 %v904, %v910
    %v912 = vmul.f32 %v911, 1.442695
    %v913 = vpow.pop %v912
    %v914 = vsel %vm907, %v913, 0.0
    %915 = vadd.xlane.f32.xlu0 %v914
    %v916 = vpop.xlane.xlu0 %915
    %v917 = vrcp.pop %v916
    %v918 = vmul.f32 %v913, %v917
    %919 = vst.msk [vmem:[#allocation23] sm:$0x1] %vm907, %v918
    %v920 = vpack.c.bf16 %v918, %v918
    %vm921 = vcmask 64512
    %v923 = vsel %vm921, %v920, 0
    %vm925 = vcmask 1043456
    %v926 = vsel %vm925, %v789, 0
    %928 = vmatpush.bf16.msra.mxu0 0
    %929 = vmatpush.bf16.msra.mxu0 0
    %930 = vmatpush.bf16.msra.mxu0 0
    %931 = vmatpush.bf16.msra.mxu0 0
    %932 = vmatpush.bf16.msra.mxu0 0
    %933 = vmatpush.bf16.msra.mxu0 0
    %934 = vmatpush.bf16.msra.mxu0 0
    %935 = vmatpush.bf16.msra.mxu0 %v926
    %936 = vmatmul.bf16.gmra.mxu0 %v923
    %v937 = vpop.f32.mrf.mxu0
    %v938 = vadd.f32 0.0, %v937
    %v939 = vpop.f32.mrf.mxu0
    %940 = vdwg.mxu0
    %v941 = vpack.c.bf16 %v938, %v938
    %v946 = vunpack.c.l.b16 %v835
    %v947 = vunpack.c.l.b16 %v836
    %v948 = vunpack.c.l.b16 %v837
    %v949 = vunpack.c.l.b16 %v838
    %v950 = vpack.c.b16 %v947, %v946
    %v951 = vpack.c.b16 %v949, %v948
    %v955 = vsel %vm271, %v941, 0
    %957 = vmatpush.bf16.msra.mxu0 0
    %958 = vmatpush.bf16.msra.mxu0 0
    %959 = vmatpush.bf16.msra.mxu0 0
    %960 = vmatpush.bf16.msra.mxu0 0
    %961 = vmatpush.bf16.msra.mxu0 0
    %962 = vmatpush.bf16.msra.mxu0 0
    %963 = vmatpush.bf16.msra.mxu0 %v951
    %964 = vmatpush.bf16.msra.mxu0 %v950
    %965 = vmatmul.bf16.gmra.mxu0 %v955
    %v966 = vpop.f32.mrf.mxu0
    %v967 = vadd.f32 0.0, %v966
    %v968 = vpop.f32.mrf.mxu0
    %969 = vdwg.mxu0
    %v973 = vunpack.c.l.b16 %v832
    %v974 = vunpack.c.l.b16 %v833
    %v975 = vunpack.c.l.b16 %v834
    %v976 = vpack.c.b16 %v974, %v973
    %v977 = vpack.c.b16 %v975, %v975
    %vm979 = vcmask 162816
    %v980 = vsel %vm979, 0, 0
    %vm982 = vcmask 1041408
    %v984 = vsel %vm982, %v977, 0
    %986 = vmatpush.bf16.msra.mxu0 0
    %987 = vmatpush.bf16.msra.mxu0 0
    %988 = vmatpush.bf16.msra.mxu0 0
    %989 = vmatpush.bf16.msra.mxu0 0
    %990 = vmatpush.bf16.msra.mxu0 0
    %991 = vmatpush.bf16.msra.mxu0 0
    %992 = vmatpush.bf16.msra.mxu0 %v984
    %993 = vmatpush.bf16.msra.mxu0 %v976
    %994 = vmatmul.bf16.gmra.mxu0 %v980
    %v995 = vpop.f32.mrf.mxu0
    %v996 = vadd.f32 %v967, %v995
    %v997 = vpop.f32.mrf.mxu0
    %998 = vdwg.mxu0
    %v999 = vadd.f32 %v996, %v843
    %v1004 = vunpack.c.l.b16 %v839
    %v1005 = vunpack.c.l.b16 %v840
    %v1006 = vunpack.c.l.b16 %v841
    %v1007 = vunpack.c.l.b16 %v842
    %v1008 = vpack.c.b16 %v1005, %v1004
    %v1009 = vpack.c.b16 %v1007, %v1006
    %1012 = vmatpush.bf16.msra.mxu0 0
    %1013 = vmatpush.bf16.msra.mxu0 0
    %1014 = vmatpush.bf16.msra.mxu0 0
    %1015 = vmatpush.bf16.msra.mxu0 0
    %1016 = vmatpush.bf16.msra.mxu0 0
    %1017 = vmatpush.bf16.msra.mxu0 0
    %1018 = vmatpush.bf16.msra.mxu0 %v1009
    %1019 = vmatpush.bf16.msra.mxu0 %v1008
    %1020 = vmatmul.bf16.gmra.mxu0 %v869
    %v1021 = vpop.f32.mrf.mxu0
    %v1022 = vadd.f32 %v844, %v1021
    %v1023 = vpop.f32.mrf.mxu0
    %1024 = vdwg.mxu0
    %v1025 = vadd.f32 %v999, %v1022
    %v1026 = vxor.u32 %v1025, 2147483648
    %v1027 = vmul.f32 %v1026, 1.442695
    %v1028 = vpow.pop %v1027
    %v1029 = vadd.f32 %v1028, 1.0
    %v1030 = vrcp.pop %v1029
    %v1031 = vmul.f32 %v1029, %v1030
    %v1032 = vsub.f32 1.0, %v1031
    %v1033 = vmul.f32 %v1030, %v1032
    %v1034 = vadd.f32 %v1030, %v1033
    %vm1035 = vweird.f32 %v1029
    %vm1036 = vweird.f32 %v1030
    %vm1037 = vmor %vm1035, %vm1036
    %v1038 = vsel %vm1037, %v1030, %v1034
    %v1039 = vand.u32 2147483647, %v1029
    %vm1040 = vcmp.eq.f32.partialorder %v1039, 8.507059e+37
    %v1041 = vand.u32 %v1029, 2147483648
    %v1042 = vor.u32 1.1754944e-38, %v1041
    %v1043 = vsel %vm1040, %v1042, %v1038
    %v1044 = vmul.f32 1.0, %v1043
    %1046 = vrot.lane.b32.xlu0 %v1022, 64
    %v1047 = vpop.permute.xlu0 %1046
    %v1049 = vmul.f32 %v1044, %v1047
    %1051 = vrot.lane.b32.xlu0 %v1049, 64
    %v1052 = vpop.permute.xlu0 %1051
    %v1054 = vadd.f32 %v999, %v1052
    %v1055 = vtanh.pop %v1054
    %v1056 = vsub.f32 1.0, %v1044
    %1058 = vrot.lane.b32.xlu0 %v1055, 96
    %v1059 = vpop.permute.xlu0 %1058
    %v1061 = vmul.f32 %v1056, %v1059
    %v1062 = vmul.f32 %v1044, %v782
    %v1063 = vadd.f32 %v1061, %v1062
    %v1064 = vpack.c.bf16 %v1063, %v1063
    %1066 = vrot.lane.b32.xlu0 %v1064, 96
    %v1067 = vpop.permute.xlu0 %1066
    %v1072 = vunpack.c.l.b16 %v845
    %v1073 = vunpack.c.l.b16 %v846
    %v1074 = vunpack.c.l.b16 %v847
    %v1075 = vunpack.c.l.b16 %v848
    %v1076 = vpack.c.b16 %v1073, %v1072
    %v1077 = vpack.c.b16 %v1075, %v1074
    %v1081 = vsel %vm271, %v1067, 0
    %1083 = vmatpush.bf16.msra.mxu0 0
    %1084 = vmatpush.bf16.msra.mxu0 0
    %1085 = vmatpush.bf16.msra.mxu0 0
    %1086 = vmatpush.bf16.msra.mxu0 0
    %1087 = vmatpush.bf16.msra.mxu0 0
    %1088 = vmatpush.bf16.msra.mxu0 0
    %1089 = vmatpush.bf16.msra.mxu0 %v1077
    %1090 = vmatpush.bf16.msra.mxu0 %v1076
    %1091 = vmatmul.bf16.gmra.mxu0 %v1081
    %v1092 = vpop.f32.mrf.mxu0
    %v1093 = vadd.f32 %v849, %v1092
    %v1094 = vpop.f32.mrf.mxu0
    %1095 = vdwg.mxu0
    %vm1096 = vcmask 155648
    %v1097 = vsel %vm1096, %v1093, -inf
    %1098 = vmax.xlane.f32.xlu0 %v1097
    %v1099 = vpop.xlane.xlu0 %1098
    %v1100 = vsub.f32 %v1093, %v1099
    %v1101 = vmul.f32 %v1100, 1.442695
    %v1102 = vpow.pop %v1101
    %v1103 = vsel %vm1096, %v1102, 0.0
    %1104 = vadd.xlane.f32.xlu0 %v1103
    %v1105 = vpop.xlane.xlu0 %1104
    %v1106 = vlog2.pop %v1105
    %v1107 = vmul.f32 %v1106, 0.6931472
    %v1108 = vsub.f32 %v1100, %v1107
    %1109 = vst.msk [vmem:[#allocation22] sm:$0x1] %vm1096, %v1108
    %v1110 = vsel %vm1096, %v1108, -inf
    %1111 = vmax.xlane.f32.xlu0 %v1110
    %v1112 = vpop.xlane.xlu0 %1111
    %vm1113 = vcmp.eq.f32.partialorder %v1108, %v1112
    %v1114 = vsel %vm1113, %v851, 20
    %v1115 = vsel %vm1096, %v1114, 2147483647
    %v1116 = vand.u32 %v1115, 65535
    %v1117 = vshra.s32 %v1115, 16
    %v1118 = vcvt.s32.f32 %v1116
    %v1119 = vcvt.s32.f32 %v1117
    %1120 = vmin.xlane.f32.xlu0 %v1119
    %v1121 = vpop.xlane.xlu0 %1120
    %vm1122 = vcmp.eq.f32.partialorder %v1119, %v1121
    %v1123 = vsel %vm1122, %v1118, inf
    %1124 = vmin.xlane.f32.xlu0 %v1123
    %v1125 = vpop.xlane.xlu0 %1124
    %v1126 = vcvt.f32.s32 %v1125
    %v1127 = vcvt.f32.s32 %v1121
    %v1128 = vshll.u32 %v1127, 16
    %v1129 = vadd.s32 %v1128, %v1126
    %vm1130 = vcmp.eq.s32.totalorder %v851, %v1129
    %v1131 = vsel %vm1130, 1.0, 0.0
    %1132 = vmatpush.bf16.msra.mxu0 0
    %1133 = vmatpush.bf16.msra.mxu0 0
    %1134 = vmatpush.bf16.msra.mxu0 0
    %1135 = vmatpush.bf16.msra.mxu0 0
    %1136 = vmatpush.bf16.msra.mxu0 0
    %1137 = vmatpush.bf16.msra.mxu0 0
    %1138 = vmatpush.bf16.msra.mxu0 %v865
    %1139 = vmatpush.bf16.msra.mxu0 %v864
    %1140 = vmatmul.bf16.gmra.mxu0 %v1081
    %v1141 = vpop.f32.mrf.mxu0
    %v1142 = vadd.f32 %v830, %v1141
    %v1143 = vpop.f32.mrf.mxu0
    %1144 = vdwg.mxu0
    %v1145 = vperm.slane %v1142, 0
    %v1146 = vadd.f32 %v823, %v1145
    %v1147 = vtanh.pop %v1146
    %v1148 = vpack.c.bf16 %v1147, %v1147
    %v1150 = vsel %vm271, %v1148, 0
    %1152 = vmatpush.bf16.xpose.msra.mxu0 0
    %1153 = vmatpush.bf16.xpose.msra.mxu0 0
    %1154 = vmatpush.bf16.xpose.msra.mxu0 0
    %1155 = vmatpush.bf16.xpose.msra.mxu0 0
    %1156 = vmatpush.bf16.xpose.msra.mxu0 0
    %1157 = vmatpush.bf16.xpose.msra.mxu0 0
    %1158 = vmatpush.bf16.xpose.msra.mxu0 0
    %1159 = vmatpush.bf16.xpose.msra.mxu0 %v1150
    %1160 = vmatmul.bf16.gmra.mxu0 %v889
    %v1161 = vpop.f32.mrf.mxu0
    %v1162 = vadd.f32 0.0, %v1161
    %v1163 = vpop.f32.mrf.mxu0
    %1164 = vdwg.mxu0
    %v1165 = vsel %vm907, %v1162, -inf
    %1166 = vmax.xlane.f32.xlu0 %v1165
    %v1167 = vpop.xlane.xlu0 %1166
    %v1168 = vsub.f32 %v1162, %v1167
    %v1169 = vmul.f32 %v1168, 1.442695
    %v1170 = vpow.pop %v1169
    %v1171 = vsel %vm907, %v1170, 0.0
    %1172 = vadd.xlane.f32.xlu0 %v1171
    %v1173 = vpop.xlane.xlu0 %1172
    %v1174 = vrcp.pop %v1173
    %v1175 = vmul.f32 %v1170, %v1174
    %1176 = vst.msk [vmem:[#allocation23 + $0x1] sm:$0x1] %vm907, %v1175
    %v1177 = vpack.c.bf16 %v1175, %v1175
    %v1179 = vsel %vm921, %v1177, 0
    %1181 = vmatpush.bf16.msra.mxu0 0
    %1182 = vmatpush.bf16.msra.mxu0 0
    %1183 = vmatpush.bf16.msra.mxu0 0
    %1184 = vmatpush.bf16.msra.mxu0 0
    %1185 = vmatpush.bf16.msra.mxu0 0
    %1186 = vmatpush.bf16.msra.mxu0 0
    %1187 = vmatpush.bf16.msra.mxu0 0
    %1188 = vmatpush.bf16.msra.mxu0 %v926
    %1189 = vmatmul.bf16.gmra.mxu0 %v1179
    %v1190 = vpop.f32.mrf.mxu0
    %v1191 = vadd.f32 0.0, %v1190
    %v1192 = vpop.f32.mrf.mxu0
    %1193 = vdwg.mxu0
    %v1194 = vpack.c.bf16 %v1131, %v1131
    %v1195 = vpack.c.bf16 %v1191, %v1191
    %v1197 = vsel %vm271, %v1195, 0
    %1199 = vmatpush.bf16.msra.mxu0 0
    %1200 = vmatpush.bf16.msra.mxu0 0
    %1201 = vmatpush.bf16.msra.mxu0 0
    %1202 = vmatpush.bf16.msra.mxu0 0
    %1203 = vmatpush.bf16.msra.mxu0 0
    %1204 = vmatpush.bf16.msra.mxu0 0
    %1205 = vmatpush.bf16.msra.mxu0 %v951
    %1206 = vmatpush.bf16.msra.mxu0 %v950
    %1207 = vmatmul.bf16.gmra.mxu0 %v1197
    %v1208 = vpop.f32.mrf.mxu0
    %v1209 = vadd.f32 0.0, %v1208
    %v1210 = vpop.f32.mrf.mxu0
    %1211 = vdwg.mxu0
    %v1213 = vsel %vm979, %v1194, 0
    %1215 = vmatpush.bf16.msra.mxu0 0
    %1216 = vmatpush.bf16.msra.mxu0 0
    %1217 = vmatpush.bf16.msra.mxu0 0
    %1218 = vmatpush.bf16.msra.mxu0 0
    %1219 = vmatpush.bf16.msra.mxu0 0
    %1220 = vmatpush.bf16.msra.mxu0 0
    %1221 = vmatpush.bf16.msra.mxu0 %v984
    %1222 = vmatpush.bf16.msra.mxu0 %v976
    %1223 = vmatmul.bf16.gmra.mxu0 %v1213
    %v1224 = vpop.f32.mrf.mxu0
    %v1225 = vadd.f32 %v1209, %v1224
    %v1226 = vpop.f32.mrf.mxu0
    %1227 = vdwg.mxu0
    %v1228 = vadd.f32 %v1225, %v843
    %1229 = vmatpush.bf16.msra.mxu0 0
    %1230 = vmatpush.bf16.msra.mxu0 0
    %1231 = vmatpush.bf16.msra.mxu0 0
    %1232 = vmatpush.bf16.msra.mxu0 0
    %1233 = vmatpush.bf16.msra.mxu0 0
    %1234 = vmatpush.bf16.msra.mxu0 0
    %1235 = vmatpush.bf16.msra.mxu0 %v1009
    %1236 = vmatpush.bf16.msra.mxu0 %v1008
    %1237 = vmatmul.bf16.gmra.mxu0 %v1081
    %v1238 = vpop.f32.mrf.mxu0
    %v1239 = vadd.f32 %v844, %v1238
    %v1240 = vpop.f32.mrf.mxu0
    %1241 = vdwg.mxu0
    %v1242 = vadd.f32 %v1228, %v1239
    %v1243 = vxor.u32 %v1242, 2147483648
    %v1244 = vmul.f32 %v1243, 1.442695
    %v1245 = vpow.pop %v1244
    %v1246 = vadd.f32 %v1245, 1.0
    %v1247 = vrcp.pop %v1246
    %v1248 = vmul.f32 %v1246, %v1247
    %v1249 = vsub.f32 1.0, %v1248
    %v1250 = vmul.f32 %v1247, %v1249
    %v1251 = vadd.f32 %v1247, %v1250
    %vm1252 = vweird.f32 %v1246
    %vm1253 = vweird.f32 %v1247
    %vm1254 = vmor %vm1252, %vm1253
    %v1255 = vsel %vm1254, %v1247, %v1251
    %v1256 = vand.u32 2147483647, %v1246
    %vm1257 = vcmp.eq.f32.partialorder %v1256, 8.507059e+37
    %v1258 = vand.u32 %v1246, 2147483648
    %v1259 = vor.u32 1.1754944e-38, %v1258
    %v1260 = vsel %vm1257, %v1259, %v1255
    %v1261 = vmul.f32 1.0, %v1260
    %1263 = vrot.lane.b32.xlu0 %v1239, 64
    %v1264 = vpop.permute.xlu0 %1263
    %v1266 = vmul.f32 %v1261, %v1264
    %1268 = vrot.lane.b32.xlu0 %v1266, 64
    %v1269 = vpop.permute.xlu0 %1268
    %v1271 = vadd.f32 %v1228, %v1269
    %v1272 = vtanh.pop %v1271
    %v1273 = vsub.f32 1.0, %v1261
    %1275 = vrot.lane.b32.xlu0 %v1272, 96
    %v1276 = vpop.permute.xlu0 %1275
    %v1278 = vmul.f32 %v1273, %v1276
    %v1279 = vmul.f32 %v1261, %v1063
    %v1280 = vadd.f32 %v1278, %v1279
    %v1281 = vpack.c.bf16 %v1280, %v1280
    %1283 = vrot.lane.b32.xlu0 %v1281, 96
    %v1284 = vpop.permute.xlu0 %1283
    %v1286 = vsel %vm271, %v1284, 0
    %1288 = vmatpush.bf16.msra.mxu0 0
    %1289 = vmatpush.bf16.msra.mxu0 0
    %1290 = vmatpush.bf16.msra.mxu0 0
    %1291 = vmatpush.bf16.msra.mxu0 0
    %1292 = vmatpush.bf16.msra.mxu0 0
    %1293 = vmatpush.bf16.msra.mxu0 0
    %1294 = vmatpush.bf16.msra.mxu0 %v1077
    %1295 = vmatpush.bf16.msra.mxu0 %v1076
    %1296 = vmatmul.bf16.gmra.mxu0 %v1286
    %v1297 = vpop.f32.mrf.mxu0
    %v1298 = vadd.f32 %v849, %v1297
    %v1299 = vpop.f32.mrf.mxu0
    %1300 = vdwg.mxu0
    %v1301 = vsel %vm1096, %v1298, -inf
    %1302 = vmax.xlane.f32.xlu0 %v1301
    %v1303 = vpop.xlane.xlu0 %1302
    %v1304 = vsub.f32 %v1298, %v1303
    %v1305 = vmul.f32 %v1304, 1.442695
    %v1306 = vpow.pop %v1305
    %v1307 = vsel %vm1096, %v1306, 0.0
    %1308 = vadd.xlane.f32.xlu0 %v1307
    %v1309 = vpop.xlane.xlu0 %1308
    %v1310 = vlog2.pop %v1309
    %v1311 = vmul.f32 %v1310, 0.6931472
    %v1312 = vsub.f32 %v1304, %v1311
    %1313 = vst.msk [vmem:[#allocation22 + $0x1] sm:$0x1] %vm1096, %v1312
    %v1314 = vsel %vm1096, %v1312, -inf
    %1315 = vmax.xlane.f32.xlu0 %v1314
    %v1316 = vpop.xlane.xlu0 %1315
    %vm1317 = vcmp.eq.f32.partialorder %v1312, %v1316
    %v1318 = vsel %vm1317, %v851, 20
    %v1319 = vsel %vm1096, %v1318, 2147483647
    %v1320 = vand.u32 %v1319, 65535
    %v1321 = vshra.s32 %v1319, 16
    %v1322 = vcvt.s32.f32 %v1320
    %v1323 = vcvt.s32.f32 %v1321
    %1324 = vmin.xlane.f32.xlu0 %v1323
    %v1325 = vpop.xlane.xlu0 %1324
    %vm1326 = vcmp.eq.f32.partialorder %v1323, %v1325
    %v1327 = vsel %vm1326, %v1322, inf
    %1328 = vmin.xlane.f32.xlu0 %v1327
    %v1329 = vpop.xlane.xlu0 %1328
    %v1330 = vcvt.f32.s32 %v1329
    %v1331 = vcvt.f32.s32 %v1325
    %v1332 = vshll.u32 %v1331, 16
    %v1333 = vadd.s32 %v1332, %v1330
    %vm1334 = vcmp.eq.s32.totalorder %v851, %v1333
    %v1335 = vsel %vm1334, 1.0, 0.0
    %1336 = vmatpush.bf16.msra.mxu0 0
    %1337 = vmatpush.bf16.msra.mxu0 0
    %1338 = vmatpush.bf16.msra.mxu0 0
    %1339 = vmatpush.bf16.msra.mxu0 0
    %1340 = vmatpush.bf16.msra.mxu0 0
    %1341 = vmatpush.bf16.msra.mxu0 0
    %1342 = vmatpush.bf16.msra.mxu0 %v865
    %1343 = vmatpush.bf16.msra.mxu0 %v864
    %1344 = vmatmul.bf16.gmra.mxu0 %v1286
    %v1345 = vpop.f32.mrf.mxu0
    %v1346 = vadd.f32 %v830, %v1345
    %v1347 = vpop.f32.mrf.mxu0
    %1348 = vdwg.mxu0
    %v1349 = vperm.slane %v1346, 0
    %v1350 = vadd.f32 %v823, %v1349
    %v1351 = vtanh.pop %v1350
    %v1352 = vpack.c.bf16 %v1351, %v1351
    %v1354 = vsel %vm271, %v1352, 0
    %1356 = vmatpush.bf16.xpose.msra.mxu0 0
    %1357 = vmatpush.bf16.xpose.msra.mxu0 0
    %1358 = vmatpush.bf16.xpose.msra.mxu0 0
    %1359 = vmatpush.bf16.xpose.msra.mxu0 0
    %1360 = vmatpush.bf16.xpose.msra.mxu0 0
    %1361 = vmatpush.bf16.xpose.msra.mxu0 0
    %1362 = vmatpush.bf16.xpose.msra.mxu0 0
    %1363 = vmatpush.bf16.xpose.msra.mxu0 %v1354
    %1364 = vmatmul.bf16.gmra.mxu0 %v889
    %v1365 = vpop.f32.mrf.mxu0
    %v1366 = vadd.f32 0.0, %v1365
    %v1367 = vpop.f32.mrf.mxu0
    %1368 = vdwg.mxu0
    %v1369 = vsel %vm907, %v1366, -inf
    %1370 = vmax.xlane.f32.xlu0 %v1369
    %v1371 = vpop.xlane.xlu0 %1370
    %v1372 = vsub.f32 %v1366, %v1371
    %v1373 = vmul.f32 %v1372, 1.442695
    %v1374 = vpow.pop %v1373
    %v1375 = vsel %vm907, %v1374, 0.0
    %1376 = vadd.xlane.f32.xlu0 %v1375
    %v1377 = vpop.xlane.xlu0 %1376
    %v1378 = vrcp.pop %v1377
    %v1379 = vmul.f32 %v1374, %v1378
    %1380 = vst.msk [vmem:[#allocation23 + $0x2] sm:$0x1] %vm907, %v1379
    %v1381 = vpack.c.bf16 %v1379, %v1379
    %v1383 = vsel %vm921, %v1381, 0
    %1385 = vmatpush.bf16.msra.mxu0 0
    %1386 = vmatpush.bf16.msra.mxu0 0
    %1387 = vmatpush.bf16.msra.mxu0 0
    %1388 = vmatpush.bf16.msra.mxu0 0
    %1389 = vmatpush.bf16.msra.mxu0 0
    %1390 = vmatpush.bf16.msra.mxu0 0
    %1391 = vmatpush.bf16.msra.mxu0 0
    %1392 = vmatpush.bf16.msra.mxu0 %v926
    %1393 = vmatmul.bf16.gmra.mxu0 %v1383
    %v1394 = vpop.f32.mrf.mxu0
    %v1395 = vadd.f32 0.0, %v1394
    %v1396 = vpop.f32.mrf.mxu0
    %1397 = vdwg.mxu0
    %v1398 = vpack.c.bf16 %v1335, %v1335
    %v1399 = vpack.c.bf16 %v1395, %v1395
    %v1401 = vsel %vm271, %v1399, 0
    %1403 = vmatpush.bf16.msra.mxu0 0
    %1404 = vmatpush.bf16.msra.mxu0 0
    %1405 = vmatpush.bf16.msra.mxu0 0
    %1406 = vmatpush.bf16.msra.mxu0 0
    %1407 = vmatpush.bf16.msra.mxu0 0
    %1408 = vmatpush.bf16.msra.mxu0 0
    %1409 = vmatpush.bf16.msra.mxu0 %v951
    %1410 = vmatpush.bf16.msra.mxu0 %v950
    %1411 = vmatmul.bf16.gmra.mxu0 %v1401
    %v1412 = vpop.f32.mrf.mxu0
    %v1413 = vadd.f32 0.0, %v1412
    %v1414 = vpop.f32.mrf.mxu0
    %1415 = vdwg.mxu0
    %v1417 = vsel %vm979, %v1398, 0
    %1419 = vmatpush.bf16.msra.mxu0 0
    %1420 = vmatpush.bf16.msra.mxu0 0
    %1421 = vmatpush.bf16.msra.mxu0 0
    %1422 = vmatpush.bf16.msra.mxu0 0
    %1423 = vmatpush.bf16.msra.mxu0 0
    %1424 = vmatpush.bf16.msra.mxu0 0
    %1425 = vmatpush.bf16.msra.mxu0 %v984
    %1426 = vmatpush.bf16.msra.mxu0 %v976
    %1427 = vmatmul.bf16.gmra.mxu0 %v1417
    %v1428 = vpop.f32.mrf.mxu0
    %v1429 = vadd.f32 %v1413, %v1428
    %v1430 = vpop.f32.mrf.mxu0
    %1431 = vdwg.mxu0
    %v1432 = vadd.f32 %v1429, %v843
    %1433 = vmatpush.bf16.msra.mxu0 0
    %1434 = vmatpush.bf16.msra.mxu0 0
    %1435 = vmatpush.bf16.msra.mxu0 0
    %1436 = vmatpush.bf16.msra.mxu0 0
    %1437 = vmatpush.bf16.msra.mxu0 0
    %1438 = vmatpush.bf16.msra.mxu0 0
    %1439 = vmatpush.bf16.msra.mxu0 %v1009
    %1440 = vmatpush.bf16.msra.mxu0 %v1008
    %1441 = vmatmul.bf16.gmra.mxu0 %v1286
    %v1442 = vpop.f32.mrf.mxu0
    %v1443 = vadd.f32 %v844, %v1442
    %v1444 = vpop.f32.mrf.mxu0
    %1445 = vdwg.mxu0
    %v1446 = vadd.f32 %v1432, %v1443
    %v1447 = vxor.u32 %v1446, 2147483648
    %v1448 = vmul.f32 %v1447, 1.442695
    %v1449 = vpow.pop %v1448
    %v1450 = vadd.f32 %v1449, 1.0
    %v1451 = vrcp.pop %v1450
    %v1452 = vmul.f32 %v1450, %v1451
    %v1453 = vsub.f32 1.0, %v1452
    %v1454 = vmul.f32 %v1451, %v1453
    %v1455 = vadd.f32 %v1451, %v1454
    %vm1456 = vweird.f32 %v1450
    %vm1457 = vweird.f32 %v1451
    %vm1458 = vmor %vm1456, %vm1457
    %v1459 = vsel %vm1458, %v1451, %v1455
    %v1460 = vand.u32 2147483647, %v1450
    %vm1461 = vcmp.eq.f32.partialorder %v1460, 8.507059e+37
    %v1462 = vand.u32 %v1450, 2147483648
    %v1463 = vor.u32 1.1754944e-38, %v1462
    %v1464 = vsel %vm1461, %v1463, %v1459
    %v1465 = vmul.f32 1.0, %v1464
    %1467 = vrot.lane.b32.xlu0 %v1443, 64
    %v1468 = vpop.permute.xlu0 %1467
    %v1470 = vmul.f32 %v1465, %v1468
    %1472 = vrot.lane.b32.xlu0 %v1470, 64
    %v1473 = vpop.permute.xlu0 %1472
    %v1475 = vadd.f32 %v1432, %v1473
    %v1476 = vtanh.pop %v1475
    %v1477 = vsub.f32 1.0, %v1465
    %1479 = vrot.lane.b32.xlu0 %v1476, 96
    %v1480 = vpop.permute.xlu0 %1479
    %v1482 = vmul.f32 %v1477, %v1480
    %v1483 = vmul.f32 %v1465, %v1280
    %v1484 = vadd.f32 %v1482, %v1483
    %v1485 = vpack.c.bf16 %v1484, %v1484
    %1487 = vrot.lane.b32.xlu0 %v1485, 96
    %v1488 = vpop.permute.xlu0 %1487
    %v1490 = vsel %vm271, %v1488, 0
    %1492 = vmatpush.bf16.msra.mxu0 0
    %1493 = vmatpush.bf16.msra.mxu0 0
    %1494 = vmatpush.bf16.msra.mxu0 0
    %1495 = vmatpush.bf16.msra.mxu0 0
    %1496 = vmatpush.bf16.msra.mxu0 0
    %1497 = vmatpush.bf16.msra.mxu0 0
    %1498 = vmatpush.bf16.msra.mxu0 %v1077
    %1499 = vmatpush.bf16.msra.mxu0 %v1076
    %1500 = vmatmul.bf16.gmra.mxu0 %v1490
    %v1501 = vpop.f32.mrf.mxu0
    %v1502 = vadd.f32 %v849, %v1501
    %v1503 = vpop.f32.mrf.mxu0
    %1504 = vdwg.mxu0
    %v1505 = vsel %vm1096, %v1502, -inf
    %1506 = vmax.xlane.f32.xlu0 %v1505
    %v1507 = vpop.xlane.xlu0 %1506
    %v1508 = vsub.f32 %v1502, %v1507
    %v1509 = vmul.f32 %v1508, 1.442695
    %v1510 = vpow.pop %v1509
    %v1511 = vsel %vm1096, %v1510, 0.0
    %1512 = vadd.xlane.f32.xlu0 %v1511
    %v1513 = vpop.xlane.xlu0 %1512
    %v1514 = vlog2.pop %v1513
    %v1515 = vmul.f32 %v1514, 0.6931472
    %v1516 = vsub.f32 %v1508, %v1515
    %1517 = vst.msk [vmem:[#allocation22 + $0x2] sm:$0x1] %vm1096, %v1516
    %v1518 = vsel %vm1096, %v1516, -inf
    %1519 = vmax.xlane.f32.xlu0 %v1518
    %v1520 = vpop.xlane.xlu0 %1519
    %vm1521 = vcmp.eq.f32.partialorder %v1516, %v1520
    %v1522 = vsel %vm1521, %v851, 20
    %v1523 = vsel %vm1096, %v1522, 2147483647
    %v1524 = vand.u32 %v1523, 65535
    %v1525 = vshra.s32 %v1523, 16
    %v1526 = vcvt.s32.f32 %v1524
    %v1527 = vcvt.s32.f32 %v1525
    %1528 = vmin.xlane.f32.xlu0 %v1527
    %v1529 = vpop.xlane.xlu0 %1528
    %vm1530 = vcmp.eq.f32.partialorder %v1527, %v1529
    %v1531 = vsel %vm1530, %v1526, inf
    %1532 = vmin.xlane.f32.xlu0 %v1531
    %v1533 = vpop.xlane.xlu0 %1532
    %v1534 = vcvt.f32.s32 %v1533
    %v1535 = vcvt.f32.s32 %v1529
    %v1536 = vshll.u32 %v1535, 16
    %v1537 = vadd.s32 %v1536, %v1534
    %vm1538 = vcmp.eq.s32.totalorder %v851, %v1537
    %v1539 = vsel %vm1538, 1.0, 0.0
    %1540 = vmatpush.bf16.msra.mxu0 0
    %1541 = vmatpush.bf16.msra.mxu0 0
    %1542 = vmatpush.bf16.msra.mxu0 0
    %1543 = vmatpush.bf16.msra.mxu0 0
    %1544 = vmatpush.bf16.msra.mxu0 0
    %1545 = vmatpush.bf16.msra.mxu0 0
    %1546 = vmatpush.bf16.msra.mxu0 %v865
    %1547 = vmatpush.bf16.msra.mxu0 %v864
    %1548 = vmatmul.bf16.gmra.mxu0 %v1490
    %v1549 = vpop.f32.mrf.mxu0
    %v1550 = vadd.f32 %v830, %v1549
    %v1551 = vpop.f32.mrf.mxu0
    %1552 = vdwg.mxu0
    %v1553 = vperm.slane %v1550, 0
    %v1554 = vadd.f32 %v823, %v1553
    %v1555 = vtanh.pop %v1554
    %v1556 = vpack.c.bf16 %v1555, %v1555
    %v1558 = vsel %vm271, %v1556, 0
    %1560 = vmatpush.bf16.xpose.msra.mxu0 0
    %1561 = vmatpush.bf16.xpose.msra.mxu0 0
    %1562 = vmatpush.bf16.xpose.msra.mxu0 0
    %1563 = vmatpush.bf16.xpose.msra.mxu0 0
    %1564 = vmatpush.bf16.xpose.msra.mxu0 0
    %1565 = vmatpush.bf16.xpose.msra.mxu0 0
    %1566 = vmatpush.bf16.xpose.msra.mxu0 0
    %1567 = vmatpush.bf16.xpose.msra.mxu0 %v1558
    %1568 = vmatmul.bf16.gmra.mxu0 %v889
    %v1569 = vpop.f32.mrf.mxu0
    %v1570 = vadd.f32 0.0, %v1569
    %v1571 = vpop.f32.mrf.mxu0
    %1572 = vdwg.mxu0
    %v1573 = vsel %vm907, %v1570, -inf
    %1574 = vmax.xlane.f32.xlu0 %v1573
    %v1575 = vpop.xlane.xlu0 %1574
    %v1576 = vsub.f32 %v1570, %v1575
    %v1577 = vmul.f32 %v1576, 1.442695
    %v1578 = vpow.pop %v1577
    %v1579 = vsel %vm907, %v1578, 0.0
    %1580 = vadd.xlane.f32.xlu0 %v1579
    %v1581 = vpop.xlane.xlu0 %1580
    %v1582 = vrcp.pop %v1581
    %v1583 = vmul.f32 %v1578, %v1582
    %1584 = vst.msk [vmem:[#allocation23 + $0x3] sm:$0x1] %vm907, %v1583
    %v1585 = vpack.c.bf16 %v1583, %v1583
    %v1587 = vsel %vm921, %v1585, 0
    %1589 = vmatpush.bf16.msra.mxu0 0
    %1590 = vmatpush.bf16.msra.mxu0 0
    %1591 = vmatpush.bf16.msra.mxu0 0
    %1592 = vmatpush.bf16.msra.mxu0 0
    %1593 = vmatpush.bf16.msra.mxu0 0
    %1594 = vmatpush.bf16.msra.mxu0 0
    %1595 = vmatpush.bf16.msra.mxu0 0
    %1596 = vmatpush.bf16.msra.mxu0 %v926
    %1597 = vmatmul.bf16.gmra.mxu0 %v1587
    %v1598 = vpop.f32.mrf.mxu0
    %v1599 = vadd.f32 0.0, %v1598
    %v1600 = vpop.f32.mrf.mxu0
    %1601 = vdwg.mxu0
    %v1602 = vpack.c.bf16 %v1539, %v1539
    %v1603 = vpack.c.bf16 %v1599, %v1599
    %v1605 = vsel %vm271, %v1603, 0
    %1607 = vmatpush.bf16.msra.mxu0 0
    %1608 = vmatpush.bf16.msra.mxu0 0
    %1609 = vmatpush.bf16.msra.mxu0 0
    %1610 = vmatpush.bf16.msra.mxu0 0
    %1611 = vmatpush.bf16.msra.mxu0 0
    %1612 = vmatpush.bf16.msra.mxu0 0
    %1613 = vmatpush.bf16.msra.mxu0 %v951
    %1614 = vmatpush.bf16.msra.mxu0 %v950
    %1615 = vmatmul.bf16.gmra.mxu0 %v1605
    %v1616 = vpop.f32.mrf.mxu0
    %v1617 = vadd.f32 0.0, %v1616
    %v1618 = vpop.f32.mrf.mxu0
    %1619 = vdwg.mxu0
    %v1621 = vsel %vm979, %v1602, 0
    %1623 = vmatpush.bf16.msra.mxu0 0
    %1624 = vmatpush.bf16.msra.mxu0 0
    %1625 = vmatpush.bf16.msra.mxu0 0
    %1626 = vmatpush.bf16.msra.mxu0 0
    %1627 = vmatpush.bf16.msra.mxu0 0
    %1628 = vmatpush.bf16.msra.mxu0 0
    %1629 = vmatpush.bf16.msra.mxu0 %v984
    %1630 = vmatpush.bf16.msra.mxu0 %v976
    %1631 = vmatmul.bf16.gmra.mxu0 %v1621
    %v1632 = vpop.f32.mrf.mxu0
    %v1633 = vadd.f32 %v1617, %v1632
    %v1634 = vpop.f32.mrf.mxu0
    %1635 = vdwg.mxu0
    %v1636 = vadd.f32 %v1633, %v843
    %1637 = vmatpush.bf16.msra.mxu0 0
    %1638 = vmatpush.bf16.msra.mxu0 0
    %1639 = vmatpush.bf16.msra.mxu0 0
    %1640 = vmatpush.bf16.msra.mxu0 0
    %1641 = vmatpush.bf16.msra.mxu0 0
    %1642 = vmatpush.bf16.msra.mxu0 0
    %1643 = vmatpush.bf16.msra.mxu0 %v1009
    %1644 = vmatpush.bf16.msra.mxu0 %v1008
    %1645 = vmatmul.bf16.gmra.mxu0 %v1490
    %v1646 = vpop.f32.mrf.mxu0
    %v1647 = vadd.f32 %v844, %v1646
    %v1648 = vpop.f32.mrf.mxu0
    %1649 = vdwg.mxu0
    %v1650 = vadd.f32 %v1636, %v1647
    %v1651 = vxor.u32 %v1650, 2147483648
    %v1652 = vmul.f32 %v1651, 1.442695
    %v1653 = vpow.pop %v1652
    %v1654 = vadd.f32 %v1653, 1.0
    %v1655 = vrcp.pop %v1654
    %v1656 = vmul.f32 %v1654, %v1655
    %v1657 = vsub.f32 1.0, %v1656
    %v1658 = vmul.f32 %v1655, %v1657
    %v1659 = vadd.f32 %v1655, %v1658
    %vm1660 = vweird.f32 %v1654
    %vm1661 = vweird.f32 %v1655
    %vm1662 = vmor %vm1660, %vm1661
    %v1663 = vsel %vm1662, %v1655, %v1659
    %v1664 = vand.u32 2147483647, %v1654
    %vm1665 = vcmp.eq.f32.partialorder %v1664, 8.507059e+37
    %v1666 = vand.u32 %v1654, 2147483648
    %v1667 = vor.u32 1.1754944e-38, %v1666
    %v1668 = vsel %vm1665, %v1667, %v1663
    %v1669 = vmul.f32 1.0, %v1668
    %1671 = vrot.lane.b32.xlu0 %v1647, 64
    %v1672 = vpop.permute.xlu0 %1671
    %v1674 = vmul.f32 %v1669, %v1672
    %1676 = vrot.lane.b32.xlu0 %v1674, 64
    %v1677 = vpop.permute.xlu0 %1676
    %v1679 = vadd.f32 %v1636, %v1677
    %v1680 = vtanh.pop %v1679
    %v1681 = vsub.f32 1.0, %v1669
    %1683 = vrot.lane.b32.xlu0 %v1680, 96
    %v1684 = vpop.permute.xlu0 %1683
    %v1686 = vmul.f32 %v1681, %v1684
    %v1687 = vmul.f32 %v1669, %v1484
    %v1688 = vadd.f32 %v1686, %v1687
    %v1689 = vpack.c.bf16 %v1688, %v1688
    %1691 = vrot.lane.b32.xlu0 %v1689, 96
    %v1692 = vpop.permute.xlu0 %1691
    %v1694 = vsel %vm271, %v1692, 0
    %1696 = vmatpush.bf16.msra.mxu0 0
    %1697 = vmatpush.bf16.msra.mxu0 0
    %1698 = vmatpush.bf16.msra.mxu0 0
    %1699 = vmatpush.bf16.msra.mxu0 0
    %1700 = vmatpush.bf16.msra.mxu0 0
    %1701 = vmatpush.bf16.msra.mxu0 0
    %1702 = vmatpush.bf16.msra.mxu0 %v1077
    %1703 = vmatpush.bf16.msra.mxu0 %v1076
    %1704 = vmatmul.bf16.gmra.mxu0 %v1694
    %v1705 = vpop.f32.mrf.mxu0
    %v1706 = vadd.f32 %v849, %v1705
    %v1707 = vpop.f32.mrf.mxu0
    %1708 = vdwg.mxu0
    %v1709 = vsel %vm1096, %v1706, -inf
    %1710 = vmax.xlane.f32.xlu0 %v1709
    %v1711 = vpop.xlane.xlu0 %1710
    %v1712 = vsub.f32 %v1706, %v1711
    %v1713 = vmul.f32 %v1712, 1.442695
    %v1714 = vpow.pop %v1713
    %v1715 = vsel %vm1096, %v1714, 0.0
    %1716 = vadd.xlane.f32.xlu0 %v1715
    %v1717 = vpop.xlane.xlu0 %1716
    %v1718 = vlog2.pop %v1717
    %v1719 = vmul.f32 %v1718, 0.6931472
    %v1720 = vsub.f32 %v1712, %v1719
    %1721 = vst.msk [vmem:[#allocation22 + $0x3] sm:$0x1] %vm1096, %v1720
    %v1722 = vsel %vm1096, %v1720, -inf
    %1723 = vmax.xlane.f32.xlu0 %v1722
    %v1724 = vpop.xlane.xlu0 %1723
    %vm1725 = vcmp.eq.f32.partialorder %v1720, %v1724
    %v1726 = vsel %vm1725, %v851, 20
    %v1727 = vsel %vm1096, %v1726, 2147483647
    %v1728 = vand.u32 %v1727, 65535
    %v1729 = vshra.s32 %v1727, 16
    %v1730 = vcvt.s32.f32 %v1728
    %v1731 = vcvt.s32.f32 %v1729
    %1732 = vmin.xlane.f32.xlu0 %v1731
    %v1733 = vpop.xlane.xlu0 %1732
    %vm1734 = vcmp.eq.f32.partialorder %v1731, %v1733
    %v1735 = vsel %vm1734, %v1730, inf
    %1736 = vmin.xlane.f32.xlu0 %v1735
    %v1737 = vpop.xlane.xlu0 %1736
    %v1738 = vcvt.f32.s32 %v1737
    %v1739 = vcvt.f32.s32 %v1733
    %v1740 = vshll.u32 %v1739, 16
    %v1741 = vadd.s32 %v1740, %v1738
    %vm1742 = vcmp.eq.s32.totalorder %v851, %v1741
    %v1743 = vsel %vm1742, 1.0, 0.0
    %1744 = vmatpush.bf16.msra.mxu0 0
    %1745 = vmatpush.bf16.msra.mxu0 0
    %1746 = vmatpush.bf16.msra.mxu0 0
    %1747 = vmatpush.bf16.msra.mxu0 0
    %1748 = vmatpush.bf16.msra.mxu0 0
    %1749 = vmatpush.bf16.msra.mxu0 0
    %1750 = vmatpush.bf16.msra.mxu0 %v865
    %1751 = vmatpush.bf16.msra.mxu0 %v864
    %1752 = vmatmul.bf16.gmra.mxu0 %v1694
    %v1753 = vpop.f32.mrf.mxu0
    %v1754 = vadd.f32 %v830, %v1753
    %v1755 = vpop.f32.mrf.mxu0
    %1756 = vdwg.mxu0
    %v1757 = vperm.slane %v1754, 0
    %v1758 = vadd.f32 %v823, %v1757
    %v1759 = vtanh.pop %v1758
    %v1760 = vpack.c.bf16 %v1759, %v1759
    %v1762 = vsel %vm271, %v1760, 0
    %1764 = vmatpush.bf16.xpose.msra.mxu0 0
    %1765 = vmatpush.bf16.xpose.msra.mxu0 0
    %1766 = vmatpush.bf16.xpose.msra.mxu0 0
    %1767 = vmatpush.bf16.xpose.msra.mxu0 0
    %1768 = vmatpush.bf16.xpose.msra.mxu0 0
    %1769 = vmatpush.bf16.xpose.msra.mxu0 0
    %1770 = vmatpush.bf16.xpose.msra.mxu0 0
    %1771 = vmatpush.bf16.xpose.msra.mxu0 %v1762
    %1772 = vmatmul.bf16.gmra.mxu0 %v889
    %v1773 = vpop.f32.mrf.mxu0
    %v1774 = vadd.f32 0.0, %v1773
    %v1775 = vpop.f32.mrf.mxu0
    %1776 = vdwg.mxu0
    %v1777 = vsel %vm907, %v1774, -inf
    %1778 = vmax.xlane.f32.xlu0 %v1777
    %v1779 = vpop.xlane.xlu0 %1778
    %v1780 = vsub.f32 %v1774, %v1779
    %v1781 = vmul.f32 %v1780, 1.442695
    %v1782 = vpow.pop %v1781
    %v1783 = vsel %vm907, %v1782, 0.0
    %1784 = vadd.xlane.f32.xlu0 %v1783
    %v1785 = vpop.xlane.xlu0 %1784
    %v1786 = vrcp.pop %v1785
    %v1787 = vmul.f32 %v1782, %v1786
    %1788 = vst.msk [vmem:[#allocation23 + $0x4] sm:$0x1] %vm907, %v1787
    %v1789 = vpack.c.bf16 %v1787, %v1787
    %v1791 = vsel %vm921, %v1789, 0
    %1793 = vmatpush.bf16.msra.mxu0 0
    %1794 = vmatpush.bf16.msra.mxu0 0
    %1795 = vmatpush.bf16.msra.mxu0 0
    %1796 = vmatpush.bf16.msra.mxu0 0
    %1797 = vmatpush.bf16.msra.mxu0 0
    %1798 = vmatpush.bf16.msra.mxu0 0
    %1799 = vmatpush.bf16.msra.mxu0 0
    %1800 = vmatpush.bf16.msra.mxu0 %v926
    %1801 = vmatmul.bf16.gmra.mxu0 %v1791
    %v1802 = vpop.f32.mrf.mxu0
    %v1803 = vadd.f32 0.0, %v1802
    %v1804 = vpop.f32.mrf.mxu0
    %1805 = vdwg.mxu0
    %v1806 = vpack.c.bf16 %v1743, %v1743
    %v1807 = vpack.c.bf16 %v1803, %v1803
    %v1809 = vsel %vm271, %v1807, 0
    %1811 = vmatpush.bf16.msra.mxu0 0
    %1812 = vmatpush.bf16.msra.mxu0 0
    %1813 = vmatpush.bf16.msra.mxu0 0
    %1814 = vmatpush.bf16.msra.mxu0 0
    %1815 = vmatpush.bf16.msra.mxu0 0
    %1816 = vmatpush.bf16.msra.mxu0 0
    %1817 = vmatpush.bf16.msra.mxu0 %v951
    %1818 = vmatpush.bf16.msra.mxu0 %v950
    %1819 = vmatmul.bf16.gmra.mxu0 %v1809
    %v1820 = vpop.f32.mrf.mxu0
    %v1821 = vadd.f32 0.0, %v1820
    %v1822 = vpop.f32.mrf.mxu0
    %1823 = vdwg.mxu0
    %v1825 = vsel %vm979, %v1806, 0
    %1827 = vmatpush.bf16.msra.mxu0 0
    %1828 = vmatpush.bf16.msra.mxu0 0
    %1829 = vmatpush.bf16.msra.mxu0 0
    %1830 = vmatpush.bf16.msra.mxu0 0
    %1831 = vmatpush.bf16.msra.mxu0 0
    %1832 = vmatpush.bf16.msra.mxu0 0
    %1833 = vmatpush.bf16.msra.mxu0 %v984
    %1834 = vmatpush.bf16.msra.mxu0 %v976
    %1835 = vmatmul.bf16.gmra.mxu0 %v1825
    %v1836 = vpop.f32.mrf.mxu0
    %v1837 = vadd.f32 %v1821, %v1836
    %v1838 = vpop.f32.mrf.mxu0
    %1839 = vdwg.mxu0
    %v1840 = vadd.f32 %v1837, %v843
    %1841 = vmatpush.bf16.msra.mxu0 0
    %1842 = vmatpush.bf16.msra.mxu0 0
    %1843 = vmatpush.bf16.msra.mxu0 0
    %1844 = vmatpush.bf16.msra.mxu0 0
    %1845 = vmatpush.bf16.msra.mxu0 0
    %1846 = vmatpush.bf16.msra.mxu0 0
    %1847 = vmatpush.bf16.msra.mxu0 %v1009
    %1848 = vmatpush.bf16.msra.mxu0 %v1008
    %1849 = vmatmul.bf16.gmra.mxu0 %v1694
    %v1850 = vpop.f32.mrf.mxu0
    %v1851 = vadd.f32 %v844, %v1850
    %v1852 = vpop.f32.mrf.mxu0
    %1853 = vdwg.mxu0
    %v1854 = vadd.f32 %v1840, %v1851
    %v1855 = vxor.u32 %v1854, 2147483648
    %v1856 = vmul.f32 %v1855, 1.442695
    %v1857 = vpow.pop %v1856
    %v1858 = vadd.f32 %v1857, 1.0
    %v1859 = vrcp.pop %v1858
    %v1860 = vmul.f32 %v1858, %v1859
    %v1861 = vsub.f32 1.0, %v1860
    %v1862 = vmul.f32 %v1859, %v1861
    %v1863 = vadd.f32 %v1859, %v1862
    %vm1864 = vweird.f32 %v1858
    %vm1865 = vweird.f32 %v1859
    %vm1866 = vmor %vm1864, %vm1865
    %v1867 = vsel %vm1866, %v1859, %v1863
    %v1868 = vand.u32 2147483647, %v1858
    %vm1869 = vcmp.eq.f32.partialorder %v1868, 8.507059e+37
    %v1870 = vand.u32 %v1858, 2147483648
    %v1871 = vor.u32 1.1754944e-38, %v1870
    %v1872 = vsel %vm1869, %v1871, %v1867
    %v1873 = vmul.f32 1.0, %v1872
    %1875 = vrot.lane.b32.xlu0 %v1851, 64
    %v1876 = vpop.permute.xlu0 %1875
    %v1878 = vmul.f32 %v1873, %v1876
    %1880 = vrot.lane.b32.xlu0 %v1878, 64
    %v1881 = vpop.permute.xlu0 %1880
    %v1883 = vadd.f32 %v1840, %v1881
    %v1884 = vtanh.pop %v1883
    %v1885 = vsub.f32 1.0, %v1873
    %1887 = vrot.lane.b32.xlu0 %v1884, 96
    %v1888 = vpop.permute.xlu0 %1887
    %v1890 = vmul.f32 %v1885, %v1888
    %v1891 = vmul.f32 %v1873, %v1688
    %v1892 = vadd.f32 %v1890, %v1891
    %v1893 = vpack.c.bf16 %v1892, %v1892
    %1895 = vrot.lane.b32.xlu0 %v1893, 96
    %v1896 = vpop.permute.xlu0 %1895
    %v1898 = vsel %vm271, %v1896, 0
    %1900 = vmatpush.bf16.msra.mxu0 0
    %1901 = vmatpush.bf16.msra.mxu0 0
    %1902 = vmatpush.bf16.msra.mxu0 0
    %1903 = vmatpush.bf16.msra.mxu0 0
    %1904 = vmatpush.bf16.msra.mxu0 0
    %1905 = vmatpush.bf16.msra.mxu0 0
    %1906 = vmatpush.bf16.msra.mxu0 %v1077
    %1907 = vmatpush.bf16.msra.mxu0 %v1076
    %1908 = vmatmul.bf16.gmra.mxu0 %v1898
    %v1909 = vpop.f32.mrf.mxu0
    %v1910 = vadd.f32 %v849, %v1909
    %v1911 = vpop.f32.mrf.mxu0
    %1912 = vdwg.mxu0
    %v1913 = vsel %vm1096, %v1910, -inf
    %1914 = vmax.xlane.f32.xlu0 %v1913
    %v1915 = vpop.xlane.xlu0 %1914
    %v1916 = vsub.f32 %v1910, %v1915
    %v1917 = vmul.f32 %v1916, 1.442695
    %v1918 = vpow.pop %v1917
    %v1919 = vsel %vm1096, %v1918, 0.0
    %1920 = vadd.xlane.f32.xlu0 %v1919
    %v1921 = vpop.xlane.xlu0 %1920
    %v1922 = vlog2.pop %v1921
    %v1923 = vmul.f32 %v1922, 0.6931472
    %v1924 = vsub.f32 %v1916, %v1923
    %1925 = vst.msk [vmem:[#allocation22 + $0x4] sm:$0x1] %vm1096, %v1924
    %v1926 = vsel %vm1096, %v1924, -inf
    %1927 = vmax.xlane.f32.xlu0 %v1926
    %v1928 = vpop.xlane.xlu0 %1927
    %vm1929 = vcmp.eq.f32.partialorder %v1924, %v1928
    %v1930 = vsel %vm1929, %v851, 20
    %v1931 = vsel %vm1096, %v1930, 2147483647
    %v1932 = vand.u32 %v1931, 65535
    %v1933 = vshra.s32 %v1931, 16
    %v1934 = vcvt.s32.f32 %v1932
    %v1935 = vcvt.s32.f32 %v1933
    %1936 = vmin.xlane.f32.xlu0 %v1935
    %v1937 = vpop.xlane.xlu0 %1936
    %vm1938 = vcmp.eq.f32.partialorder %v1935, %v1937
    %v1939 = vsel %vm1938, %v1934, inf
    %1940 = vmin.xlane.f32.xlu0 %v1939
    %v1941 = vpop.xlane.xlu0 %1940
    %v1942 = vcvt.f32.s32 %v1941
    %v1943 = vcvt.f32.s32 %v1937
    %v1944 = vshll.u32 %v1943, 16
    %v1945 = vadd.s32 %v1944, %v1942
    %vm1946 = vcmp.eq.s32.totalorder %v851, %v1945
    %v1947 = vsel %vm1946, 1.0, 0.0
    %1948 = vmatpush.bf16.msra.mxu0 0
    %1949 = vmatpush.bf16.msra.mxu0 0
    %1950 = vmatpush.bf16.msra.mxu0 0
    %1951 = vmatpush.bf16.msra.mxu0 0
    %1952 = vmatpush.bf16.msra.mxu0 0
    %1953 = vmatpush.bf16.msra.mxu0 0
    %1954 = vmatpush.bf16.msra.mxu0 %v865
    %1955 = vmatpush.bf16.msra.mxu0 %v864
    %1956 = vmatmul.bf16.gmra.mxu0 %v1898
    %v1957 = vpop.f32.mrf.mxu0
    %v1958 = vadd.f32 %v830, %v1957
    %v1959 = vpop.f32.mrf.mxu0
    %1960 = vdwg.mxu0
    %v1961 = vperm.slane %v1958, 0
    %v1962 = vadd.f32 %v823, %v1961
    %v1963 = vtanh.pop %v1962
    %v1964 = vpack.c.bf16 %v1963, %v1963
    %v1966 = vsel %vm271, %v1964, 0
    %1968 = vmatpush.bf16.xpose.msra.mxu0 0
    %1969 = vmatpush.bf16.xpose.msra.mxu0 0
    %1970 = vmatpush.bf16.xpose.msra.mxu0 0
    %1971 = vmatpush.bf16.xpose.msra.mxu0 0
    %1972 = vmatpush.bf16.xpose.msra.mxu0 0
    %1973 = vmatpush.bf16.xpose.msra.mxu0 0
    %1974 = vmatpush.bf16.xpose.msra.mxu0 0
    %1975 = vmatpush.bf16.xpose.msra.mxu0 %v1966
    %1976 = vmatmul.bf16.gmra.mxu0 %v889
    %v1977 = vpop.f32.mrf.mxu0
    %v1978 = vadd.f32 0.0, %v1977
    %v1979 = vpop.f32.mrf.mxu0
    %1980 = vdwg.mxu0
    %v1981 = vsel %vm907, %v1978, -inf
    %1982 = vmax.xlane.f32.xlu0 %v1981
    %v1983 = vpop.xlane.xlu0 %1982
    %v1984 = vsub.f32 %v1978, %v1983
    %v1985 = vmul.f32 %v1984, 1.442695
    %v1986 = vpow.pop %v1985
    %v1987 = vsel %vm907, %v1986, 0.0
    %1988 = vadd.xlane.f32.xlu0 %v1987
    %v1989 = vpop.xlane.xlu0 %1988
    %v1990 = vrcp.pop %v1989
    %v1991 = vmul.f32 %v1986, %v1990
    %1992 = vst.msk [vmem:[#allocation23 + $0x5] sm:$0x1] %vm907, %v1991
    %v1993 = vpack.c.bf16 %v1991, %v1991
    %v1995 = vsel %vm921, %v1993, 0
    %1997 = vmatpush.bf16.msra.mxu0 0
    %1998 = vmatpush.bf16.msra.mxu0 0
    %1999 = vmatpush.bf16.msra.mxu0 0
    %2000 = vmatpush.bf16.msra.mxu0 0
    %2001 = vmatpush.bf16.msra.mxu0 0
    %2002 = vmatpush.bf16.msra.mxu0 0
    %2003 = vmatpush.bf16.msra.mxu0 0
    %2004 = vmatpush.bf16.msra.mxu0 %v926
    %2005 = vmatmul.bf16.gmra.mxu0 %v1995
    %v2006 = vpop.f32.mrf.mxu0
    %v2007 = vadd.f32 0.0, %v2006
    %v2008 = vpop.f32.mrf.mxu0
    %2009 = vdwg.mxu0
    %v2010 = vpack.c.bf16 %v1947, %v1947
    %v2011 = vpack.c.bf16 %v2007, %v2007
    %v2013 = vsel %vm271, %v2011, 0
    %2015 = vmatpush.bf16.msra.mxu0 0
    %2016 = vmatpush.bf16.msra.mxu0 0
    %2017 = vmatpush.bf16.msra.mxu0 0
    %2018 = vmatpush.bf16.msra.mxu0 0
    %2019 = vmatpush.bf16.msra.mxu0 0
    %2020 = vmatpush.bf16.msra.mxu0 0
    %2021 = vmatpush.bf16.msra.mxu0 %v951
    %2022 = vmatpush.bf16.msra.mxu0 %v950
    %2023 = vmatmul.bf16.gmra.mxu0 %v2013
    %v2024 = vpop.f32.mrf.mxu0
    %v2025 = vadd.f32 0.0, %v2024
    %v2026 = vpop.f32.mrf.mxu0
    %2027 = vdwg.mxu0
    %v2029 = vsel %vm979, %v2010, 0
    %2031 = vmatpush.bf16.msra.mxu0 0
    %2032 = vmatpush.bf16.msra.mxu0 0
    %2033 = vmatpush.bf16.msra.mxu0 0
    %2034 = vmatpush.bf16.msra.mxu0 0
    %2035 = vmatpush.bf16.msra.mxu0 0
    %2036 = vmatpush.bf16.msra.mxu0 0
    %2037 = vmatpush.bf16.msra.mxu0 %v984
    %2038 = vmatpush.bf16.msra.mxu0 %v976
    %2039 = vmatmul.bf16.gmra.mxu0 %v2029
    %v2040 = vpop.f32.mrf.mxu0
    %v2041 = vadd.f32 %v2025, %v2040
    %v2042 = vpop.f32.mrf.mxu0
    %2043 = vdwg.mxu0
    %v2044 = vadd.f32 %v2041, %v843
    %2045 = vmatpush.bf16.msra.mxu0 0
    %2046 = vmatpush.bf16.msra.mxu0 0
    %2047 = vmatpush.bf16.msra.mxu0 0
    %2048 = vmatpush.bf16.msra.mxu0 0
    %2049 = vmatpush.bf16.msra.mxu0 0
    %2050 = vmatpush.bf16.msra.mxu0 0
    %2051 = vmatpush.bf16.msra.mxu0 %v1009
    %2052 = vmatpush.bf16.msra.mxu0 %v1008
    %2053 = vmatmul.bf16.gmra.mxu0 %v1898
    %v2054 = vpop.f32.mrf.mxu0
    %v2055 = vadd.f32 %v844, %v2054
    %v2056 = vpop.f32.mrf.mxu0
    %2057 = vdwg.mxu0
    %v2058 = vadd.f32 %v2044, %v2055
    %v2059 = vxor.u32 %v2058, 2147483648
    %v2060 = vmul.f32 %v2059, 1.442695
    %v2061 = vpow.pop %v2060
    %v2062 = vadd.f32 %v2061, 1.0
    %v2063 = vrcp.pop %v2062
    %v2064 = vmul.f32 %v2062, %v2063
    %v2065 = vsub.f32 1.0, %v2064
    %v2066 = vmul.f32 %v2063, %v2065
    %v2067 = vadd.f32 %v2063, %v2066
    %vm2068 = vweird.f32 %v2062
    %vm2069 = vweird.f32 %v2063
    %vm2070 = vmor %vm2068, %vm2069
    %v2071 = vsel %vm2070, %v2063, %v2067
    %v2072 = vand.u32 2147483647, %v2062
    %vm2073 = vcmp.eq.f32.partialorder %v2072, 8.507059e+37
    %v2074 = vand.u32 %v2062, 2147483648
    %v2075 = vor.u32 1.1754944e-38, %v2074
    %v2076 = vsel %vm2073, %v2075, %v2071
    %v2077 = vmul.f32 1.0, %v2076
    %2079 = vrot.lane.b32.xlu0 %v2055, 64
    %v2080 = vpop.permute.xlu0 %2079
    %v2082 = vmul.f32 %v2077, %v2080
    %2084 = vrot.lane.b32.xlu0 %v2082, 64
    %v2085 = vpop.permute.xlu0 %2084
    %v2087 = vadd.f32 %v2044, %v2085
    %v2088 = vtanh.pop %v2087
    %v2089 = vsub.f32 1.0, %v2077
    %2091 = vrot.lane.b32.xlu0 %v2088, 96
    %v2092 = vpop.permute.xlu0 %2091
    %v2094 = vmul.f32 %v2089, %v2092
    %v2095 = vmul.f32 %v2077, %v1892
    %v2096 = vadd.f32 %v2094, %v2095
    %v2097 = vpack.c.bf16 %v2096, %v2096
    %2099 = vrot.lane.b32.xlu0 %v2097, 96
    %v2100 = vpop.permute.xlu0 %2099
    %v2102 = vsel %vm271, %v2100, 0
    %2104 = vmatpush.bf16.msra.mxu0 0
    %2105 = vmatpush.bf16.msra.mxu0 0
    %2106 = vmatpush.bf16.msra.mxu0 0
    %2107 = vmatpush.bf16.msra.mxu0 0
    %2108 = vmatpush.bf16.msra.mxu0 0
    %2109 = vmatpush.bf16.msra.mxu0 0
    %2110 = vmatpush.bf16.msra.mxu0 %v1077
    %2111 = vmatpush.bf16.msra.mxu0 %v1076
    %2112 = vmatmul.bf16.gmra.mxu0 %v2102
    %v2113 = vpop.f32.mrf.mxu0
    %v2114 = vadd.f32 %v849, %v2113
    %v2115 = vpop.f32.mrf.mxu0
    %2116 = vdwg.mxu0
    %v2117 = vsel %vm1096, %v2114, -inf
    %2118 = vmax.xlane.f32.xlu0 %v2117
    %v2119 = vpop.xlane.xlu0 %2118
    %v2120 = vsub.f32 %v2114, %v2119
    %v2121 = vmul.f32 %v2120, 1.442695
    %v2122 = vpow.pop %v2121
    %v2123 = vsel %vm1096, %v2122, 0.0
    %2124 = vadd.xlane.f32.xlu0 %v2123
    %v2125 = vpop.xlane.xlu0 %2124
    %v2126 = vlog2.pop %v2125
    %v2127 = vmul.f32 %v2126, 0.6931472
    %v2128 = vsub.f32 %v2120, %v2127
    %2129 = vst.msk [vmem:[#allocation22 + $0x5] sm:$0x1] %vm1096, %v2128
    // Predicated region
    $region114: #{tpu_custom_call.1} parent=1 // pred_check
      _
    $region115: #{tpu_custom_call.1} parent=1 // pred_check_branch
      %2131 = sbr.rel (0) target = $region117
    $region116: #{tpu_custom_call.1} parent=1 // pred_region
      %2133 = vsyncadd [#allocation6], 0
      %s2135 = sshll.u32 [#allocation22], 4
      %s2136 = int_to_ptr.vmem [resolvable:$true] %s2135
      %s2137 = sshll.u32 %s17, 4
      %s2138 = int_to_ptr.hbm [resolvable:$true] %s2137
      %2140 = dma.vmem_to_hbm [thread:$0]  %s2136, 128, %s2138, [#allocation6]
    $region117: #{tpu_custom_call.1} parent=1 // pred_fallthru
      _
    // Predicated region
    $region118: #{tpu_custom_call.1} parent=1 // pred_check
      _
    $region119: #{tpu_custom_call.1} parent=1 // pred_check_branch
      %2142 = sbr.rel (0) target = $region121
    $region120: #{tpu_custom_call.1} parent=1 // pred_region
      %2144 = vsyncadd [#allocation24], 0
      %s2146 = sshll.u32 [#allocation23], 4
      %s2147 = int_to_ptr.vmem [resolvable:$true] %s2146
      %s2148 = sshll.u32 %s18, 4
      %s2149 = int_to_ptr.hbm [resolvable:$true] %s2148
      %2151 = dma.vmem_to_hbm [thread:$0]  %s2147, 128, %s2149, [#allocation24]
    $region121: #{tpu_custom_call.1} parent=1 // pred_fallthru
      _
    // Predicated region
    $region122: #{tpu_custom_call.1} parent=1 // pred_check
      _
    $region123: #{tpu_custom_call.1} parent=1 // pred_check_branch
      %2153 = sbr.rel (0) target = $region125
    $region124: #{tpu_custom_call.1} parent=1 // pred_region
      %2155 = dma.done [#allocation6], 128
    $region125: #{tpu_custom_call.1} parent=1 // pred_fallthru
      _
    // Predicated region
    $region126: #{tpu_custom_call.1} parent=1 // pred_check
      _
    $region127: #{tpu_custom_call.1} parent=1 // pred_check_branch
      %2157 = sbr.rel (0) target = $region129
    $region128: #{tpu_custom_call.1} parent=1 // pred_region
      %2159 = dma.done [#allocation24], 128
    $region129: #{tpu_custom_call.1} parent=1 // pred_fallthru
      _
    %2160 = vsyncpa [#allocation5], 1
    %2161 = vsyncpa [#allocation8], 1
    %2162 = vsyncpa [#allocation11], 1
    %2163 = vsyncpa [#allocation14], 1
    %2164 = vsyncpa [#allocation17], 1
    %2165 = vsyncpa [#allocation20], 1
    %2166 = vsyncpa [#allocation6], 1
    %2167 = vsyncpa [#allocation24], 1

</llo_original>
